<compile_context>
chip_gen: v5e
topology: v5e:2x2
jax: 0.10.0
libtpu: 0.0.40
codegen_flags: <defaults>
</compile_context>

<pallas_src>
import functools

import jax
import jax.numpy as jnp
from jax import lax
from jax.experimental import pallas as pl
from jax.experimental.pallas import tpu as pltpu


# ----------------------------- Pallas kernels -----------------------------

def _l2norm_kernel(x_ref, o_ref):
    x = x_ref[...]
    nrm = jnp.sqrt(jnp.sum(x * x, axis=1, keepdims=True))
    o_ref[...] = x / jnp.maximum(nrm, 1e-12)


def l2_normalize(x2d):
    # x2d: (B*N, H*W) -- one row per frame, normalized by its L2 norm.
    return pl.pallas_call(
        _l2norm_kernel,
        out_shape=jax.ShapeDtypeStruct(x2d.shape, x2d.dtype),
    )(x2d)


def _conv_kernel(p_ref, w_ref, s_ref, o_ref):
    acc = jnp.dot(p_ref[...], w_ref[...], preferred_element_type=jnp.float32)
    o_ref[...] = jnp.maximum(acc + s_ref[...], 0.0)   # folded bias+BN, ReLU


def conv_bn_relu(x_nhwc, weight, bias, bn_scale, bn_shift, stride, padding):
    """Conv2d (PyTorch semantics, NHWC activations) + folded BatchNorm(eval)
    + ReLU.  im2col is plain-JAX glue; the matmul + epilogue runs in Pallas.

    # TODO(synk): conv2-conv4 could be fused into a single VMEM-resident
    # Pallas kernel (in-kernel strided patch reads); kept as separate calls
    # here for lowering robustness at these tiny sizes.
    """
    N, H, W, C = x_nhwc.shape
    OC, _, kh, kw = weight.shape
    sh, sw = stride
    ph, pw = padding
    OH = (H + 2 * ph - kh) // sh + 1
    OW = (W + 2 * pw - kw) // sw + 1

    xp = jnp.pad(x_nhwc, ((0, 0), (ph, ph), (pw, pw), (0, 0)))
    patches = []
    for i in range(kh):
        for j in range(kw):
            patches.append(xp[:, i:i + sh * OH:sh, j:j + sw * OW:sw, :])
    # (N, OH, OW, C, kh*kw) -> (M, K); K ordered (C, kh, kw) to match the
    # PyTorch weight.reshape(OC, C*kh*kw).  No transposes needed.
    cols = jnp.stack(patches, axis=-1).reshape(N * OH * OW, C * kh * kw)
    cols = cols.astype(jnp.bfloat16)                        # bf16 MXU operand

    # Fold conv bias + eval-mode BN into weight / shift.
    w_mat = (weight.reshape(OC, C * kh * kw)
             * bn_scale[:, None]).T.astype(jnp.bfloat16)    # (K, OC)
    shift = (bias * bn_scale + bn_shift).reshape(1, OC).astype(jnp.float32)

    M, K = cols.shape
    out_shape = jax.ShapeDtypeStruct((M, OC), jnp.float32)

    # Split M into 2 parallel blocks when large enough: lets v7x's two
    # TensorCores share the work; negligible overhead on 1-TC chips.
    tm = M // 2 if (M >= 512 and M % 2 == 0 and (M // 2) % 16 == 0) else None
    if tm is not None:
        out = pl.pallas_call(
            _conv_kernel,
            out_shape=out_shape,
            grid=(M // tm,),
            in_specs=[pl.BlockSpec((tm, K), lambda i: (i, 0)),
                      pl.BlockSpec((K, OC), lambda i: (0, 0)),
                      pl.BlockSpec((1, OC), lambda i: (0, 0))],
            out_specs=pl.BlockSpec((tm, OC), lambda i: (i, 0)),
            compiler_params=pltpu.CompilerParams(
                dimension_semantics=("parallel",)),
        )(cols, w_mat, shift)
    else:
        out = pl.pallas_call(_conv_kernel, out_shape=out_shape)(
            cols, w_mat, shift)
    return out.reshape(N, OH, OW, OC)                       # stays NHWC


def _lstm_fc_kernel(x_ref, m_ref, wih_ref, whh_ref, b_ref,
                    w1_ref, b1_ref, w2_ref, b2_ref,
                    o_ref, gx_scr, y_scr):
    T, BP, D = x_ref.shape
    H = whh_ref.shape[0]

    # Hoisted input projection: one (T*BP, D) @ (D, 4H) matmul, off the
    # serial recurrent path.  BP is a multiple of 8 -> reshapes are
    # layout-trivial.
    x2d = x_ref[...].reshape(T * BP, D).astype(wih_ref.dtype)
    gx = jnp.dot(x2d, wih_ref[...], preferred_element_type=jnp.float32)
    gx_scr[...] = (gx + b_ref[...]).reshape(T, BP, 4 * H)

    def step(t, carry):
        h, c = carry
        gates = gx_scr[t] + jnp.dot(h.astype(whh_ref.dtype), whh_ref[...],
                                    preferred_element_type=jnp.float32)
        s = jax.nn.sigmoid(gates)          # full-width EUP activations
        g = jnp.tanh(gates)
        i_g = s[:, 0 * H:1 * H]
        f_g = s[:, 1 * H:2 * H]
        g_g = g[:, 2 * H:3 * H]
        o_g = s[:, 3 * H:4 * H]
        c_new = f_g * c + i_g * g_g
        h_new = o_g * jnp.tanh(c_new)
        # Mask padded timesteps to zero (pad_packed_sequence semantics).
        y_scr[t] = h_new * m_ref[t]
        return h_new, c_new

    h0 = jnp.zeros((BP, H), jnp.float32)
    c0 = jnp.zeros((BP, H), jnp.float32)
    lax.fori_loop(0, T, step, (h0, c0), unroll=True)

    # Fused FC head on the VMEM-resident (T*BP, H) LSTM outputs.
    y2d = y_scr[...].reshape(T * BP, H).astype(w1_ref.dtype)
    hid = jnp.maximum(
        jnp.dot(y2d, w1_ref[...], preferred_element_type=jnp.float32)
        + b1_ref[...], 0.0)
    o_ref[...] = (jnp.dot(hid.astype(w2_ref.dtype), w2_ref[...],
                          preferred_element_type=jnp.float32) + b2_ref[...])


def lstm_fc_forward(x_btd, mask_bt, w_ih, w_hh, b_ih, b_hh,
                    fc1_w, fc1_b, fc2_w, fc2_b):
    """PyTorch-gate-order (i,f,g,o) LSTM (zero initial state) fused with the
    fc2(relu(fc1(.))) head in a single grid-less Pallas kernel."""
    B, T, D = x_btd.shape
    H = w_hh.shape[1]
    BP = ((B + 7) // 8) * 8            # pad batch to a full sublane tile

    x_tbd = jnp.transpose(x_btd, (1, 0, 2))                        # (T, B, D)
    x_tbd = jnp.pad(x_tbd, ((0, 0), (0, BP - B), (0, 0)))
    m_tb1 = jnp.transpose(mask_bt, (1, 0))[:, :, None].astype(jnp.float32)
    m_tb1 = jnp.pad(m_tb1, ((0, 0), (0, BP - B), (0, 0)))

    wih = w_ih.T.astype(jnp.bfloat16)                              # (D, 4H)
    whh = w_hh.T.astype(jnp.bfloat16)                              # (H, 4H)
    bias = (b_ih + b_hh).reshape(1, 4 * H).astype(jnp.float32)
    w1 = fc1_w.T.astype(jnp.bfloat16)                              # (H, 128)
    b1 = fc1_b.reshape(1, -1).astype(jnp.float32)
    w2 = fc2_w.T.astype(jnp.bfloat16)                              # (128, 1)
    b2 = fc2_b.reshape(1, 1).astype(jnp.float32)

    out = pl.pallas_call(
        _lstm_fc_kernel,
        out_shape=jax.ShapeDtypeStruct((T * BP, 1), jnp.float32),
        scratch_shapes=[pltpu.VMEM((T, BP, 4 * H), jnp.float32),
                        pltpu.VMEM((T, BP, H), jnp.float32)],
    )(x_tbd, m_tb1, wih, whh, bias, w1, b1, w2, b2)
    # Rows are time-major (t*BP + b): (T*BP, 1) -> (T, BP) -> (B, T).
    return out.reshape(T, BP)[:, :B].T


# ----------------------------- model forward ------------------------------

def f0spec_forward(params, inputs, input_lengths):
    """inputs: (b, n, h, w) float32; input_lengths: (b,) int32.
    In this setup max(input_lengths) == n, so logits have shape (b, n)."""
    b, n, h, w = inputs.shape

    # L2Norm + Normalize (per-frame L2 normalization).
    # TODO(synk): L2Norm/Normalize class definitions are not in the reference
    # snippet; per-frame L2 normalization is assumed.
    x = l2_normalize(inputs.reshape(b * n, h * w)).reshape(b * n, h, w, 1)

    x = conv_bn_relu(x, params['c1_w'], params['c1_b'],
                     params['bn1_scale'], params['bn1_shift'], (2, 2), (2, 2))
    x = conv_bn_relu(x, params['c2_w'], params['c2_b'],
                     params['bn2_scale'], params['bn2_shift'], (3, 2), (3, 2))
    x = conv_bn_relu(x, params['c3_w'], params['c3_b'],
                     params['bn3_scale'], params['bn3_shift'], (3, 2), (3, 2))
    x = conv_bn_relu(x, params['c4_w'], params['c4_b'],
                     params['bn4_scale'], params['bn4_shift'], (3, 2), (3, 2))

    # Final spatial extent is (1, 1), so NHWC flatten == PyTorch's NCHW
    # reshape(b, n, -1).
    x = x.reshape(b, n, -1)                                  # (b, n, input_dim)

    steps = jnp.arange(n, dtype=jnp.int32)[None, :]
    mask = (steps < input_lengths[:, None]).astype(jnp.float32)   # (b, n)

    return lstm_fc_forward(x, mask,
                           params['lstm_w_ih'], params['lstm_w_hh'],
                           params['lstm_b_ih'], params['lstm_b_hh'],
                           params['fc1_w'], params['fc1_b'],
                           params['fc2_w'], params['fc2_b'])      # (b, n)


# ----------------------------- parameter init ------------------------------

def init_params(key, input_dim=32, hidden_dim=32):
    ks = jax.random.split(key, 16)

    def rnd(k, shape, scale=0.1):
        return jax.random.normal(k, shape, dtype=jnp.float32) * scale

    eps = 1e-5
    params = {}
    conv_shapes = [(32, 1, 5, 5), (32, 32, 7, 5), (32, 32, 7, 5), (32, 32, 7, 5)]
    idx = 0
    for li, cs in enumerate(conv_shapes, start=1):
        params[f'c{li}_w'] = rnd(ks[idx], cs); idx += 1
        params[f'c{li}_b'] = rnd(ks[idx], (cs[0],)); idx += 1
        gamma = 1.0 + 0.01 * jnp.arange(cs[0], dtype=jnp.float32)
        beta = 0.01 * jnp.arange(cs[0], dtype=jnp.float32)
        rmean = jnp.zeros((cs[0],), jnp.float32)
        rvar = jnp.ones((cs[0],), jnp.float32)
        scale = gamma / jnp.sqrt(rvar + eps)
        params[f'bn{li}_scale'] = scale
        params[f'bn{li}_shift'] = beta - rmean * scale

    H, D = hidden_dim, input_dim
    params['lstm_w_ih'] = rnd(ks[idx], (4 * H, D)); idx += 1     # PyTorch layout
    params['lstm_w_hh'] = rnd(ks[idx], (4 * H, H)); idx += 1
    params['lstm_b_ih'] = rnd(ks[idx], (4 * H,)); idx += 1
    params['lstm_b_hh'] = rnd(ks[idx], (4 * H,)); idx += 1
    params['fc1_w'] = rnd(ks[idx], (128, H)); idx += 1           # (out, in)
    params['fc1_b'] = rnd(ks[idx], (128,)); idx += 1
    params['fc2_w'] = rnd(ks[idx], (1, 128)); idx += 1
    params['fc2_b'] = rnd(ks[idx], (1,)); idx += 1
    return params


# --------------------------------- main ------------------------------------

if __name__ == "__main__":
    # Shapes: (b, n, h, w) = (2, 8, 18, 16). The conv stack maps each
    # (18, 16) frame to a 32-dim feature -> input_dim = 32, hidden_dim = 32.
    b, n, h, w = 2, 8, 18, 16
    input_dim, hidden_dim = 32, 32

    key = jax.random.PRNGKey(0)
    k_in, k_par = jax.random.split(key)
    inputs = jax.random.normal(k_in, (b, n, h, w), dtype=jnp.float32)
    input_lengths = jnp.array([8, 5], dtype=jnp.int32)   # max == n

    params = init_params(k_par, input_dim=input_dim, hidden_dim=hidden_dim)

    fwd = jax.jit(functools.partial(f0spec_forward, params))
    logits = fwd(inputs, input_lengths)
    logits = jax.block_until_ready(logits)

    assert logits.shape == (b, n), logits.shape
    assert bool(jnp.all(jnp.isfinite(logits)))
    print("KERNEL_OK")
</pallas_src>

<mosaic_0001>
module attributes {stable_mosaic.version = 11 : i64} {
  func.func @_l2norm_kernel(%arg0: memref<16x288xf32, #tpu.memory_space<vmem>>, %arg1: memref<16x288xf32, #tpu.memory_space<vmem>>) attributes {dimension_semantics = [], scalar_prefetch = 0 : i64, scratch_operands = 0 : i64, tpu.core_type = #tpu.core_type<tc>} {
    %c0 = arith.constant 0 : index
    %c0_0 = arith.constant 0 : index
    %0 = vector.load %arg0[%c0, %c0_0] : memref<16x288xf32, #tpu.memory_space<vmem>>, vector<16x288xf32>
    %1 = arith.mulf %0, %0 : vector<16x288xf32>
    %cst = arith.constant dense<0.000000e+00> : vector<16xf32>
    %2 = vector.multi_reduction <add>, %1, %cst [1] : vector<16x288xf32> to vector<16xf32>
    %3 = vector.shape_cast %2 : vector<16xf32> to vector<16x1xf32>
    %4 = math.sqrt %3 : vector<16x1xf32>
    %cst_1 = arith.constant 9.99999996E-13 : f32
    %5 = vector.broadcast %cst_1 : f32 to vector<16x1xf32>
    %6 = arith.maximumf %4, %5 : vector<16x1xf32>
    %7 = vector.broadcast %6 : vector<16x1xf32> to vector<16x288xf32>
    %8 = arith.divf %0, %7 : vector<16x288xf32>
    %c0_2 = arith.constant 0 : index
    %c0_3 = arith.constant 0 : index
    %9 = vector.load %arg1[%c0_2, %c0_3] : memref<16x288xf32, #tpu.memory_space<vmem>>, vector<16x288xf32>
    tpu.vector_store %arg1[%c0_2, %c0_3], %8 {strides = array<i32>} : memref<16x288xf32, #tpu.memory_space<vmem>>, vector<16x288xf32>,
    return
  }
}

module attributes {stable_mosaic.version = 11 : i64} {
  func.func @_conv_kernel(%arg0: i32, %arg1: memref<576x25xbf16, #tpu.memory_space<vmem>>, %arg2: memref<25x32xbf16, #tpu.memory_space<vmem>>, %arg3: memref<1x32xf32, #tpu.memory_space<vmem>>, %arg4: memref<576x32xf32, #tpu.memory_space<vmem>>) attributes {dimension_semantics = [#tpu.dimension_semantics<parallel>], iteration_bounds = array<i64: 2>, scalar_prefetch = 0 : i64, scratch_operands = 0 : i64, tpu.core_type = #tpu.core_type<tc>, window_params = [{transform_indices = @transform_0, window_bounds = array<i64: 576, 25>}, {pipeline_mode = #tpu.pipeline_mode<synchronous>, transform_indices = @transform_1, window_bounds = array<i64: 25, 32>}, {pipeline_mode = #tpu.pipeline_mode<synchronous>, transform_indices = @transform_2, window_bounds = array<i64: 1, 32>}, {transform_indices = @transform_3, window_bounds = array<i64: 576, 32>}]} {
    %c0 = arith.constant 0 : index
    %c0_0 = arith.constant 0 : index
    %0 = vector.load %arg1[%c0, %c0_0] : memref<576x25xbf16, #tpu.memory_space<vmem>>, vector<576x25xbf16>
    %c0_1 = arith.constant 0 : index
    %c0_2 = arith.constant 0 : index
    %1 = vector.load %arg2[%c0_1, %c0_2] : memref<25x32xbf16, #tpu.memory_space<vmem>>, vector<25x32xbf16>
    %cst = arith.constant dense<0.000000e+00> : vector<576x32xf32>
    %2 = tpu.matmul %0, %1, %cst {dimension_numbers = #tpu.dot_dimension_numbers<[1], [0], [0], [1], [0, 0, 1, 1], [], []>} : vector<576x25xbf16>, vector<25x32xbf16>, vector<576x32xf32> -> vector<576x32xf32>
    %c0_3 = arith.constant 0 : index
    %c0_4 = arith.constant 0 : index
    %3 = vector.load %arg3[%c0_3, %c0_4] : memref<1x32xf32, #tpu.memory_space<vmem>>, vector<1x32xf32>
    %4 = vector.broadcast %3 : vector<1x32xf32> to vector<576x32xf32>
    %5 = arith.addf %2, %4 : vector<576x32xf32>
    %cst_5 = arith.constant 0.000000e+00 : f32
    %6 = vector.broadcast %cst_5 : f32 to vector<576x32xf32>
    %7 = arith.maximumf %5, %6 : vector<576x32xf32>
    %c0_6 = arith.constant 0 : index
    %c0_7 = arith.constant 0 : index
    %8 = vector.load %arg4[%c0_6, %c0_7] : memref<576x32xf32, #tpu.memory_space<vmem>>, vector<576x32xf32>
    tpu.vector_store %arg4[%c0_6, %c0_7], %7 {strides = array<i32>} : memref<576x32xf32, #tpu.memory_space<vmem>>, vector<576x32xf32>,
    return
  }
  func.func @transform_0(%arg0: i32) -> (i32, i32) {
    %c0_i32 = arith.constant 0 : i32
    %c0_i32_0 = arith.constant 0 : i32
    return %arg0, %c0_i32 : i32, i32
  }
  func.func @transform_1(%arg0: i32) -> (i32, i32) {
    %c0_i32 = arith.constant 0 : i32
    %c0_i32_0 = arith.constant 0 : i32
    %c0_i32_1 = arith.constant 0 : i32
    return %c0_i32, %c0_i32_0 : i32, i32
  }
  func.func @transform_2(%arg0: i32) -> (i32, i32) {
    %c0_i32 = arith.constant 0 : i32
    %c0_i32_0 = arith.constant 0 : i32
    %c0_i32_1 = arith.constant 0 : i32
    return %c0_i32, %c0_i32_0 : i32, i32
  }
  func.func @transform_3(%arg0: i32) -> (i32, i32) {
    %c0_i32 = arith.constant 0 : i32
    %c0_i32_0 = arith.constant 0 : i32
    return %arg0, %c0_i32 : i32, i32
  }
}

module attributes {stable_mosaic.version = 11 : i64} {
  func.func @_conv_kernel(%arg0: memref<192x1120xbf16, #tpu.memory_space<vmem>>, %arg1: memref<1120x32xbf16, #tpu.memory_space<vmem>>, %arg2: memref<1x32xf32, #tpu.memory_space<vmem>>, %arg3: memref<192x32xf32, #tpu.memory_space<vmem>>) attributes {dimension_semantics = [], scalar_prefetch = 0 : i64, scratch_operands = 0 : i64, tpu.core_type = #tpu.core_type<tc>} {
    %c0 = arith.constant 0 : index
    %c0_0 = arith.constant 0 : index
    %0 = vector.load %arg0[%c0, %c0_0] : memref<192x1120xbf16, #tpu.memory_space<vmem>>, vector<192x1120xbf16>
    %c0_1 = arith.constant 0 : index
    %c0_2 = arith.constant 0 : index
    %1 = vector.load %arg1[%c0_1, %c0_2] : memref<1120x32xbf16, #tpu.memory_space<vmem>>, vector<1120x32xbf16>
    %cst = arith.constant dense<0.000000e+00> : vector<192x32xf32>
    %2 = tpu.matmul %0, %1, %cst {dimension_numbers = #tpu.dot_dimension_numbers<[1], [0], [0], [1], [0, 0, 1, 1], [], []>} : vector<192x1120xbf16>, vector<1120x32xbf16>, vector<192x32xf32> -> vector<192x32xf32>
    %c0_3 = arith.constant 0 : index
    %c0_4 = arith.constant 0 : index
    %3 = vector.load %arg2[%c0_3, %c0_4] : memref<1x32xf32, #tpu.memory_space<vmem>>, vector<1x32xf32>
    %4 = vector.broadcast %3 : vector<1x32xf32> to vector<192x32xf32>
    %5 = arith.addf %2, %4 : vector<192x32xf32>
    %cst_5 = arith.constant 0.000000e+00 : f32
    %6 = vector.broadcast %cst_5 : f32 to vector<192x32xf32>
    %7 = arith.maximumf %5, %6 : vector<192x32xf32>
    %c0_6 = arith.constant 0 : index
    %c0_7 = arith.constant 0 : index
    %8 = vector.load %arg3[%c0_6, %c0_7] : memref<192x32xf32, #tpu.memory_space<vmem>>, vector<192x32xf32>
    tpu.vector_store %arg3[%c0_6, %c0_7], %7 {strides = array<i32>} : memref<192x32xf32, #tpu.memory_space<vmem>>, vector<192x32xf32>,
    return
  }
}

module attributes {stable_mosaic.version = 11 : i64} {
  func.func @_conv_kernel(%arg0: memref<32x1120xbf16, #tpu.memory_space<vmem>>, %arg1: memref<1120x32xbf16, #tpu.memory_space<vmem>>, %arg2: memref<1x32xf32, #tpu.memory_space<vmem>>, %arg3: memref<32x32xf32, #tpu.memory_space<vmem>>) attributes {dimension_semantics = [], scalar_prefetch = 0 : i64, scratch_operands = 0 : i64, tpu.core_type = #tpu.core_type<tc>} {
    %c0 = arith.constant 0 : index
    %c0_0 = arith.constant 0 : index
    %0 = vector.load %arg0[%c0, %c0_0] : memref<32x1120xbf16, #tpu.memory_space<vmem>>, vector<32x1120xbf16>
    %c0_1 = arith.constant 0 : index
    %c0_2 = arith.constant 0 : index
    %1 = vector.load %arg1[%c0_1, %c0_2] : memref<1120x32xbf16, #tpu.memory_space<vmem>>, vector<1120x32xbf16>
    %cst = arith.constant dense<0.000000e+00> : vector<32x32xf32>
    %2 = tpu.matmul %0, %1, %cst {dimension_numbers = #tpu.dot_dimension_numbers<[1], [0], [0], [1], [0, 0, 1, 1], [], []>} : vector<32x1120xbf16>, vector<1120x32xbf16>, vector<32x32xf32> -> vector<32x32xf32>
    %c0_3 = arith.constant 0 : index
    %c0_4 = arith.constant 0 : index
    %3 = vector.load %arg2[%c0_3, %c0_4] : memref<1x32xf32, #tpu.memory_space<vmem>>, vector<1x32xf32>
    %4 = vector.broadcast %3 : vector<1x32xf32> to vector<32x32xf32>
    %5 = arith.addf %2, %4 : vector<32x32xf32>
    %cst_5 = arith.constant 0.000000e+00 : f32
    %6 = vector.broadcast %cst_5 : f32 to vector<32x32xf32>
    %7 = arith.maximumf %5, %6 : vector<32x32xf32>
    %c0_6 = arith.constant 0 : index
    %c0_7 = arith.constant 0 : index
    %8 = vector.load %arg3[%c0_6, %c0_7] : memref<32x32xf32, #tpu.memory_space<vmem>>, vector<32x32xf32>
    tpu.vector_store %arg3[%c0_6, %c0_7], %7 {strides = array<i32>} : memref<32x32xf32, #tpu.memory_space<vmem>>, vector<32x32xf32>,
    return
  }
}

module attributes {stable_mosaic.version = 11 : i64} {
  func.func @_conv_kernel(%arg0: memref<16x1120xbf16, #tpu.memory_space<vmem>>, %arg1: memref<1120x32xbf16, #tpu.memory_space<vmem>>, %arg2: memref<1x32xf32, #tpu.memory_space<vmem>>, %arg3: memref<16x32xf32, #tpu.memory_space<vmem>>) attributes {dimension_semantics = [], scalar_prefetch = 0 : i64, scratch_operands = 0 : i64, tpu.core_type = #tpu.core_type<tc>} {
    %c0 = arith.constant 0 : index
    %c0_0 = arith.constant 0 : index
    %0 = vector.load %arg0[%c0, %c0_0] : memref<16x1120xbf16, #tpu.memory_space<vmem>>, vector<16x1120xbf16>
    %c0_1 = arith.constant 0 : index
    %c0_2 = arith.constant 0 : index
    %1 = vector.load %arg1[%c0_1, %c0_2] : memref<1120x32xbf16, #tpu.memory_space<vmem>>, vector<1120x32xbf16>
    %cst = arith.constant dense<0.000000e+00> : vector<16x32xf32>
    %2 = tpu.matmul %0, %1, %cst {dimension_numbers = #tpu.dot_dimension_numbers<[1], [0], [0], [1], [0, 0, 1, 1], [], []>} : vector<16x1120xbf16>, vector<1120x32xbf16>, vector<16x32xf32> -> vector<16x32xf32>
    %c0_3 = arith.constant 0 : index
    %c0_4 = arith.constant 0 : index
    %3 = vector.load %arg2[%c0_3, %c0_4] : memref<1x32xf32, #tpu.memory_space<vmem>>, vector<1x32xf32>
    %4 = vector.broadcast %3 : vector<1x32xf32> to vector<16x32xf32>
    %5 = arith.addf %2, %4 : vector<16x32xf32>
    %cst_5 = arith.constant 0.000000e+00 : f32
    %6 = vector.broadcast %cst_5 : f32 to vector<16x32xf32>
    %7 = arith.maximumf %5, %6 : vector<16x32xf32>
    %c0_6 = arith.constant 0 : index
    %c0_7 = arith.constant 0 : index
    %8 = vector.load %arg3[%c0_6, %c0_7] : memref<16x32xf32, #tpu.memory_space<vmem>>, vector<16x32xf32>
    tpu.vector_store %arg3[%c0_6, %c0_7], %7 {strides = array<i32>} : memref<16x32xf32, #tpu.memory_space<vmem>>, vector<16x32xf32>,
    return
  }
}

module attributes {stable_mosaic.version = 11 : i64} {
  func.func @_lstm_fc_kernel(%arg0: memref<8x8x32xf32, #tpu.memory_space<vmem>>, %arg1: memref<8x8x1xf32, #tpu.memory_space<vmem>>, %arg2: memref<32x128xbf16, #tpu.memory_space<vmem>>, %arg3: memref<32x128xbf16, #tpu.memory_space<vmem>>, %arg4: memref<1x128xf32, #tpu.memory_space<vmem>>, %arg5: memref<32x128xbf16, #tpu.memory_space<vmem>>, %arg6: memref<1x128xf32, #tpu.memory_space<vmem>>, %arg7: memref<128x1xbf16, #tpu.memory_space<vmem>>, %arg8: memref<1x1xf32, #tpu.memory_space<vmem>>, %arg9: memref<64x1xf32, #tpu.memory_space<vmem>>, %arg10: memref<8x8x128xf32, #tpu.memory_space<vmem>>, %arg11: memref<8x8x32xf32, #tpu.memory_space<vmem>>) attributes {dimension_semantics = [], scalar_prefetch = 0 : i64, scratch_operands = 2 : i64, tpu.core_type = #tpu.core_type<tc>} {
    %c0 = arith.constant 0 : index
    %c0_0 = arith.constant 0 : index
    %c0_1 = arith.constant 0 : index
    %0 = vector.load %arg0[%c0, %c0_0, %c0_1] : memref<8x8x32xf32, #tpu.memory_space<vmem>>, vector<8x8x32xf32>
    %1 = vector.shape_cast %0 : vector<8x8x32xf32> to vector<64x32xf32>
    %2 = arith.truncf %1 : vector<64x32xf32> to vector<64x32xbf16>
    %c0_2 = arith.constant 0 : index
    %c0_3 = arith.constant 0 : index
    %3 = vector.load %arg2[%c0_2, %c0_3] : memref<32x128xbf16, #tpu.memory_space<vmem>>, vector<32x128xbf16>
    %cst = arith.constant dense<0.000000e+00> : vector<64x128xf32>
    %4 = tpu.matmul %2, %3, %cst {dimension_numbers = #tpu.dot_dimension_numbers<[1], [0], [0], [1], [0, 0, 1, 1], [], []>} : vector<64x32xbf16>, vector<32x128xbf16>, vector<64x128xf32> -> vector<64x128xf32>
    %c0_4 = arith.constant 0 : index
    %c0_5 = arith.constant 0 : index
    %5 = vector.load %arg4[%c0_4, %c0_5] : memref<1x128xf32, #tpu.memory_space<vmem>>, vector<1x128xf32>
    %6 = vector.broadcast %5 : vector<1x128xf32> to vector<64x128xf32>
    %7 = arith.addf %4, %6 : vector<64x128xf32>
    %8 = vector.shape_cast %7 : vector<64x128xf32> to vector<8x8x128xf32>
    %c0_6 = arith.constant 0 : index
    %c0_7 = arith.constant 0 : index
    %c0_8 = arith.constant 0 : index
    %9 = vector.load %arg10[%c0_6, %c0_7, %c0_8] : memref<8x8x128xf32, #tpu.memory_space<vmem>>, vector<8x8x128xf32>
    tpu.vector_store %arg10[%c0_6, %c0_7, %c0_8], %8 {strides = array<i32>} : memref<8x8x128xf32, #tpu.memory_space<vmem>>, vector<8x8x128xf32>,
    %cst_9 = arith.constant 0.000000e+00 : f32
    %10 = vector.broadcast %cst_9 : f32 to vector<8x32xf32>
    %cst_10 = arith.constant 0.000000e+00 : f32
    %11 = vector.broadcast %cst_10 : f32 to vector<8x32xf32>
    %c0_i32 = arith.constant 0 : i32
    %12 = arith.index_cast %c0_i32 : i32 to index
    %c0_11 = arith.constant 0 : index
    %c0_12 = arith.constant 0 : index
    %13 = vector.load %arg10[%12, %c0_11, %c0_12] : memref<8x8x128xf32, #tpu.memory_space<vmem>>, vector<1x8x128xf32>
    %14 = vector.shape_cast %13 : vector<1x8x128xf32> to vector<8x128xf32>
    %15 = arith.truncf %10 : vector<8x32xf32> to vector<8x32xbf16>
    %c0_13 = arith.constant 0 : index
    %c0_14 = arith.constant 0 : index
    %16 = vector.load %arg3[%c0_13, %c0_14] : memref<32x128xbf16, #tpu.memory_space<vmem>>, vector<32x128xbf16>
    %cst_15 = arith.constant dense<0.000000e+00> : vector<8x128xf32>
    %17 = tpu.matmul %15, %16, %cst_15 {dimension_numbers = #tpu.dot_dimension_numbers<[1], [0], [0], [1], [0, 0, 1, 1], [], []>} : vector<8x32xbf16>, vector<32x128xbf16>, vector<8x128xf32> -> vector<8x128xf32>
    %18 = arith.addf %14, %17 : vector<8x128xf32>
    %19 = arith.negf %18 : vector<8x128xf32>
    %20 = math.exp %19 : vector<8x128xf32>
    %cst_16 = arith.constant 1.000000e+00 : f32
    %21 = vector.broadcast %cst_16 : f32 to vector<8x128xf32>
    %22 = arith.addf %21, %20 : vector<8x128xf32>
    %23 = arith.divf %21, %22 : vector<8x128xf32>
    %24 = math.tanh %18 : vector<8x128xf32>
    %25 = vector.extract_strided_slice %23 {offsets = [0, 0], sizes = [8, 32], strides = [1, 1]} : vector<8x128xf32> to vector<8x32xf32>
    %26 = vector.extract_strided_slice %23 {offsets = [0, 32], sizes = [8, 32], strides = [1, 1]} : vector<8x128xf32> to vector<8x32xf32>
    %27 = vector.extract_strided_slice %24 {offsets = [0, 64], sizes = [8, 32], strides = [1, 1]} : vector<8x128xf32> to vector<8x32xf32>
    %28 = vector.extract_strided_slice %23 {offsets = [0, 96], sizes = [8, 32], strides = [1, 1]} : vector<8x128xf32> to vector<8x32xf32>
    %29 = arith.mulf %26, %11 : vector<8x32xf32>
    %30 = arith.mulf %25, %27 : vector<8x32xf32>
    %31 = arith.addf %29, %30 : vector<8x32xf32>
    %32 = math.tanh %31 : vector<8x32xf32>
    %33 = arith.mulf %28, %32 : vector<8x32xf32>
    %34 = arith.index_cast %c0_i32 : i32 to index
    %c0_17 = arith.constant 0 : index
    %c0_18 = arith.constant 0 : index
    %35 = vector.load %arg1[%34, %c0_17, %c0_18] : memref<8x8x1xf32, #tpu.memory_space<vmem>>, vector<1x8x1xf32>
    %36 = vector.shape_cast %35 : vector<1x8x1xf32> to vector<8x1xf32>
    %37 = vector.broadcast %36 : vector<8x1xf32> to vector<8x32xf32>
    %38 = arith.mulf %33, %37 : vector<8x32xf32>
    %39 = arith.index_cast %c0_i32 : i32 to index
    %c0_19 = arith.constant 0 : index
    %c0_20 = arith.constant 0 : index
    %40 = vector.load %arg11[%39, %c0_19, %c0_20] : memref<8x8x32xf32, #tpu.memory_space<vmem>>, vector<1x8x32xf32>
    %41 = vector.shape_cast %40 : vector<1x8x32xf32> to vector<8x32xf32>
    %42 = vector.shape_cast %38 : vector<8x32xf32> to vector<1x8x32xf32>
    tpu.vector_store %arg11[%39, %c0_19, %c0_20], %42 {strides = array<i32>} : memref<8x8x32xf32, #tpu.memory_space<vmem>>, vector<1x8x32xf32>,
    %c1_i32 = arith.constant 1 : i32
    %43 = arith.index_cast %c1_i32 : i32 to index
    %c0_21 = arith.constant 0 : index
    %c0_22 = arith.constant 0 : index
    %44 = vector.load %arg10[%43, %c0_21, %c0_22] : memref<8x8x128xf32, #tpu.memory_space<vmem>>, vector<1x8x128xf32>
    %45 = vector.shape_cast %44 : vector<1x8x128xf32> to vector<8x128xf32>
    %46 = arith.truncf %33 : vector<8x32xf32> to vector<8x32xbf16>
    %c0_23 = arith.constant 0 : index
    %c0_24 = arith.constant 0 : index
    %47 = vector.load %arg3[%c0_23, %c0_24] : memref<32x128xbf16, #tpu.memory_space<vmem>>, vector<32x128xbf16>
    %cst_25 = arith.constant dense<0.000000e+00> : vector<8x128xf32>
    %48 = tpu.matmul %46, %47, %cst_25 {dimension_numbers = #tpu.dot_dimension_numbers<[1], [0], [0], [1], [0, 0, 1, 1], [], []>} : vector<8x32xbf16>, vector<32x128xbf16>, vector<8x128xf32> -> vector<8x128xf32>
    %49 = arith.addf %45, %48 : vector<8x128xf32>
    %50 = arith.negf %49 : vector<8x128xf32>
    %51 = math.exp %50 : vector<8x128xf32>
    %cst_26 = arith.constant 1.000000e+00 : f32
    %52 = vector.broadcast %cst_26 : f32 to vector<8x128xf32>
    %53 = arith.addf %52, %51 : vector<8x128xf32>
    %54 = arith.divf %52, %53 : vector<8x128xf32>
    %55 = math.tanh %49 : vector<8x128xf32>
    %56 = vector.extract_strided_slice %54 {offsets = [0, 0], sizes = [8, 32], strides = [1, 1]} : vector<8x128xf32> to vector<8x32xf32>
    %57 = vector.extract_strided_slice %54 {offsets = [0, 32], sizes = [8, 32], strides = [1, 1]} : vector<8x128xf32> to vector<8x32xf32>
    %58 = vector.extract_strided_slice %55 {offsets = [0, 64], sizes = [8, 32], strides = [1, 1]} : vector<8x128xf32> to vector<8x32xf32>
    %59 = vector.extract_strided_slice %54 {offsets = [0, 96], sizes = [8, 32], strides = [1, 1]} : vector<8x128xf32> to vector<8x32xf32>
    %60 = arith.mulf %57, %31 : vector<8x32xf32>
    %61 = arith.mulf %56, %58 : vector<8x32xf32>
    %62 = arith.addf %60, %61 : vector<8x32xf32>
    %63 = math.tanh %62 : vector<8x32xf32>
    %64 = arith.mulf %59, %63 : vector<8x32xf32>
    %65 = arith.index_cast %c1_i32 : i32 to index
    %c0_27 = arith.constant 0 : index
    %c0_28 = arith.constant 0 : index
    %66 = vector.load %arg1[%65, %c0_27, %c0_28] : memref<8x8x1xf32, #tpu.memory_space<vmem>>, vector<1x8x1xf32>
    %67 = vector.shape_cast %66 : vector<1x8x1xf32> to vector<8x1xf32>
    %68 = vector.broadcast %67 : vector<8x1xf32> to vector<8x32xf32>
    %69 = arith.mulf %64, %68 : vector<8x32xf32>
    %70 = arith.index_cast %c1_i32 : i32 to index
    %c0_29 = arith.constant 0 : index
    %c0_30 = arith.constant 0 : index
    %71 = vector.load %arg11[%70, %c0_29, %c0_30] : memref<8x8x32xf32, #tpu.memory_space<vmem>>, vector<1x8x32xf32>
    %72 = vector.shape_cast %71 : vector<1x8x32xf32> to vector<8x32xf32>
    %73 = vector.shape_cast %69 : vector<8x32xf32> to vector<1x8x32xf32>
    tpu.vector_store %arg11[%70, %c0_29, %c0_30], %73 {strides = array<i32>} : memref<8x8x32xf32, #tpu.memory_space<vmem>>, vector<1x8x32xf32>,
    %c2_i32 = arith.constant 2 : i32
    %74 = arith.index_cast %c2_i32 : i32 to index
    %c0_31 = arith.constant 0 : index
    %c0_32 = arith.constant 0 : index
    %75 = vector.load %arg10[%74, %c0_31, %c0_32] : memref<8x8x128xf32, #tpu.memory_space<vmem>>, vector<1x8x128xf32>
    %76 = vector.shape_cast %75 : vector<1x8x128xf32> to vector<8x128xf32>
    %77 = arith.truncf %64 : vector<8x32xf32> to vector<8x32xbf16>
    %c0_33 = arith.constant 0 : index
    %c0_34 = arith.constant 0 : index
    %78 = vector.load %arg3[%c0_33, %c0_34] : memref<32x128xbf16, #tpu.memory_space<vmem>>, vector<32x128xbf16>
    %cst_35 = arith.constant dense<0.000000e+00> : vector<8x128xf32>
    %79 = tpu.matmul %77, %78, %cst_35 {dimension_numbers = #tpu.dot_dimension_numbers<[1], [0], [0], [1], [0, 0, 1, 1], [], []>} : vector<8x32xbf16>, vector<32x128xbf16>, vector<8x128xf32> -> vector<8x128xf32>
    %80 = arith.addf %76, %79 : vector<8x128xf32>
    %81 = arith.negf %80 : vector<8x128xf32>
    %82 = math.exp %81 : vector<8x128xf32>
    %cst_36 = arith.constant 1.000000e+00 : f32
    %83 = vector.broadcast %cst_36 : f32 to vector<8x128xf32>
    %84 = arith.addf %83, %82 : vector<8x128xf32>
    %85 = arith.divf %83, %84 : vector<8x128xf32>
    %86 = math.tanh %80 : vector<8x128xf32>
    %87 = vector.extract_strided_slice %85 {offsets = [0, 0], sizes = [8, 32], strides = [1, 1]} : vector<8x128xf32> to vector<8x32xf32>
    %88 = vector.extract_strided_slice %85 {offsets = [0, 32], sizes = [8, 32], strides = [1, 1]} : vector<8x128xf32> to vector<8x32xf32>
    %89 = vector.extract_strided_slice %86 {offsets = [0, 64], sizes = [8, 32], strides = [1, 1]} : vector<8x128xf32> to vector<8x32xf32>
    %90 = vector.extract_strided_slice %85 {offsets = [0, 96], sizes = [8, 32], strides = [1, 1]} : vector<8x128xf32> to vector<8x32xf32>
    %91 = arith.mulf %88, %62 : vector<8x32xf32>
    %92 = arith.mulf %87, %89 : vector<8x32xf32>
    %93 = arith.addf %91, %92 : vector<8x32xf32>
    %94 = math.tanh %93 : vector<8x32xf32>
    %95 = arith.mulf %90, %94 : vector<8x32xf32>
    %96 = arith.index_cast %c2_i32 : i32 to index
    %c0_37 = arith.constant 0 : index
    %c0_38 = arith.constant 0 : index
    %97 = vector.load %arg1[%96, %c0_37, %c0_38] : memref<8x8x1xf32, #tpu.memory_space<vmem>>, vector<1x8x1xf32>
    %98 = vector.shape_cast %97 : vector<1x8x1xf32> to vector<8x1xf32>
    %99 = vector.broadcast %98 : vector<8x1xf32> to vector<8x32xf32>
    %100 = arith.mulf %95, %99 : vector<8x32xf32>
    %101 = arith.index_cast %c2_i32 : i32 to index
    %c0_39 = arith.constant 0 : index
    %c0_40 = arith.constant 0 : index
    %102 = vector.load %arg11[%101, %c0_39, %c0_40] : memref<8x8x32xf32, #tpu.memory_space<vmem>>, vector<1x8x32xf32>
    %103 = vector.shape_cast %102 : vector<1x8x32xf32> to vector<8x32xf32>
    %104 = vector.shape_cast %100 : vector<8x32xf32> to vector<1x8x32xf32>
    tpu.vector_store %arg11[%101, %c0_39, %c0_40], %104 {strides = array<i32>} : memref<8x8x32xf32, #tpu.memory_space<vmem>>, vector<1x8x32xf32>,
    %c3_i32 = arith.constant 3 : i32
    %105 = arith.index_cast %c3_i32 : i32 to index
    %c0_41 = arith.constant 0 : index
    %c0_42 = arith.constant 0 : index
    %106 = vector.load %arg10[%105, %c0_41, %c0_42] : memref<8x8x128xf32, #tpu.memory_space<vmem>>, vector<1x8x128xf32>
    %107 = vector.shape_cast %106 : vector<1x8x128xf32> to vector<8x128xf32>
    %108 = arith.truncf %95 : vector<8x32xf32> to vector<8x32xbf16>
    %c0_43 = arith.constant 0 : index
    %c0_44 = arith.constant 0 : index
    %109 = vector.load %arg3[%c0_43, %c0_44] : memref<32x128xbf16, #tpu.memory_space<vmem>>, vector<32x128xbf16>
    %cst_45 = arith.constant dense<0.000000e+00> : vector<8x128xf32>
    %110 = tpu.matmul %108, %109, %cst_45 {dimension_numbers = #tpu.dot_dimension_numbers<[1], [0], [0], [1], [0, 0, 1, 1], [], []>} : vector<8x32xbf16>, vector<32x128xbf16>, vector<8x128xf32> -> vector<8x128xf32>
    %111 = arith.addf %107, %110 : vector<8x128xf32>
    %112 = arith.negf %111 : vector<8x128xf32>
    %113 = math.exp %112 : vector<8x128xf32>
    %cst_46 = arith.constant 1.000000e+00 : f32
    %114 = vector.broadcast %cst_46 : f32 to vector<8x128xf32>
    %115 = arith.addf %114, %113 : vector<8x128xf32>
    %116 = arith.divf %114, %115 : vector<8x128xf32>
    %117 = math.tanh %111 : vector<8x128xf32>
    %118 = vector.extract_strided_slice %116 {offsets = [0, 0], sizes = [8, 32], strides = [1, 1]} : vector<8x128xf32> to vector<8x32xf32>
    %119 = vector.extract_strided_slice %116 {offsets = [0, 32], sizes = [8, 32], strides = [1, 1]} : vector<8x128xf32> to vector<8x32xf32>
    %120 = vector.extract_strided_slice %117 {offsets = [0, 64], sizes = [8, 32], strides = [1, 1]} : vector<8x128xf32> to vector<8x32xf32>
    %121 = vector.extract_strided_slice %116 {offsets = [0, 96], sizes = [8, 32], strides = [1, 1]} : vector<8x128xf32> to vector<8x32xf32>
    %122 = arith.mulf %119, %93 : vector<8x32xf32>
    %123 = arith.mulf %118, %120 : vector<8x32xf32>
    %124 = arith.addf %122, %123 : vector<8x32xf32>
    %125 = math.tanh %124 : vector<8x32xf32>
    %126 = arith.mulf %121, %125 : vector<8x32xf32>
    %127 = arith.index_cast %c3_i32 : i32 to index
    %c0_47 = arith.constant 0 : index
    %c0_48 = arith.constant 0 : index
    %128 = vector.load %arg1[%127, %c0_47, %c0_48] : memref<8x8x1xf32, #tpu.memory_space<vmem>>, vector<1x8x1xf32>
    %129 = vector.shape_cast %128 : vector<1x8x1xf32> to vector<8x1xf32>
    %130 = vector.broadcast %129 : vector<8x1xf32> to vector<8x32xf32>
    %131 = arith.mulf %126, %130 : vector<8x32xf32>
    %132 = arith.index_cast %c3_i32 : i32 to index
    %c0_49 = arith.constant 0 : index
    %c0_50 = arith.constant 0 : index
    %133 = vector.load %arg11[%132, %c0_49, %c0_50] : memref<8x8x32xf32, #tpu.memory_space<vmem>>, vector<1x8x32xf32>
    %134 = vector.shape_cast %133 : vector<1x8x32xf32> to vector<8x32xf32>
    %135 = vector.shape_cast %131 : vector<8x32xf32> to vector<1x8x32xf32>
    tpu.vector_store %arg11[%132, %c0_49, %c0_50], %135 {strides = array<i32>} : memref<8x8x32xf32, #tpu.memory_space<vmem>>, vector<1x8x32xf32>,
    %c4_i32 = arith.constant 4 : i32
    %136 = arith.index_cast %c4_i32 : i32 to index
    %c0_51 = arith.constant 0 : index
    %c0_52 = arith.constant 0 : index
    %137 = vector.load %arg10[%136, %c0_51, %c0_52] : memref<8x8x128xf32, #tpu.memory_space<vmem>>, vector<1x8x128xf32>
    %138 = vector.shape_cast %137 : vector<1x8x128xf32> to vector<8x128xf32>
    %139 = arith.truncf %126 : vector<8x32xf32> to vector<8x32xbf16>
    %c0_53 = arith.constant 0 : index
    %c0_54 = arith.constant 0 : index
    %140 = vector.load %arg3[%c0_53, %c0_54] : memref<32x128xbf16, #tpu.memory_space<vmem>>, vector<32x128xbf16>
    %cst_55 = arith.constant dense<0.000000e+00> : vector<8x128xf32>
    %141 = tpu.matmul %139, %140, %cst_55 {dimension_numbers = #tpu.dot_dimension_numbers<[1], [0], [0], [1], [0, 0, 1, 1], [], []>} : vector<8x32xbf16>, vector<32x128xbf16>, vector<8x128xf32> -> vector<8x128xf32>
    %142 = arith.addf %138, %141 : vector<8x128xf32>
    %143 = arith.negf %142 : vector<8x128xf32>
    %144 = math.exp %143 : vector<8x128xf32>
    %cst_56 = arith.constant 1.000000e+00 : f32
    %145 = vector.broadcast %cst_56 : f32 to vector<8x128xf32>
    %146 = arith.addf %145, %144 : vector<8x128xf32>
    %147 = arith.divf %145, %146 : vector<8x128xf32>
    %148 = math.tanh %142 : vector<8x128xf32>
    %149 = vector.extract_strided_slice %147 {offsets = [0, 0], sizes = [8, 32], strides = [1, 1]} : vector<8x128xf32> to vector<8x32xf32>
    %150 = vector.extract_strided_slice %147 {offsets = [0, 32], sizes = [8, 32], strides = [1, 1]} : vector<8x128xf32> to vector<8x32xf32>
    %151 = vector.extract_strided_slice %148 {offsets = [0, 64], sizes = [8, 32], strides = [1, 1]} : vector<8x128xf32> to vector<8x32xf32>
    %152 = vector.extract_strided_slice %147 {offsets = [0, 96], sizes = [8, 32], strides = [1, 1]} : vector<8x128xf32> to vector<8x32xf32>
    %153 = arith.mulf %150, %124 : vector<8x32xf32>
    %154 = arith.mulf %149, %151 : vector<8x32xf32>
    %155 = arith.addf %153, %154 : vector<8x32xf32>
    %156 = math.tanh %155 : vector<8x32xf32>
    %157 = arith.mulf %152, %156 : vector<8x32xf32>
    %158 = arith.index_cast %c4_i32 : i32 to index
    %c0_57 = arith.constant 0 : index
    %c0_58 = arith.constant 0 : index
    %159 = vector.load %arg1[%158, %c0_57, %c0_58] : memref<8x8x1xf32, #tpu.memory_space<vmem>>, vector<1x8x1xf32>
    %160 = vector.shape_cast %159 : vector<1x8x1xf32> to vector<8x1xf32>
    %161 = vector.broadcast %160 : vector<8x1xf32> to vector<8x32xf32>
    %162 = arith.mulf %157, %161 : vector<8x32xf32>
    %163 = arith.index_cast %c4_i32 : i32 to index
    %c0_59 = arith.constant 0 : index
    %c0_60 = arith.constant 0 : index
    %164 = vector.load %arg11[%163, %c0_59, %c0_60] : memref<8x8x32xf32, #tpu.memory_space<vmem>>, vector<1x8x32xf32>
    %165 = vector.shape_cast %164 : vector<1x8x32xf32> to vector<8x32xf32>
    %166 = vector.shape_cast %162 : vector<8x32xf32> to vector<1x8x32xf32>
    tpu.vector_store %arg11[%163, %c0_59, %c0_60], %166 {strides = array<i32>} : memref<8x8x32xf32, #tpu.memory_space<vmem>>, vector<1x8x32xf32>,
    %c5_i32 = arith.constant 5 : i32
    %167 = arith.index_cast %c5_i32 : i32 to index
    %c0_61 = arith.constant 0 : index
    %c0_62 = arith.constant 0 : index
    %168 = vector.load %arg10[%167, %c0_61, %c0_62] : memref<8x8x128xf32, #tpu.memory_space<vmem>>, vector<1x8x128xf32>
    %169 = vector.shape_cast %168 : vector<1x8x128xf32> to vector<8x128xf32>
    %170 = arith.truncf %157 : vector<8x32xf32> to vector<8x32xbf16>
    %c0_63 = arith.constant 0 : index
    %c0_64 = arith.constant 0 : index
    %171 = vector.load %arg3[%c0_63, %c0_64] : memref<32x128xbf16, #tpu.memory_space<vmem>>, vector<32x128xbf16>
    %cst_65 = arith.constant dense<0.000000e+00> : vector<8x128xf32>
    %172 = tpu.matmul %170, %171, %cst_65 {dimension_numbers = #tpu.dot_dimension_numbers<[1], [0], [0], [1], [0, 0, 1, 1], [], []>} : vector<8x32xbf16>, vector<32x128xbf16>, vector<8x128xf32> -> vector<8x128xf32>
    %173 = arith.addf %169, %172 : vector<8x128xf32>
    %174 = arith.negf %173 : vector<8x128xf32>
    %175 = math.exp %174 : vector<8x128xf32>
    %cst_66 = arith.constant 1.000000e+00 : f32
    %176 = vector.broadcast %cst_66 : f32 to vector<8x128xf32>
    %177 = arith.addf %176, %175 : vector<8x128xf32>
    %178 = arith.divf %176, %177 : vector<8x128xf32>
    %179 = math.tanh %173 : vector<8x128xf32>
    %180 = vector.extract_strided_slice %178 {offsets = [0, 0], sizes = [8, 32], strides = [1, 1]} : vector<8x128xf32> to vector<8x32xf32>
    %181 = vector.extract_strided_slice %178 {offsets = [0, 32], sizes = [8, 32], strides = [1, 1]} : vector<8x128xf32> to vector<8x32xf32>
    %182 = vector.extract_strided_slice %179 {offsets = [0, 64], sizes = [8, 32], strides = [1, 1]} : vector<8x128xf32> to vector<8x32xf32>
    %183 = vector.extract_strided_slice %178 {offsets = [0, 96], sizes = [8, 32], strides = [1, 1]} : vector<8x128xf32> to vector<8x32xf32>
    %184 = arith.mulf %181, %155 : vector<8x32xf32>
    %185 = arith.mulf %180, %182 : vector<8x32xf32>
    %186 = arith.addf %184, %185 : vector<8x32xf32>
    %187 = math.tanh %186 : vector<8x32xf32>
    %188 = arith.mulf %183, %187 : vector<8x32xf32>
    %189 = arith.index_cast %c5_i32 : i32 to index
    %c0_67 = arith.constant 0 : index
    %c0_68 = arith.constant 0 : index
    %190 = vector.load %arg1[%189, %c0_67, %c0_68] : memref<8x8x1xf32, #tpu.memory_space<vmem>>, vector<1x8x1xf32>
    %191 = vector.shape_cast %190 : vector<1x8x1xf32> to vector<8x1xf32>
    %192 = vector.broadcast %191 : vector<8x1xf32> to vector<8x32xf32>
    %193 = arith.mulf %188, %192 : vector<8x32xf32>
    %194 = arith.index_cast %c5_i32 : i32 to index
    %c0_69 = arith.constant 0 : index
    %c0_70 = arith.constant 0 : index
    %195 = vector.load %arg11[%194, %c0_69, %c0_70] : memref<8x8x32xf32, #tpu.memory_space<vmem>>, vector<1x8x32xf32>
    %196 = vector.shape_cast %195 : vector<1x8x32xf32> to vector<8x32xf32>
    %197 = vector.shape_cast %193 : vector<8x32xf32> to vector<1x8x32xf32>
    tpu.vector_store %arg11[%194, %c0_69, %c0_70], %197 {strides = array<i32>} : memref<8x8x32xf32, #tpu.memory_space<vmem>>, vector<1x8x32xf32>,
    %c6_i32 = arith.constant 6 : i32
    %198 = arith.index_cast %c6_i32 : i32 to index
    %c0_71 = arith.constant 0 : index
    %c0_72 = arith.constant 0 : index
    %199 = vector.load %arg10[%198, %c0_71, %c0_72] : memref<8x8x128xf32, #tpu.memory_space<vmem>>, vector<1x8x128xf32>
    %200 = vector.shape_cast %199 : vector<1x8x128xf32> to vector<8x128xf32>
    %201 = arith.truncf %188 : vector<8x32xf32> to vector<8x32xbf16>
    %c0_73 = arith.constant 0 : index
    %c0_74 = arith.constant 0 : index
    %202 = vector.load %arg3[%c0_73, %c0_74] : memref<32x128xbf16, #tpu.memory_space<vmem>>, vector<32x128xbf16>
    %cst_75 = arith.constant dense<0.000000e+00> : vector<8x128xf32>
    %203 = tpu.matmul %201, %202, %cst_75 {dimension_numbers = #tpu.dot_dimension_numbers<[1], [0], [0], [1], [0, 0, 1, 1], [], []>} : vector<8x32xbf16>, vector<32x128xbf16>, vector<8x128xf32> -> vector<8x128xf32>
    %204 = arith.addf %200, %203 : vector<8x128xf32>
    %205 = arith.negf %204 : vector<8x128xf32>
    %206 = math.exp %205 : vector<8x128xf32>
    %cst_76 = arith.constant 1.000000e+00 : f32
    %207 = vector.broadcast %cst_76 : f32 to vector<8x128xf32>
    %208 = arith.addf %207, %206 : vector<8x128xf32>
    %209 = arith.divf %207, %208 : vector<8x128xf32>
    %210 = math.tanh %204 : vector<8x128xf32>
    %211 = vector.extract_strided_slice %209 {offsets = [0, 0], sizes = [8, 32], strides = [1, 1]} : vector<8x128xf32> to vector<8x32xf32>
    %212 = vector.extract_strided_slice %209 {offsets = [0, 32], sizes = [8, 32], strides = [1, 1]} : vector<8x128xf32> to vector<8x32xf32>
    %213 = vector.extract_strided_slice %210 {offsets = [0, 64], sizes = [8, 32], strides = [1, 1]} : vector<8x128xf32> to vector<8x32xf32>
    %214 = vector.extract_strided_slice %209 {offsets = [0, 96], sizes = [8, 32], strides = [1, 1]} : vector<8x128xf32> to vector<8x32xf32>
    %215 = arith.mulf %212, %186 : vector<8x32xf32>
    %216 = arith.mulf %211, %213 : vector<8x32xf32>
    %217 = arith.addf %215, %216 : vector<8x32xf32>
    %218 = math.tanh %217 : vector<8x32xf32>
    %219 = arith.mulf %214, %218 : vector<8x32xf32>
    %220 = arith.index_cast %c6_i32 : i32 to index
    %c0_77 = arith.constant 0 : index
    %c0_78 = arith.constant 0 : index
    %221 = vector.load %arg1[%220, %c0_77, %c0_78] : memref<8x8x1xf32, #tpu.memory_space<vmem>>, vector<1x8x1xf32>
    %222 = vector.shape_cast %221 : vector<1x8x1xf32> to vector<8x1xf32>
    %223 = vector.broadcast %222 : vector<8x1xf32> to vector<8x32xf32>
    %224 = arith.mulf %219, %223 : vector<8x32xf32>
    %225 = arith.index_cast %c6_i32 : i32 to index
    %c0_79 = arith.constant 0 : index
    %c0_80 = arith.constant 0 : index
    %226 = vector.load %arg11[%225, %c0_79, %c0_80] : memref<8x8x32xf32, #tpu.memory_space<vmem>>, vector<1x8x32xf32>
    %227 = vector.shape_cast %226 : vector<1x8x32xf32> to vector<8x32xf32>
    %228 = vector.shape_cast %224 : vector<8x32xf32> to vector<1x8x32xf32>
    tpu.vector_store %arg11[%225, %c0_79, %c0_80], %228 {strides = array<i32>} : memref<8x8x32xf32, #tpu.memory_space<vmem>>, vector<1x8x32xf32>,
    %c7_i32 = arith.constant 7 : i32
    %229 = arith.index_cast %c7_i32 : i32 to index
    %c0_81 = arith.constant 0 : index
    %c0_82 = arith.constant 0 : index
    %230 = vector.load %arg10[%229, %c0_81, %c0_82] : memref<8x8x128xf32, #tpu.memory_space<vmem>>, vector<1x8x128xf32>
    %231 = vector.shape_cast %230 : vector<1x8x128xf32> to vector<8x128xf32>
    %232 = arith.truncf %219 : vector<8x32xf32> to vector<8x32xbf16>
    %c0_83 = arith.constant 0 : index
    %c0_84 = arith.constant 0 : index
    %233 = vector.load %arg3[%c0_83, %c0_84] : memref<32x128xbf16, #tpu.memory_space<vmem>>, vector<32x128xbf16>
    %cst_85 = arith.constant dense<0.000000e+00> : vector<8x128xf32>
    %234 = tpu.matmul %232, %233, %cst_85 {dimension_numbers = #tpu.dot_dimension_numbers<[1], [0], [0], [1], [0, 0, 1, 1], [], []>} : vector<8x32xbf16>, vector<32x128xbf16>, vector<8x128xf32> -> vector<8x128xf32>
    %235 = arith.addf %231, %234 : vector<8x128xf32>
    %236 = arith.negf %235 : vector<8x128xf32>
    %237 = math.exp %236 : vector<8x128xf32>
    %cst_86 = arith.constant 1.000000e+00 : f32
    %238 = vector.broadcast %cst_86 : f32 to vector<8x128xf32>
    %239 = arith.addf %238, %237 : vector<8x128xf32>
    %240 = arith.divf %238, %239 : vector<8x128xf32>
    %241 = math.tanh %235 : vector<8x128xf32>
    %242 = vector.extract_strided_slice %240 {offsets = [0, 0], sizes = [8, 32], strides = [1, 1]} : vector<8x128xf32> to vector<8x32xf32>
    %243 = vector.extract_strided_slice %240 {offsets = [0, 32], sizes = [8, 32], strides = [1, 1]} : vector<8x128xf32> to vector<8x32xf32>
    %244 = vector.extract_strided_slice %241 {offsets = [0, 64], sizes = [8, 32], strides = [1, 1]} : vector<8x128xf32> to vector<8x32xf32>
    %245 = vector.extract_strided_slice %240 {offsets = [0, 96], sizes = [8, 32], strides = [1, 1]} : vector<8x128xf32> to vector<8x32xf32>
    %246 = arith.mulf %243, %217 : vector<8x32xf32>
    %247 = arith.mulf %242, %244 : vector<8x32xf32>
    %248 = arith.addf %246, %247 : vector<8x32xf32>
    %249 = math.tanh %248 : vector<8x32xf32>
    %250 = arith.mulf %245, %249 : vector<8x32xf32>
    %251 = arith.index_cast %c7_i32 : i32 to index
    %c0_87 = arith.constant 0 : index
    %c0_88 = arith.constant 0 : index
    %252 = vector.load %arg1[%251, %c0_87, %c0_88] : memref<8x8x1xf32, #tpu.memory_space<vmem>>, vector<1x8x1xf32>
    %253 = vector.shape_cast %252 : vector<1x8x1xf32> to vector<8x1xf32>
    %254 = vector.broadcast %253 : vector<8x1xf32> to vector<8x32xf32>
    %255 = arith.mulf %250, %254 : vector<8x32xf32>
    %256 = arith.index_cast %c7_i32 : i32 to index
    %c0_89 = arith.constant 0 : index
    %c0_90 = arith.constant 0 : index
    %257 = vector.load %arg11[%256, %c0_89, %c0_90] : memref<8x8x32xf32, #tpu.memory_space<vmem>>, vector<1x8x32xf32>
    %258 = vector.shape_cast %257 : vector<1x8x32xf32> to vector<8x32xf32>
    %259 = vector.shape_cast %255 : vector<8x32xf32> to vector<1x8x32xf32>
    tpu.vector_store %arg11[%256, %c0_89, %c0_90], %259 {strides = array<i32>} : memref<8x8x32xf32, #tpu.memory_space<vmem>>, vector<1x8x32xf32>,
    %c8_i32 = arith.constant 8 : i32
    %c0_91 = arith.constant 0 : index
    %c0_92 = arith.constant 0 : index
    %c0_93 = arith.constant 0 : index
    %260 = vector.load %arg11[%c0_91, %c0_92, %c0_93] : memref<8x8x32xf32, #tpu.memory_space<vmem>>, vector<8x8x32xf32>
    %261 = vector.shape_cast %260 : vector<8x8x32xf32> to vector<64x32xf32>
    %262 = arith.truncf %261 : vector<64x32xf32> to vector<64x32xbf16>
    %c0_94 = arith.constant 0 : index
    %c0_95 = arith.constant 0 : index
    %263 = vector.load %arg5[%c0_94, %c0_95] : memref<32x128xbf16, #tpu.memory_space<vmem>>, vector<32x128xbf16>
    %cst_96 = arith.constant dense<0.000000e+00> : vector<64x128xf32>
    %264 = tpu.matmul %262, %263, %cst_96 {dimension_numbers = #tpu.dot_dimension_numbers<[1], [0], [0], [1], [0, 0, 1, 1], [], []>} : vector<64x32xbf16>, vector<32x128xbf16>, vector<64x128xf32> -> vector<64x128xf32>
    %c0_97 = arith.constant 0 : index
    %c0_98 = arith.constant 0 : index
    %265 = vector.load %arg6[%c0_97, %c0_98] : memref<1x128xf32, #tpu.memory_space<vmem>>, vector<1x128xf32>
    %266 = vector.broadcast %265 : vector<1x128xf32> to vector<64x128xf32>
    %267 = arith.addf %264, %266 : vector<64x128xf32>
    %cst_99 = arith.constant 0.000000e+00 : f32
    %268 = vector.broadcast %cst_99 : f32 to vector<64x128xf32>
    %269 = arith.maximumf %267, %268 : vector<64x128xf32>
    %270 = arith.truncf %269 : vector<64x128xf32> to vector<64x128xbf16>
    %c0_100 = arith.constant 0 : index
    %c0_101 = arith.constant 0 : index
    %271 = vector.load %arg7[%c0_100, %c0_101] : memref<128x1xbf16, #tpu.memory_space<vmem>>, vector<128x1xbf16>
    %cst_102 = arith.constant dense<0.000000e+00> : vector<64x1xf32>
    %272 = tpu.matmul %270, %271, %cst_102 {dimension_numbers = #tpu.dot_dimension_numbers<[1], [0], [0], [1], [0, 0, 1, 1], [], []>} : vector<64x128xbf16>, vector<128x1xbf16>, vector<64x1xf32> -> vector<64x1xf32>
    %c0_103 = arith.constant 0 : index
    %c0_104 = arith.constant 0 : index
    %273 = vector.load %arg8[%c0_103, %c0_104] : memref<1x1xf32, #tpu.memory_space<vmem>>, vector<1x1xf32>
    %274 = vector.broadcast %273 : vector<1x1xf32> to vector<64x1xf32>
    %275 = arith.addf %272, %274 : vector<64x1xf32>
    %c0_105 = arith.constant 0 : index
    %c0_106 = arith.constant 0 : index
    %276 = vector.load %arg9[%c0_105, %c0_106] : memref<64x1xf32, #tpu.memory_space<vmem>>, vector<64x1xf32>
    tpu.vector_store %arg9[%c0_105, %c0_106], %275 {strides = array<i32>} : memref<64x1xf32, #tpu.memory_space<vmem>>, vector<64x1xf32>,
    return
  }
}

</mosaic_0001>

<llo_original>
// kernel: f0spec_forward.6
$region0: #{f0spec_forward.6}
  #allocation0 [shape = 'u32[]', space=smem, size = 0x4, offset = 0x4, fixed_abs, tag = 'smem constant byte address 0x4 - core index']
  #allocation1 [shape = 'u32[72,128]{1,0:T(1,128)}', space=vmem, size = 0x9000, scoped, tag = 'internal scratch']
  %s0 = inlined_call_operand.vmem [shape: f32[16,288], index: 0, kind: input, shape index: {}]
  %s1 = inlined_call_operand.vmem [shape: f32[16,288], index: 1, kind: output, shape index: {}]
  %s2 = sld [smem:[#allocation0]]
  $region14: #{f0spec_forward.6} parent=0
    _
  %s4 = ssub.s32 1, %s2
  %s5 = scalar_select 0, %s4, %s2
  // Predicated region
  $region2: #{f0spec_forward.6} parent=0 // pred_check
    _
  $region3: #{f0spec_forward.6} parent=0 // pred_check_branch
    %7 = sbr.rel (0) target = $region5
  $region4: #{f0spec_forward.6} parent=0 // pred_region
    _
  $region5: #{f0spec_forward.6} parent=0 // pred_fallthru
    _
  %v8 = vld [vmem:[%s0] sm:$0xff]
  %v9 = vld [vmem:[%s0 + $0x8] sm:$0xff]
  %v10 = vld [vmem:[%s0 + $0x10] sm:$0xff]
  %v11 = vld [vmem:[%s0 + $0x18] sm:$0xff]
  %v12 = vld [vmem:[%s0 + $0x20] sm:$0xff]
  %v13 = vld [vmem:[%s0 + $0x28] sm:$0xff]
  %v14 = vmul.f32 %v8, %v8
  %v15 = vmul.f32 %v9, %v9
  %v16 = vmul.f32 %v10, %v10
  %v17 = vmul.f32 %v11, %v11
  %v18 = vmul.f32 %v12, %v12
  %v19 = vmul.f32 %v13, %v13
  %v20 = vadd.f32 %v14, %v15
  %vm21 = vcmask 261120
  %v22 = vsel %vm21, %v16, 0.0
  %v23 = vadd.f32 %v20, %v22
  %24 = vadd.xlane.f32.xlu0 %v23
  %v25 = vpop.xlane.xlu0 %24
  %v26 = vadd.f32 %v17, %v18
  %v27 = vsel %vm21, %v19, 0.0
  %v28 = vadd.f32 %v26, %v27
  %29 = vadd.xlane.f32.xlu0 %v28
  %v30 = vpop.xlane.xlu0 %29
  %v31 = vrsqrt.pop %v25
  %v32 = vmul.f32 %v31, %v25
  %v33 = vmul.f32 %v32, %v31
  %v34 = vmul.f32 0.5, %v33
  %v35 = vsub.f32 1.5, %v34
  %v36 = vmul.f32 %v31, %v35
  %v37 = vmul.f32 %v25, %v36
  %vm38 = vcmp.eq.f32.partialorder %v25, inf
  %v39 = vsel %vm38, %v25, %v37
  %vm40 = vcmp.eq.f32.partialorder %v25, 0.0
  %v41 = vand.u32 %v25, 2147483648
  %v42 = vsel %vm40, %v41, %v39
  %v43 = vrsqrt.pop %v30
  %v44 = vmul.f32 %v43, %v30
  %v45 = vmul.f32 %v44, %v43
  %v46 = vmul.f32 0.5, %v45
  %v47 = vsub.f32 1.5, %v46
  %v48 = vmul.f32 %v43, %v47
  %v49 = vmul.f32 %v30, %v48
  %vm50 = vcmp.eq.f32.partialorder %v30, inf
  %v51 = vsel %vm50, %v30, %v49
  %vm52 = vcmp.eq.f32.partialorder %v30, 0.0
  %v53 = vand.u32 %v30, 2147483648
  %v54 = vsel %vm52, %v53, %v51
  %v55 = vmax.f32 %v42, 1e-12
  %v56 = vmax.f32 %v54, 1e-12
  %v57 = vrcp.pop %v55
  %v58 = vmul.f32 %v55, %v57
  %v59 = vsub.f32 1.0, %v58
  %v60 = vmul.f32 %v57, %v59
  %v61 = vadd.f32 %v57, %v60
  %vm62 = vweird.f32 %v55
  %vm63 = vweird.f32 %v57
  %vm64 = vmor %vm62, %vm63
  %v65 = vsel %vm64, %v57, %v61
  %v66 = vand.u32 2147483647, %v55
  %vm67 = vcmp.eq.f32.partialorder %v66, 8.507059e+37
  %v68 = vand.u32 %v55, 2147483648
  %v69 = vor.u32 1.1754944e-38, %v68
  %v70 = vsel %vm67, %v69, %v65
  %v71 = vmul.f32 %v8, %v70
  %v72 = vmul.f32 %v9, %v70
  %v73 = vmul.f32 %v10, %v70
  %v74 = vrcp.pop %v56
  %v75 = vmul.f32 %v56, %v74
  %v76 = vsub.f32 1.0, %v75
  %v77 = vmul.f32 %v74, %v76
  %v78 = vadd.f32 %v74, %v77
  %vm79 = vweird.f32 %v56
  %vm80 = vweird.f32 %v74
  %vm81 = vmor %vm79, %vm80
  %v82 = vsel %vm81, %v74, %v78
  %v83 = vand.u32 2147483647, %v56
  %vm84 = vcmp.eq.f32.partialorder %v83, 8.507059e+37
  %v85 = vand.u32 %v56, 2147483648
  %v86 = vor.u32 1.1754944e-38, %v85
  %v87 = vsel %vm84, %v86, %v82
  %v88 = vmul.f32 %v11, %v87
  %v89 = vmul.f32 %v12, %v87
  %v90 = vmul.f32 %v13, %v87
  %91 = vst [vmem:[%s1] sm:$0xff] %v71
  %92 = vst [vmem:[%s1 + $0x8] sm:$0xff] %v72
  %93 = vst.msk [vmem:[%s1 + $0x10] sm:$0xff] %vm21, %v73
  %94 = vst [vmem:[%s1 + $0x18] sm:$0xff] %v88
  %95 = vst [vmem:[%s1 + $0x20] sm:$0xff] %v89
  %96 = vst.msk [vmem:[%s1 + $0x28] sm:$0xff] %vm21, %v90
  // Predicated region
  $region6: #{f0spec_forward.6} parent=0 // pred_check
    _
  $region7: #{f0spec_forward.6} parent=0 // pred_check_branch
    %98 = sbr.rel (0) target = $region9
  $region8: #{f0spec_forward.6} parent=0 // pred_region
    _
  $region9: #{f0spec_forward.6} parent=0 // pred_fallthru
    _
  // Predicated region
  $region10: #{f0spec_forward.6} parent=0 // pred_check
    _
  $region11: #{f0spec_forward.6} parent=0 // pred_check_branch
    %100 = sbr.rel (0) target = $region13
  $region12: #{f0spec_forward.6} parent=0 // pred_region
    _
  $region13: #{f0spec_forward.6} parent=0 // pred_fallthru
    _

// kernel: f0spec_forward.7
$region0: #{f0spec_forward.7}
  #allocation0 [shape = 'u32[]', space=smem, size = 0x4, offset = 0x4, fixed_abs, tag = 'smem constant byte address 0x4 - core index']
  #allocation1 [shape = 'u32[72,128]{1,0:T(1,128)}', space=vmem, size = 0x9000, scoped, tag = 'internal scratch']
  %s0 = inlined_call_operand.vmem [shape: bf16[1152,25], index: 0, kind: input, shape index: {}]
  %s1 = inlined_call_operand.vmem [shape: bf16[25,32], index: 1, kind: input, shape index: {}]
  %s2 = inlined_call_operand.vmem [shape: f32[1,32], index: 2, kind: input, shape index: {}]
  %s3 = inlined_call_operand.vmem [shape: f32[1152,32], index: 3, kind: output, shape index: {}]
  %s4 = sld [smem:[#allocation0]]
  $region45: #{f0spec_forward.7} parent=0
    _
  %s6 = ssub.s32 1, %s4
  %s7 = scalar_select 0, %s6, %s4
  loop: start=0, step=1, limit=4
  $region2: #{f0spec_forward.7} parent=0 // loop_pre_header
    _
  $region3: #{f0spec_forward.7} parent=0 // loop_header
    %s9 = sphi 0, %s13
    %p10 = scmp.ge.s32.totalorder %s9, 4
    %s19 = sphi 0, %s21
    %s22 = sphi 0, %s19
    %s23 = sphi 0, %s22
    %s39 = sphi 0, %s23
    %s43 = sphi 0, %s43
    %s45 = sphi 0, %s43
    %s46 = sphi 0, %s45
    %s60 = sphi 0, %s46
    %s64 = sphi 0, %s64
    %s66 = sphi 0, %s64
    %s67 = sphi 0, %s66
    %s81 = sphi 0, %s67
    %s87 = sphi 0, %s89
    %s90 = sphi 0, %s87
    %s91 = sphi 0, %s90
    %s107 = sphi 0, %s91
  $region4: #{f0spec_forward.7} parent=0 // loop_header_branch
    %12 = sbr.rel (%p10) target = $region8
  $region5: #{f0spec_forward.7} parent=0 // loop_body
    %s14 = ssub.s32 %s9, 1
    %s15 = ssub.s32 %s9, 2
    %s16 = sadd.s32 %s9, 1
    %s17 = ssub.s32 %s9, %s16
    %p18 = scmp.eq.s32.totalorder %s17, 0
    %s20 = sadd.s32 %s19, 1
    %s21 = scalar_select %p18, %s19, %s20
    %p24 = pneg %p18
    %p25 = scmp.eq.s32.totalorder %s9, 1
    %p26 = por %p24, %p25
    %p27 = scmp.ne.s32.totalorder %s19, %s22
    %p28 = scmp.eq.s32.totalorder %s9, 0
    %p29 = por %p27, %p28
    %p30 = scmp.ne.s32.totalorder %s19, %s22
    %p31 = scmp.eq.s32.totalorder %s14, 1
    %p32 = por %p30, %p31
    %p33 = scmp.ne.s32.totalorder %s22, %s23
    %p34 = scmp.eq.s32.totalorder %s14, 0
    %p35 = por %p33, %p34
    %p36 = scmp.ne.s32.totalorder %s22, %s23
    %p37 = scmp.eq.s32.totalorder %s15, 1
    %p38 = por %p36, %p37
    %p40 = scmp.ne.s32.totalorder %s23, %s39
    %p41 = scmp.eq.s32.totalorder %s15, 0
    %p42 = por %p40, %p41
    %s44 = sadd.s32 %s43, 1
    %p47 = scmp.eq.s32.totalorder %s9, 1
    %p48 = scmp.ne.s32.totalorder %s43, %s45
    %p49 = scmp.eq.s32.totalorder %s9, 0
    %p50 = por %p48, %p49
    %p51 = scmp.ne.s32.totalorder %s43, %s45
    %p52 = scmp.eq.s32.totalorder %s14, 1
    %p53 = por %p51, %p52
    %p54 = scmp.ne.s32.totalorder %s45, %s46
    %p55 = scmp.eq.s32.totalorder %s14, 0
    %p56 = por %p54, %p55
    %p57 = scmp.ne.s32.totalorder %s45, %s46
    %p58 = scmp.eq.s32.totalorder %s15, 1
    %p59 = por %p57, %p58
    %p61 = scmp.ne.s32.totalorder %s46, %s60
    %p62 = scmp.eq.s32.totalorder %s15, 0
    %p63 = por %p61, %p62
    %s65 = sadd.s32 %s64, 1
    %p68 = scmp.eq.s32.totalorder %s9, 1
    %p69 = scmp.ne.s32.totalorder %s64, %s66
    %p70 = scmp.eq.s32.totalorder %s9, 0
    %p71 = por %p69, %p70
    %p72 = scmp.ne.s32.totalorder %s64, %s66
    %p73 = scmp.eq.s32.totalorder %s14, 1
    %p74 = por %p72, %p73
    %p75 = scmp.ne.s32.totalorder %s66, %s67
    %p76 = scmp.eq.s32.totalorder %s14, 0
    %p77 = por %p75, %p76
    %p78 = scmp.ne.s32.totalorder %s66, %s67
    %p79 = scmp.eq.s32.totalorder %s15, 1
    %p80 = por %p78, %p79
    %p82 = scmp.ne.s32.totalorder %s67, %s81
    %p83 = scmp.eq.s32.totalorder %s15, 0
    %p84 = por %p82, %p83
    %s85 = ssub.s32 %s9, %s16
    %p86 = scmp.eq.s32.totalorder %s85, 0
    %s88 = sadd.s32 %s87, 1
    %s89 = scalar_select %p86, %s87, %s88
    %p92 = pneg %p86
    %p93 = scmp.eq.s32.totalorder %s9, 1
    %p94 = por %p92, %p93
    %p95 = scmp.ne.s32.totalorder %s87, %s90
    %p96 = scmp.eq.s32.totalorder %s9, 0
    %p97 = por %p95, %p96
    %p98 = scmp.ne.s32.totalorder %s87, %s90
    %p99 = scmp.eq.s32.totalorder %s14, 1
    %p100 = por %p98, %p99
    %p101 = scmp.ne.s32.totalorder %s90, %s91
    %p102 = scmp.eq.s32.totalorder %s14, 0
    %p103 = por %p101, %p102
    %p104 = scmp.ne.s32.totalorder %s90, %s91
    %p105 = scmp.eq.s32.totalorder %s15, 1
    %p106 = por %p104, %p105
    %p108 = scmp.ne.s32.totalorder %s91, %s107
    %p109 = scmp.eq.s32.totalorder %s15, 0
    %p110 = por %p108, %p109
    %p111 = scmp.le.s32.totalorder 1, %s9
    %p112 = scmp.lt.s32.totalorder %s9, 3
    %p113 = pnand %p111, %p112
    %p114 = pneg %p113
    // Predicated region
    $region9: #{f0spec_forward.7} parent=5 // pred_check
      _
    $region10: #{f0spec_forward.7} parent=5 // pred_check_branch
      %116 = sbr.rel (%p113) target = $region12
    $region11: #{f0spec_forward.7} parent=5 // pred_region
      %s117 = ssub.s32 %s9, 1
      // Predicated region
      $region13: #{f0spec_forward.7} parent=11 // pred_check
        %p118 = pneg %p56
      $region14: #{f0spec_forward.7} parent=11 // pred_check_branch
        %120 = sbr.rel (%p118) target = $region16
      $region15: #{f0spec_forward.7} parent=11 // pred_region
        _
      $region16: #{f0spec_forward.7} parent=11 // pred_fallthru
        _
      // Predicated region
      $region17: #{f0spec_forward.7} parent=11 // pred_check
        %p121 = pneg %p77
      $region18: #{f0spec_forward.7} parent=11 // pred_check_branch
        %123 = sbr.rel (%p121) target = $region20
      $region19: #{f0spec_forward.7} parent=11 // pred_region
        _
      $region20: #{f0spec_forward.7} parent=11 // pred_fallthru
        _
    $region12: #{f0spec_forward.7} parent=5 // pred_fallthru
      _
    %p124 = scmp.lt.s32.totalorder %s9, 2
    // Predicated region
    $region21: #{f0spec_forward.7} parent=5 // pred_check
      %p125 = pneg %p124
    $region22: #{f0spec_forward.7} parent=5 // pred_check_branch
      %127 = sbr.rel (%p125) target = $region24
    $region23: #{f0spec_forward.7} parent=5 // pred_region
      // Predicated region
      $region25: #{f0spec_forward.7} parent=23 // pred_check
        %p128 = pneg %p29
      $region26: #{f0spec_forward.7} parent=23 // pred_check_branch
        %130 = sbr.rel (%p128) target = $region28
      $region27: #{f0spec_forward.7} parent=23 // pred_region
        %s131 = smul.u32 72, %s9
        %p132 = scmp.lt.s32.totalorder %s131, 143
        %s133 = scalar_select %p132, %s131, 143
        %s134 = smul.addr %s133, 4
        %s135 = scalar_lea.vmem %s0, %s134
        %s136 = smul.u32 72, %s9
      $region28: #{f0spec_forward.7} parent=23 // pred_fallthru
        _
    $region24: #{f0spec_forward.7} parent=5 // pred_fallthru
      _
    %p137 = scmp.le.s32.totalorder 1, %s9
    %p138 = scmp.lt.s32.totalorder %s9, 3
    %p139 = pnand %p137, %p138
    %p140 = pneg %p139
    // Predicated region
    $region29: #{f0spec_forward.7} parent=5 // pred_check
      _
    $region30: #{f0spec_forward.7} parent=5 // pred_check_branch
      %142 = sbr.rel (%p139) target = $region32
    $region31: #{f0spec_forward.7} parent=5 // pred_region
      %s143 = ssub.s32 %s9, 1
      %s144 = smul.u32 72, %s14
      %p145 = scmp.lt.s32.totalorder %s144, 143
      %s146 = scalar_select %p145, %s144, 143
      %s147 = smul.addr %s146, 4
      %s148 = scalar_lea.vmem %s0, %s147
      %p149 = pneg %p35
      %p150 = pneg %p32
      %p151 = pneg %p56
      %p152 = pneg %p53
      %p153 = pneg %p77
      %p154 = pneg %p74
      %p155 = pneg %p103
      %p156 = pneg %p100
      %s157 = smul.u32 72, %s14
      %p158 = scmp.lt.s32.totalorder %s157, 143
      %s159 = scalar_select %p158, %s157, 143
      %s160 = smul.addr %s159, 8
      %s161 = scalar_lea.vmem %s3, %s160
      %s162 = smul.u32 72, %s14
      %p163 = scmp.lt.s32.totalorder %s162, 143
      %s164 = scalar_select %p163, %s162, 143
      %s165 = smul.addr %s164, 4
      %s166 = scalar_lea.vmem %s0, %s165
      %s167 = smul.u32 72, %s14
      %s168 = smul.u32 72, %s14
      %p169 = scmp.lt.s32.totalorder %s168, 143
      %s170 = scalar_select %p169, %s168, 143
      %s171 = smul.addr %s170, 8
      %s172 = scalar_lea.vmem %s3, %s171
      %s173 = smul.u32 72, %s14
      %v175 = vld [vmem:[%s166] sm:$0xf]
      %v176 = vld [vmem:[%s166 + $0x4] sm:$0xf]
      %v177 = vld [vmem:[%s166 + $0x8] sm:$0xf]
      %v178 = vld [vmem:[%s166 + $0xc] sm:$0xf]
      %v179 = vld [vmem:[%s166 + $0x10] sm:$0xf]
      %v180 = vld [vmem:[%s166 + $0x14] sm:$0xf]
      %v181 = vld [vmem:[%s166 + $0x18] sm:$0xf]
      %v182 = vld [vmem:[%s166 + $0x1c] sm:$0xf]
      %v183 = vld [vmem:[%s166 + $0x20] sm:$0xf]
      %v184 = vld [vmem:[%s166 + $0x24] sm:$0xf]
      %v185 = vld [vmem:[%s166 + $0x28] sm:$0xf]
      %v186 = vld [vmem:[%s166 + $0x2c] sm:$0xf]
      %v187 = vld [vmem:[%s166 + $0x30] sm:$0xf]
      %v188 = vld [vmem:[%s166 + $0x34] sm:$0xf]
      %v189 = vld [vmem:[%s166 + $0x38] sm:$0xf]
      %v190 = vld [vmem:[%s166 + $0x3c] sm:$0xf]
      %v191 = vld [vmem:[%s166 + $0x40] sm:$0xf]
      %v192 = vld [vmem:[%s166 + $0x44] sm:$0xf]
      %v193 = vld [vmem:[%s166 + $0x48] sm:$0xf]
      %v194 = vld [vmem:[%s166 + $0x4c] sm:$0xf]
      %v195 = vld [vmem:[%s166 + $0x50] sm:$0xf]
      %v196 = vld [vmem:[%s166 + $0x54] sm:$0xf]
      %v197 = vld [vmem:[%s166 + $0x58] sm:$0xf]
      %v198 = vld [vmem:[%s166 + $0x5c] sm:$0xf]
      %v199 = vld [vmem:[%s166 + $0x60] sm:$0xf]
      %v200 = vld [vmem:[%s166 + $0x64] sm:$0xf]
      %v201 = vld [vmem:[%s166 + $0x68] sm:$0xf]
      %v202 = vld [vmem:[%s166 + $0x6c] sm:$0xf]
      %v203 = vld [vmem:[%s166 + $0x70] sm:$0xf]
      %v204 = vld [vmem:[%s166 + $0x74] sm:$0xf]
      %v205 = vld [vmem:[%s166 + $0x78] sm:$0xf]
      %v206 = vld [vmem:[%s166 + $0x7c] sm:$0xf]
      %v207 = vld [vmem:[%s166 + $0x80] sm:$0xf]
      %v208 = vld [vmem:[%s166 + $0x84] sm:$0xf]
      %v209 = vld [vmem:[%s166 + $0x88] sm:$0xf]
      %v210 = vld [vmem:[%s166 + $0x8c] sm:$0xf]
      %v211 = vld [vmem:[%s166 + $0x90] sm:$0xf]
      %v212 = vld [vmem:[%s166 + $0x94] sm:$0xf]
      %v213 = vld [vmem:[%s166 + $0x98] sm:$0xf]
      %v214 = vld [vmem:[%s166 + $0x9c] sm:$0xf]
      %v215 = vld [vmem:[%s166 + $0xa0] sm:$0xf]
      %v216 = vld [vmem:[%s166 + $0xa4] sm:$0xf]
      %v217 = vld [vmem:[%s166 + $0xa8] sm:$0xf]
      %v218 = vld [vmem:[%s166 + $0xac] sm:$0xf]
      %v219 = vld [vmem:[%s166 + $0xb0] sm:$0xf]
      %v220 = vld [vmem:[%s166 + $0xb4] sm:$0xf]
      %v221 = vld [vmem:[%s166 + $0xb8] sm:$0xf]
      %v222 = vld [vmem:[%s166 + $0xbc] sm:$0xf]
      %v223 = vld [vmem:[%s166 + $0xc0] sm:$0xf]
      %v224 = vld [vmem:[%s166 + $0xc4] sm:$0xf]
      %v225 = vld [vmem:[%s166 + $0xc8] sm:$0xf]
      %v226 = vld [vmem:[%s166 + $0xcc] sm:$0xf]
      %v227 = vld [vmem:[%s166 + $0xd0] sm:$0xf]
      %v228 = vld [vmem:[%s166 + $0xd4] sm:$0xf]
      %v229 = vld [vmem:[%s166 + $0xd8] sm:$0xf]
      %v230 = vld [vmem:[%s166 + $0xdc] sm:$0xf]
      %v231 = vld [vmem:[%s166 + $0xe0] sm:$0xf]
      %v232 = vld [vmem:[%s166 + $0xe4] sm:$0xf]
      %v233 = vld [vmem:[%s166 + $0xe8] sm:$0xf]
      %v234 = vld [vmem:[%s166 + $0xec] sm:$0xf]
      %v235 = vld [vmem:[%s166 + $0xf0] sm:$0xf]
      %v236 = vld [vmem:[%s166 + $0xf4] sm:$0xf]
      %v237 = vld [vmem:[%s166 + $0xf8] sm:$0xf]
      %v238 = vld [vmem:[%s166 + $0xfc] sm:$0xf]
      %v239 = vld [vmem:[%s166 + $0x100] sm:$0xf]
      %v240 = vld [vmem:[%s166 + $0x104] sm:$0xf]
      %v241 = vld [vmem:[%s166 + $0x108] sm:$0xf]
      %v242 = vld [vmem:[%s166 + $0x10c] sm:$0xf]
      %v243 = vld [vmem:[%s166 + $0x110] sm:$0xf]
      %v244 = vld [vmem:[%s166 + $0x114] sm:$0xf]
      %v245 = vld [vmem:[%s166 + $0x118] sm:$0xf]
      %v246 = vld [vmem:[%s166 + $0x11c] sm:$0xf]
      %v247 = vld [vmem:[%s1] sm:$0xf]
      %v248 = vld [vmem:[%s1 + $0x4] sm:$0xf]
      %v249 = vld [vmem:[%s1 + $0x8] sm:$0xf]
      %v250 = vld [vmem:[%s1 + $0xc] sm:$0x1]
      %v251 = vld [vmem:[%s2] sm:$0x1]
      %v253 = vperm.slane %v251, 0
      %v327 = vunpack.c.l.b16 %v175
      %v328 = vunpack.c.l.b16 %v176
      %v329 = vunpack.c.l.b16 %v177
      %v330 = vunpack.c.l.b16 %v178
      %v331 = vunpack.c.l.b16 %v179
      %v332 = vunpack.c.l.b16 %v180
      %v333 = vunpack.c.l.b16 %v181
      %v334 = vunpack.c.l.b16 %v182
      %v335 = vunpack.c.l.b16 %v183
      %v336 = vunpack.c.l.b16 %v184
      %v337 = vunpack.c.l.b16 %v185
      %v338 = vunpack.c.l.b16 %v186
      %v339 = vunpack.c.l.b16 %v187
      %v340 = vunpack.c.l.b16 %v188
      %v341 = vunpack.c.l.b16 %v189
      %v342 = vunpack.c.l.b16 %v190
      %v343 = vunpack.c.l.b16 %v191
      %v344 = vunpack.c.l.b16 %v192
      %v345 = vunpack.c.l.b16 %v193
      %v346 = vunpack.c.l.b16 %v194
      %v347 = vunpack.c.l.b16 %v195
      %v348 = vunpack.c.l.b16 %v196
      %v349 = vunpack.c.l.b16 %v197
      %v350 = vunpack.c.l.b16 %v198
      %v351 = vunpack.c.l.b16 %v199
      %v352 = vunpack.c.l.b16 %v200
      %v353 = vunpack.c.l.b16 %v201
      %v354 = vunpack.c.l.b16 %v202
      %v355 = vunpack.c.l.b16 %v203
      %v356 = vunpack.c.l.b16 %v204
      %v357 = vunpack.c.l.b16 %v205
      %v358 = vunpack.c.l.b16 %v206
      %v359 = vunpack.c.l.b16 %v207
      %v360 = vunpack.c.l.b16 %v208
      %v361 = vunpack.c.l.b16 %v209
      %v362 = vunpack.c.l.b16 %v210
      %v363 = vunpack.c.l.b16 %v211
      %v364 = vunpack.c.l.b16 %v212
      %v365 = vunpack.c.l.b16 %v213
      %v366 = vunpack.c.l.b16 %v214
      %v367 = vunpack.c.l.b16 %v215
      %v368 = vunpack.c.l.b16 %v216
      %v369 = vunpack.c.l.b16 %v217
      %v370 = vunpack.c.l.b16 %v218
      %v371 = vunpack.c.l.b16 %v219
      %v372 = vunpack.c.l.b16 %v220
      %v373 = vunpack.c.l.b16 %v221
      %v374 = vunpack.c.l.b16 %v222
      %v375 = vunpack.c.l.b16 %v223
      %v376 = vunpack.c.l.b16 %v224
      %v377 = vunpack.c.l.b16 %v225
      %v378 = vunpack.c.l.b16 %v226
      %v379 = vunpack.c.l.b16 %v227
      %v380 = vunpack.c.l.b16 %v228
      %v381 = vunpack.c.l.b16 %v229
      %v382 = vunpack.c.l.b16 %v230
      %v383 = vunpack.c.l.b16 %v231
      %v384 = vunpack.c.l.b16 %v232
      %v385 = vunpack.c.l.b16 %v233
      %v386 = vunpack.c.l.b16 %v234
      %v387 = vunpack.c.l.b16 %v235
      %v388 = vunpack.c.l.b16 %v236
      %v389 = vunpack.c.l.b16 %v237
      %v390 = vunpack.c.l.b16 %v238
      %v391 = vunpack.c.l.b16 %v239
      %v392 = vunpack.c.l.b16 %v240
      %v393 = vunpack.c.l.b16 %v241
      %v394 = vunpack.c.l.b16 %v242
      %v395 = vunpack.c.l.b16 %v243
      %v396 = vunpack.c.l.b16 %v244
      %v397 = vunpack.c.l.b16 %v245
      %v398 = vunpack.c.l.b16 %v246
      %v399 = vpack.c.b16 %v328, %v327
      %v400 = vpack.c.b16 %v330, %v329
      %v401 = vpack.c.b16 %v332, %v331
      %v402 = vpack.c.b16 %v334, %v333
      %v403 = vpack.c.b16 %v336, %v335
      %v404 = vpack.c.b16 %v338, %v337
      %v405 = vpack.c.b16 %v340, %v339
      %v406 = vpack.c.b16 %v342, %v341
      %v407 = vpack.c.b16 %v344, %v343
      %v408 = vpack.c.b16 %v346, %v345
      %v409 = vpack.c.b16 %v348, %v347
      %v410 = vpack.c.b16 %v350, %v349
      %v411 = vpack.c.b16 %v352, %v351
      %v412 = vpack.c.b16 %v354, %v353
      %v413 = vpack.c.b16 %v356, %v355
      %v414 = vpack.c.b16 %v358, %v357
      %v415 = vpack.c.b16 %v360, %v359
      %v416 = vpack.c.b16 %v362, %v361
      %v417 = vpack.c.b16 %v364, %v363
      %v418 = vpack.c.b16 %v366, %v365
      %v419 = vpack.c.b16 %v368, %v367
      %v420 = vpack.c.b16 %v370, %v369
      %v421 = vpack.c.b16 %v372, %v371
      %v422 = vpack.c.b16 %v374, %v373
      %v423 = vpack.c.b16 %v376, %v375
      %v424 = vpack.c.b16 %v378, %v377
      %v425 = vpack.c.b16 %v380, %v379
      %v426 = vpack.c.b16 %v382, %v381
      %v427 = vpack.c.b16 %v384, %v383
      %v428 = vpack.c.b16 %v386, %v385
      %v429 = vpack.c.b16 %v388, %v387
      %v430 = vpack.c.b16 %v390, %v389
      %v431 = vpack.c.b16 %v392, %v391
      %v432 = vpack.c.b16 %v394, %v393
      %v433 = vpack.c.b16 %v396, %v395
      %v434 = vpack.c.b16 %v398, %v397
      %v439 = vunpack.c.l.b16 %v247
      %v440 = vunpack.c.l.b16 %v248
      %v441 = vunpack.c.l.b16 %v249
      %v442 = vunpack.c.l.b16 %v250
      %v443 = vpack.c.b16 %v440, %v439
      %v444 = vpack.c.b16 %v442, %v441
      %vm446 = vcmask 203776
      %v448 = vsel %vm446, %v399, 0
      %v451 = vsel %vm446, %v400, 0
      %v454 = vsel %vm446, %v401, 0
      %v457 = vsel %vm446, %v402, 0
      %v460 = vsel %vm446, %v403, 0
      %v463 = vsel %vm446, %v404, 0
      %v466 = vsel %vm446, %v405, 0
      %v469 = vsel %vm446, %v406, 0
      %v472 = vsel %vm446, %v407, 0
      %v475 = vsel %vm446, %v408, 0
      %v478 = vsel %vm446, %v409, 0
      %v481 = vsel %vm446, %v410, 0
      %v484 = vsel %vm446, %v411, 0
      %v487 = vsel %vm446, %v412, 0
      %v490 = vsel %vm446, %v413, 0
      %v493 = vsel %vm446, %v414, 0
      %v496 = vsel %vm446, %v415, 0
      %v499 = vsel %vm446, %v416, 0
      %v502 = vsel %vm446, %v417, 0
      %v505 = vsel %vm446, %v418, 0
      %v508 = vsel %vm446, %v419, 0
      %v511 = vsel %vm446, %v420, 0
      %v514 = vsel %vm446, %v421, 0
      %v517 = vsel %vm446, %v422, 0
      %v520 = vsel %vm446, %v423, 0
      %v523 = vsel %vm446, %v424, 0
      %v526 = vsel %vm446, %v425, 0
      %v529 = vsel %vm446, %v426, 0
      %v532 = vsel %vm446, %v427, 0
      %v535 = vsel %vm446, %v428, 0
      %v538 = vsel %vm446, %v429, 0
      %v541 = vsel %vm446, %v430, 0
      %v544 = vsel %vm446, %v431, 0
      %v547 = vsel %vm446, %v432, 0
      %v550 = vsel %vm446, %v433, 0
      %v553 = vsel %vm446, %v434, 0
      %vm555 = vcmask 1043456
      %vm556 = vcmask 1044480
      %v557 = vsel %vm555, 4294967295, 65535
      %v558 = vsel %vm556, %v557, 0
      %v560 = vand.u32 %v444, %v558
      %562 = vmatpush.bf16.msra.mxu0 0
      %563 = vmatpush.bf16.msra.mxu0 0
      %564 = vmatpush.bf16.msra.mxu0 0
      %565 = vmatpush.bf16.msra.mxu0 0
      %566 = vmatpush.bf16.msra.mxu0 0
      %567 = vmatpush.bf16.msra.mxu0 0
      %568 = vmatpush.bf16.msra.mxu0 %v560
      %569 = vmatpush.bf16.msra.mxu0 %v443
      %570 = vmatmul.bf16.gmra.mxu0 %v448
      %v571 = vpop.f32.mrf.mxu0
      %v572 = vadd.f32 %v253, %v571
      %v573 = vpop.f32.mrf.mxu0
      %v574 = vadd.f32 %v253, %v573
      %575 = vmatmul.bf16.gmra.mxu0 %v451
      %v576 = vpop.f32.mrf.mxu0
      %v577 = vadd.f32 %v253, %v576
      %v578 = vpop.f32.mrf.mxu0
      %v579 = vadd.f32 %v253, %v578
      %580 = vmatmul.bf16.gmra.mxu0 %v454
      %v581 = vpop.f32.mrf.mxu0
      %v582 = vadd.f32 %v253, %v581
      %v583 = vpop.f32.mrf.mxu0
      %v584 = vadd.f32 %v253, %v583
      %585 = vmatmul.bf16.gmra.mxu0 %v457
      %v586 = vpop.f32.mrf.mxu0
      %v587 = vadd.f32 %v253, %v586
      %v588 = vpop.f32.mrf.mxu0
      %v589 = vadd.f32 %v253, %v588
      %590 = vmatmul.bf16.gmra.mxu0 %v460
      %v591 = vpop.f32.mrf.mxu0
      %v592 = vadd.f32 %v253, %v591
      %v593 = vpop.f32.mrf.mxu0
      %v594 = vadd.f32 %v253, %v593
      %595 = vmatmul.bf16.gmra.mxu0 %v463
      %v596 = vpop.f32.mrf.mxu0
      %v597 = vadd.f32 %v253, %v596
      %v598 = vpop.f32.mrf.mxu0
      %v599 = vadd.f32 %v253, %v598
      %600 = vmatmul.bf16.gmra.mxu0 %v466
      %v601 = vpop.f32.mrf.mxu0
      %v602 = vadd.f32 %v253, %v601
      %v603 = vpop.f32.mrf.mxu0
      %v604 = vadd.f32 %v253, %v603
      %605 = vmatmul.bf16.gmra.mxu0 %v469
      %v606 = vpop.f32.mrf.mxu0
      %v607 = vadd.f32 %v253, %v606
      %v608 = vpop.f32.mrf.mxu0
      %v609 = vadd.f32 %v253, %v608
      %610 = vmatmul.bf16.gmra.mxu0 %v472
      %v611 = vpop.f32.mrf.mxu0
      %v612 = vadd.f32 %v253, %v611
      %v613 = vpop.f32.mrf.mxu0
      %v614 = vadd.f32 %v253, %v613
      %615 = vmatmul.bf16.gmra.mxu0 %v475
      %v616 = vpop.f32.mrf.mxu0
      %v617 = vadd.f32 %v253, %v616
      %v618 = vpop.f32.mrf.mxu0
      %v619 = vadd.f32 %v253, %v618
      %620 = vmatmul.bf16.gmra.mxu0 %v478
      %v621 = vpop.f32.mrf.mxu0
      %v622 = vadd.f32 %v253, %v621
      %v623 = vpop.f32.mrf.mxu0
      %v624 = vadd.f32 %v253, %v623
      %625 = vmatmul.bf16.gmra.mxu0 %v481
      %v626 = vpop.f32.mrf.mxu0
      %v627 = vadd.f32 %v253, %v626
      %v628 = vpop.f32.mrf.mxu0
      %v629 = vadd.f32 %v253, %v628
      %630 = vmatmul.bf16.gmra.mxu0 %v484
      %v631 = vpop.f32.mrf.mxu0
      %v632 = vadd.f32 %v253, %v631
      %v633 = vpop.f32.mrf.mxu0
      %v634 = vadd.f32 %v253, %v633
      %635 = vmatmul.bf16.gmra.mxu0 %v487
      %v636 = vpop.f32.mrf.mxu0
      %v637 = vadd.f32 %v253, %v636
      %v638 = vpop.f32.mrf.mxu0
      %v639 = vadd.f32 %v253, %v638
      %640 = vmatmul.bf16.gmra.mxu0 %v490
      %v641 = vpop.f32.mrf.mxu0
      %v642 = vadd.f32 %v253, %v641
      %v643 = vpop.f32.mrf.mxu0
      %v644 = vadd.f32 %v253, %v643
      %645 = vmatmul.bf16.gmra.mxu0 %v493
      %v646 = vpop.f32.mrf.mxu0
      %v647 = vadd.f32 %v253, %v646
      %v648 = vpop.f32.mrf.mxu0
      %v649 = vadd.f32 %v253, %v648
      %650 = vmatmul.bf16.gmra.mxu0 %v496
      %v651 = vpop.f32.mrf.mxu0
      %v652 = vadd.f32 %v253, %v651
      %v653 = vpop.f32.mrf.mxu0
      %v654 = vadd.f32 %v253, %v653
      %655 = vmatmul.bf16.gmra.mxu0 %v499
      %v656 = vpop.f32.mrf.mxu0
      %v657 = vadd.f32 %v253, %v656
      %v658 = vpop.f32.mrf.mxu0
      %v659 = vadd.f32 %v253, %v658
      %660 = vmatmul.bf16.gmra.mxu0 %v502
      %v661 = vpop.f32.mrf.mxu0
      %v662 = vadd.f32 %v253, %v661
      %v663 = vpop.f32.mrf.mxu0
      %v664 = vadd.f32 %v253, %v663
      %665 = vmatmul.bf16.gmra.mxu0 %v505
      %v666 = vpop.f32.mrf.mxu0
      %v667 = vadd.f32 %v253, %v666
      %v668 = vpop.f32.mrf.mxu0
      %v669 = vadd.f32 %v253, %v668
      %670 = vmatmul.bf16.gmra.mxu0 %v508
      %v671 = vpop.f32.mrf.mxu0
      %v672 = vadd.f32 %v253, %v671
      %v673 = vpop.f32.mrf.mxu0
      %v674 = vadd.f32 %v253, %v673
      %675 = vmatmul.bf16.gmra.mxu0 %v511
      %v676 = vpop.f32.mrf.mxu0
      %v677 = vadd.f32 %v253, %v676
      %v678 = vpop.f32.mrf.mxu0
      %v679 = vadd.f32 %v253, %v678
      %680 = vmatmul.bf16.gmra.mxu0 %v514
      %v681 = vpop.f32.mrf.mxu0
      %v682 = vadd.f32 %v253, %v681
      %v683 = vpop.f32.mrf.mxu0
      %v684 = vadd.f32 %v253, %v683
      %685 = vmatmul.bf16.gmra.mxu0 %v517
      %v686 = vpop.f32.mrf.mxu0
      %v687 = vadd.f32 %v253, %v686
      %v688 = vpop.f32.mrf.mxu0
      %v689 = vadd.f32 %v253, %v688
      %690 = vmatmul.bf16.gmra.mxu0 %v520
      %v691 = vpop.f32.mrf.mxu0
      %v692 = vadd.f32 %v253, %v691
      %v693 = vpop.f32.mrf.mxu0
      %v694 = vadd.f32 %v253, %v693
      %695 = vmatmul.bf16.gmra.mxu0 %v523
      %v696 = vpop.f32.mrf.mxu0
      %v697 = vadd.f32 %v253, %v696
      %v698 = vpop.f32.mrf.mxu0
      %v699 = vadd.f32 %v253, %v698
      %700 = vmatmul.bf16.gmra.mxu0 %v526
      %v701 = vpop.f32.mrf.mxu0
      %v702 = vadd.f32 %v253, %v701
      %v703 = vpop.f32.mrf.mxu0
      %v704 = vadd.f32 %v253, %v703
      %705 = vmatmul.bf16.gmra.mxu0 %v529
      %v706 = vpop.f32.mrf.mxu0
      %v707 = vadd.f32 %v253, %v706
      %v708 = vpop.f32.mrf.mxu0
      %v709 = vadd.f32 %v253, %v708
      %710 = vmatmul.bf16.gmra.mxu0 %v532
      %v711 = vpop.f32.mrf.mxu0
      %v712 = vadd.f32 %v253, %v711
      %v713 = vpop.f32.mrf.mxu0
      %v714 = vadd.f32 %v253, %v713
      %715 = vmatmul.bf16.gmra.mxu0 %v535
      %v716 = vpop.f32.mrf.mxu0
      %v717 = vadd.f32 %v253, %v716
      %v718 = vpop.f32.mrf.mxu0
      %v719 = vadd.f32 %v253, %v718
      %720 = vmatmul.bf16.gmra.mxu0 %v538
      %v721 = vpop.f32.mrf.mxu0
      %v722 = vadd.f32 %v253, %v721
      %v723 = vpop.f32.mrf.mxu0
      %v724 = vadd.f32 %v253, %v723
      %725 = vmatmul.bf16.gmra.mxu0 %v541
      %v726 = vpop.f32.mrf.mxu0
      %v727 = vadd.f32 %v253, %v726
      %v728 = vpop.f32.mrf.mxu0
      %v729 = vadd.f32 %v253, %v728
      %730 = vmatmul.bf16.gmra.mxu0 %v544
      %v731 = vpop.f32.mrf.mxu0
      %v732 = vadd.f32 %v253, %v731
      %v733 = vpop.f32.mrf.mxu0
      %v734 = vadd.f32 %v253, %v733
      %735 = vmatmul.bf16.gmra.mxu0 %v547
      %v736 = vpop.f32.mrf.mxu0
      %v737 = vadd.f32 %v253, %v736
      %v738 = vpop.f32.mrf.mxu0
      %v739 = vadd.f32 %v253, %v738
      %740 = vmatmul.bf16.gmra.mxu0 %v550
      %v741 = vpop.f32.mrf.mxu0
      %v742 = vadd.f32 %v253, %v741
      %v743 = vpop.f32.mrf.mxu0
      %v744 = vadd.f32 %v253, %v743
      %745 = vmatmul.bf16.gmra.mxu0 %v553
      %v746 = vpop.f32.mrf.mxu0
      %v747 = vadd.f32 %v253, %v746
      %v748 = vpop.f32.mrf.mxu0
      %v749 = vadd.f32 %v253, %v748
      %750 = vdwg.mxu0
      %v751 = vmax.f32 %v572, 0.0
      %v752 = vmax.f32 %v574, 0.0
      %v753 = vmax.f32 %v577, 0.0
      %v754 = vmax.f32 %v579, 0.0
      %v755 = vmax.f32 %v582, 0.0
      %v756 = vmax.f32 %v584, 0.0
      %v757 = vmax.f32 %v587, 0.0
      %v758 = vmax.f32 %v589, 0.0
      %v759 = vmax.f32 %v592, 0.0
      %v760 = vmax.f32 %v594, 0.0
      %v761 = vmax.f32 %v597, 0.0
      %v762 = vmax.f32 %v599, 0.0
      %v763 = vmax.f32 %v602, 0.0
      %v764 = vmax.f32 %v604, 0.0
      %v765 = vmax.f32 %v607, 0.0
      %v766 = vmax.f32 %v609, 0.0
      %v767 = vmax.f32 %v612, 0.0
      %v768 = vmax.f32 %v614, 0.0
      %v769 = vmax.f32 %v617, 0.0
      %v770 = vmax.f32 %v619, 0.0
      %v771 = vmax.f32 %v622, 0.0
      %v772 = vmax.f32 %v624, 0.0
      %v773 = vmax.f32 %v627, 0.0
      %v774 = vmax.f32 %v629, 0.0
      %v775 = vmax.f32 %v632, 0.0
      %v776 = vmax.f32 %v634, 0.0
      %v777 = vmax.f32 %v637, 0.0
      %v778 = vmax.f32 %v639, 0.0
      %v779 = vmax.f32 %v642, 0.0
      %v780 = vmax.f32 %v644, 0.0
      %v781 = vmax.f32 %v647, 0.0
      %v782 = vmax.f32 %v649, 0.0
      %v783 = vmax.f32 %v652, 0.0
      %v784 = vmax.f32 %v654, 0.0
      %v785 = vmax.f32 %v657, 0.0
      %v786 = vmax.f32 %v659, 0.0
      %v787 = vmax.f32 %v662, 0.0
      %v788 = vmax.f32 %v664, 0.0
      %v789 = vmax.f32 %v667, 0.0
      %v790 = vmax.f32 %v669, 0.0
      %v791 = vmax.f32 %v672, 0.0
      %v792 = vmax.f32 %v674, 0.0
      %v793 = vmax.f32 %v677, 0.0
      %v794 = vmax.f32 %v679, 0.0
      %v795 = vmax.f32 %v682, 0.0
      %v796 = vmax.f32 %v684, 0.0
      %v797 = vmax.f32 %v687, 0.0
      %v798 = vmax.f32 %v689, 0.0
      %v799 = vmax.f32 %v692, 0.0
      %v800 = vmax.f32 %v694, 0.0
      %v801 = vmax.f32 %v697, 0.0
      %v802 = vmax.f32 %v699, 0.0
      %v803 = vmax.f32 %v702, 0.0
      %v804 = vmax.f32 %v704, 0.0
      %v805 = vmax.f32 %v707, 0.0
      %v806 = vmax.f32 %v709, 0.0
      %v807 = vmax.f32 %v712, 0.0
      %v808 = vmax.f32 %v714, 0.0
      %v809 = vmax.f32 %v717, 0.0
      %v810 = vmax.f32 %v719, 0.0
      %v811 = vmax.f32 %v722, 0.0
      %v812 = vmax.f32 %v724, 0.0
      %v813 = vmax.f32 %v727, 0.0
      %v814 = vmax.f32 %v729, 0.0
      %v815 = vmax.f32 %v732, 0.0
      %v816 = vmax.f32 %v734, 0.0
      %v817 = vmax.f32 %v737, 0.0
      %v818 = vmax.f32 %v739, 0.0
      %v819 = vmax.f32 %v742, 0.0
      %v820 = vmax.f32 %v744, 0.0
      %v821 = vmax.f32 %v747, 0.0
      %v822 = vmax.f32 %v749, 0.0
      %vm823 = vcmask 261120
      %824 = vst.msk [vmem:[%s172] sm:$0xff] %vm823, %v751
      %825 = vst.msk [vmem:[%s172 + $0x8] sm:$0xff] %vm823, %v752
      %826 = vst.msk [vmem:[%s172 + $0x10] sm:$0xff] %vm823, %v753
      %827 = vst.msk [vmem:[%s172 + $0x18] sm:$0xff] %vm823, %v754
      %828 = vst.msk [vmem:[%s172 + $0x20] sm:$0xff] %vm823, %v755
      %829 = vst.msk [vmem:[%s172 + $0x28] sm:$0xff] %vm823, %v756
      %830 = vst.msk [vmem:[%s172 + $0x30] sm:$0xff] %vm823, %v757
      %831 = vst.msk [vmem:[%s172 + $0x38] sm:$0xff] %vm823, %v758
      %832 = vst.msk [vmem:[%s172 + $0x40] sm:$0xff] %vm823, %v759
      %833 = vst.msk [vmem:[%s172 + $0x48] sm:$0xff] %vm823, %v760
      %834 = vst.msk [vmem:[%s172 + $0x50] sm:$0xff] %vm823, %v761
      %835 = vst.msk [vmem:[%s172 + $0x58] sm:$0xff] %vm823, %v762
      %836 = vst.msk [vmem:[%s172 + $0x60] sm:$0xff] %vm823, %v763
      %837 = vst.msk [vmem:[%s172 + $0x68] sm:$0xff] %vm823, %v764
      %838 = vst.msk [vmem:[%s172 + $0x70] sm:$0xff] %vm823, %v765
      %839 = vst.msk [vmem:[%s172 + $0x78] sm:$0xff] %vm823, %v766
      %840 = vst.msk [vmem:[%s172 + $0x80] sm:$0xff] %vm823, %v767
      %841 = vst.msk [vmem:[%s172 + $0x88] sm:$0xff] %vm823, %v768
      %842 = vst.msk [vmem:[%s172 + $0x90] sm:$0xff] %vm823, %v769
      %843 = vst.msk [vmem:[%s172 + $0x98] sm:$0xff] %vm823, %v770
      %844 = vst.msk [vmem:[%s172 + $0xa0] sm:$0xff] %vm823, %v771
      %845 = vst.msk [vmem:[%s172 + $0xa8] sm:$0xff] %vm823, %v772
      %846 = vst.msk [vmem:[%s172 + $0xb0] sm:$0xff] %vm823, %v773
      %847 = vst.msk [vmem:[%s172 + $0xb8] sm:$0xff] %vm823, %v774
      %848 = vst.msk [vmem:[%s172 + $0xc0] sm:$0xff] %vm823, %v775
      %849 = vst.msk [vmem:[%s172 + $0xc8] sm:$0xff] %vm823, %v776
      %850 = vst.msk [vmem:[%s172 + $0xd0] sm:$0xff] %vm823, %v777
      %851 = vst.msk [vmem:[%s172 + $0xd8] sm:$0xff] %vm823, %v778
      %852 = vst.msk [vmem:[%s172 + $0xe0] sm:$0xff] %vm823, %v779
      %853 = vst.msk [vmem:[%s172 + $0xe8] sm:$0xff] %vm823, %v780
      %854 = vst.msk [vmem:[%s172 + $0xf0] sm:$0xff] %vm823, %v781
      %855 = vst.msk [vmem:[%s172 + $0xf8] sm:$0xff] %vm823, %v782
      %856 = vst.msk [vmem:[%s172 + $0x100] sm:$0xff] %vm823, %v783
      %857 = vst.msk [vmem:[%s172 + $0x108] sm:$0xff] %vm823, %v784
      %858 = vst.msk [vmem:[%s172 + $0x110] sm:$0xff] %vm823, %v785
      %859 = vst.msk [vmem:[%s172 + $0x118] sm:$0xff] %vm823, %v786
      %860 = vst.msk [vmem:[%s172 + $0x120] sm:$0xff] %vm823, %v787
      %861 = vst.msk [vmem:[%s172 + $0x128] sm:$0xff] %vm823, %v788
      %862 = vst.msk [vmem:[%s172 + $0x130] sm:$0xff] %vm823, %v789
      %863 = vst.msk [vmem:[%s172 + $0x138] sm:$0xff] %vm823, %v790
      %864 = vst.msk [vmem:[%s172 + $0x140] sm:$0xff] %vm823, %v791
      %865 = vst.msk [vmem:[%s172 + $0x148] sm:$0xff] %vm823, %v792
      %866 = vst.msk [vmem:[%s172 + $0x150] sm:$0xff] %vm823, %v793
      %867 = vst.msk [vmem:[%s172 + $0x158] sm:$0xff] %vm823, %v794
      %868 = vst.msk [vmem:[%s172 + $0x160] sm:$0xff] %vm823, %v795
      %869 = vst.msk [vmem:[%s172 + $0x168] sm:$0xff] %vm823, %v796
      %870 = vst.msk [vmem:[%s172 + $0x170] sm:$0xff] %vm823, %v797
      %871 = vst.msk [vmem:[%s172 + $0x178] sm:$0xff] %vm823, %v798
      %872 = vst.msk [vmem:[%s172 + $0x180] sm:$0xff] %vm823, %v799
      %873 = vst.msk [vmem:[%s172 + $0x188] sm:$0xff] %vm823, %v800
      %874 = vst.msk [vmem:[%s172 + $0x190] sm:$0xff] %vm823, %v801
      %875 = vst.msk [vmem:[%s172 + $0x198] sm:$0xff] %vm823, %v802
      %876 = vst.msk [vmem:[%s172 + $0x1a0] sm:$0xff] %vm823, %v803
      %877 = vst.msk [vmem:[%s172 + $0x1a8] sm:$0xff] %vm823, %v804
      %878 = vst.msk [vmem:[%s172 + $0x1b0] sm:$0xff] %vm823, %v805
      %879 = vst.msk [vmem:[%s172 + $0x1b8] sm:$0xff] %vm823, %v806
      %880 = vst.msk [vmem:[%s172 + $0x1c0] sm:$0xff] %vm823, %v807
      %881 = vst.msk [vmem:[%s172 + $0x1c8] sm:$0xff] %vm823, %v808
      %882 = vst.msk [vmem:[%s172 + $0x1d0] sm:$0xff] %vm823, %v809
      %883 = vst.msk [vmem:[%s172 + $0x1d8] sm:$0xff] %vm823, %v810
      %884 = vst.msk [vmem:[%s172 + $0x1e0] sm:$0xff] %vm823, %v811
      %885 = vst.msk [vmem:[%s172 + $0x1e8] sm:$0xff] %vm823, %v812
      %886 = vst.msk [vmem:[%s172 + $0x1f0] sm:$0xff] %vm823, %v813
      %887 = vst.msk [vmem:[%s172 + $0x1f8] sm:$0xff] %vm823, %v814
      %888 = vst.msk [vmem:[%s172 + $0x200] sm:$0xff] %vm823, %v815
      %889 = vst.msk [vmem:[%s172 + $0x208] sm:$0xff] %vm823, %v816
      %890 = vst.msk [vmem:[%s172 + $0x210] sm:$0xff] %vm823, %v817
      %891 = vst.msk [vmem:[%s172 + $0x218] sm:$0xff] %vm823, %v818
      %892 = vst.msk [vmem:[%s172 + $0x220] sm:$0xff] %vm823, %v819
      %893 = vst.msk [vmem:[%s172 + $0x228] sm:$0xff] %vm823, %v820
      %894 = vst.msk [vmem:[%s172 + $0x230] sm:$0xff] %vm823, %v821
      %895 = vst.msk [vmem:[%s172 + $0x238] sm:$0xff] %vm823, %v822
      %s896 = smul.u32 72, %s14
      %p897 = scmp.lt.s32.totalorder %s896, 143
      %s898 = scalar_select %p897, %s896, 143
      %s899 = smul.addr %s898, 8
      %s900 = scalar_lea.vmem %s3, %s899
      // Predicated region
      $region33: #{f0spec_forward.7} parent=31 // pred_check
        %p901 = pneg %p100
      $region34: #{f0spec_forward.7} parent=31 // pred_check_branch
        %903 = sbr.rel (%p901) target = $region36
      $region35: #{f0spec_forward.7} parent=31 // pred_region
        %s904 = smul.u32 72, %s14
      $region36: #{f0spec_forward.7} parent=31 // pred_fallthru
        _
    $region32: #{f0spec_forward.7} parent=5 // pred_fallthru
      _
    %p905 = scmp.le.s32.totalorder 2, %s9
    // Predicated region
    $region37: #{f0spec_forward.7} parent=5 // pred_check
      %p906 = pneg %p905
    $region38: #{f0spec_forward.7} parent=5 // pred_check_branch
      %908 = sbr.rel (%p906) target = $region40
    $region39: #{f0spec_forward.7} parent=5 // pred_region
      %s909 = ssub.s32 %s9, 2
      // Predicated region
      $region41: #{f0spec_forward.7} parent=39 // pred_check
        %p910 = pneg %p106
      $region42: #{f0spec_forward.7} parent=39 // pred_check_branch
        %912 = sbr.rel (%p910) target = $region44
      $region43: #{f0spec_forward.7} parent=39 // pred_region
        %s913 = smul.u32 72, %s15
        %p914 = scmp.lt.s32.totalorder %s913, 143
        %s915 = scalar_select %p914, %s913, 143
        %s916 = smul.addr %s915, 8
        %s917 = scalar_lea.vmem %s3, %s916
      $region44: #{f0spec_forward.7} parent=39 // pred_fallthru
        _
    $region40: #{f0spec_forward.7} parent=5 // pred_fallthru
      _
  $region6: #{f0spec_forward.7} parent=0 // loop_footer
    %s13 = sadd.s32 1, %s9
  $region7: #{f0spec_forward.7} parent=0 // loop_footer_branch
    %8 = sbr.rel target = $region3
  $region8: #{f0spec_forward.7} parent=0 // loop_exit
    _

// kernel: f0spec_forward.8
$region0: #{f0spec_forward.8}
  #allocation0 [shape = 'u32[]', space=smem, size = 0x4, offset = 0x4, fixed_abs, tag = 'smem constant byte address 0x4 - core index']
  #allocation1 [shape = 'u32[72,128]{1,0:T(1,128)}', space=vmem, size = 0x9000, scoped, tag = 'internal scratch']
  %s0 = inlined_call_operand.vmem [shape: bf16[192,1120], index: 0, kind: input, shape index: {}]
  %s1 = inlined_call_operand.vmem [shape: bf16[1120,32], index: 1, kind: input, shape index: {}]
  %s2 = inlined_call_operand.vmem [shape: f32[1,32], index: 2, kind: input, shape index: {}]
  %s3 = inlined_call_operand.vmem [shape: f32[192,32], index: 3, kind: output, shape index: {}]
  %s4 = sld [smem:[#allocation0]]
  $region22: #{f0spec_forward.8} parent=0
    _
  %s6 = ssub.s32 1, %s4
  %s7 = scalar_select 0, %s6, %s4
  // Predicated region
  $region2: #{f0spec_forward.8} parent=0 // pred_check
    _
  $region3: #{f0spec_forward.8} parent=0 // pred_check_branch
    %9 = sbr.rel (0) target = $region5
  $region4: #{f0spec_forward.8} parent=0 // pred_region
    _
  $region5: #{f0spec_forward.8} parent=0 // pred_fallthru
    _
  // Predicated region
  $region6: #{f0spec_forward.8} parent=0 // pred_check
    _
  $region7: #{f0spec_forward.8} parent=0 // pred_check_branch
    %11 = sbr.rel (0) target = $region9
  $region8: #{f0spec_forward.8} parent=0 // pred_region
    _
  $region9: #{f0spec_forward.8} parent=0 // pred_fallthru
    _
  // Predicated region
  $region10: #{f0spec_forward.8} parent=0 // pred_check
    _
  $region11: #{f0spec_forward.8} parent=0 // pred_check_branch
    %13 = sbr.rel (0) target = $region13
  $region12: #{f0spec_forward.8} parent=0 // pred_region
    _
  $region13: #{f0spec_forward.8} parent=0 // pred_fallthru
    _
  %v15 = vld [vmem:[%s0] sm:$0xff]
  %v16 = vld [vmem:[%s0 + $0x8] sm:$0xff]
  %v17 = vld [vmem:[%s0 + $0x10] sm:$0xff]
  %v18 = vld [vmem:[%s0 + $0x18] sm:$0xff]
  %v19 = vld [vmem:[%s0 + $0x20] sm:$0xf]
  %v20 = vld [vmem:[%s0 + $0x24] sm:$0xff]
  %v21 = vld [vmem:[%s0 + $0x2c] sm:$0xff]
  %v22 = vld [vmem:[%s0 + $0x34] sm:$0xff]
  %v23 = vld [vmem:[%s0 + $0x3c] sm:$0xff]
  %v24 = vld [vmem:[%s0 + $0x44] sm:$0xf]
  %v25 = vld [vmem:[%s0 + $0x48] sm:$0xff]
  %v26 = vld [vmem:[%s0 + $0x50] sm:$0xff]
  %v27 = vld [vmem:[%s0 + $0x58] sm:$0xff]
  %v28 = vld [vmem:[%s0 + $0x60] sm:$0xff]
  %v29 = vld [vmem:[%s0 + $0x68] sm:$0xf]
  %v30 = vld [vmem:[%s0 + $0x6c] sm:$0xff]
  %v31 = vld [vmem:[%s0 + $0x74] sm:$0xff]
  %v32 = vld [vmem:[%s0 + $0x7c] sm:$0xff]
  %v33 = vld [vmem:[%s0 + $0x84] sm:$0xff]
  %v34 = vld [vmem:[%s0 + $0x8c] sm:$0xf]
  %v35 = vld [vmem:[%s0 + $0x90] sm:$0xff]
  %v36 = vld [vmem:[%s0 + $0x98] sm:$0xff]
  %v37 = vld [vmem:[%s0 + $0xa0] sm:$0xff]
  %v38 = vld [vmem:[%s0 + $0xa8] sm:$0xff]
  %v39 = vld [vmem:[%s0 + $0xb0] sm:$0xf]
  %v40 = vld [vmem:[%s0 + $0xb4] sm:$0xff]
  %v41 = vld [vmem:[%s0 + $0xbc] sm:$0xff]
  %v42 = vld [vmem:[%s0 + $0xc4] sm:$0xff]
  %v43 = vld [vmem:[%s0 + $0xcc] sm:$0xff]
  %v44 = vld [vmem:[%s0 + $0xd4] sm:$0xf]
  %v45 = vld [vmem:[%s0 + $0xd8] sm:$0xff]
  %v46 = vld [vmem:[%s0 + $0xe0] sm:$0xff]
  %v47 = vld [vmem:[%s0 + $0xe8] sm:$0xff]
  %v48 = vld [vmem:[%s0 + $0xf0] sm:$0xff]
  %v49 = vld [vmem:[%s0 + $0xf8] sm:$0xf]
  %v50 = vld [vmem:[%s0 + $0xfc] sm:$0xff]
  %v51 = vld [vmem:[%s0 + $0x104] sm:$0xff]
  %v52 = vld [vmem:[%s0 + $0x10c] sm:$0xff]
  %v53 = vld [vmem:[%s0 + $0x114] sm:$0xff]
  %v54 = vld [vmem:[%s0 + $0x11c] sm:$0xf]
  %v55 = vld [vmem:[%s0 + $0x120] sm:$0xff]
  %v56 = vld [vmem:[%s0 + $0x128] sm:$0xff]
  %v57 = vld [vmem:[%s0 + $0x130] sm:$0xff]
  %v58 = vld [vmem:[%s0 + $0x138] sm:$0xff]
  %v59 = vld [vmem:[%s0 + $0x140] sm:$0xf]
  %v60 = vld [vmem:[%s0 + $0x144] sm:$0xff]
  %v61 = vld [vmem:[%s0 + $0x14c] sm:$0xff]
  %v62 = vld [vmem:[%s0 + $0x154] sm:$0xff]
  %v63 = vld [vmem:[%s0 + $0x15c] sm:$0xff]
  %v64 = vld [vmem:[%s0 + $0x164] sm:$0xf]
  %v65 = vld [vmem:[%s0 + $0x168] sm:$0xff]
  %v66 = vld [vmem:[%s0 + $0x170] sm:$0xff]
  %v67 = vld [vmem:[%s0 + $0x178] sm:$0xff]
  %v68 = vld [vmem:[%s0 + $0x180] sm:$0xff]
  %v69 = vld [vmem:[%s0 + $0x188] sm:$0xf]
  %v70 = vld [vmem:[%s0 + $0x18c] sm:$0xff]
  %v71 = vld [vmem:[%s0 + $0x194] sm:$0xff]
  %v72 = vld [vmem:[%s0 + $0x19c] sm:$0xff]
  %v73 = vld [vmem:[%s0 + $0x1a4] sm:$0xff]
  %v74 = vld [vmem:[%s0 + $0x1ac] sm:$0xf]
  %v75 = vld [vmem:[%s0 + $0x1b0] sm:$0xff]
  %v76 = vld [vmem:[%s0 + $0x1b8] sm:$0xff]
  %v77 = vld [vmem:[%s0 + $0x1c0] sm:$0xff]
  %v78 = vld [vmem:[%s0 + $0x1c8] sm:$0xff]
  %v79 = vld [vmem:[%s0 + $0x1d0] sm:$0xf]
  %v80 = vld [vmem:[%s0 + $0x1d4] sm:$0xff]
  %v81 = vld [vmem:[%s0 + $0x1dc] sm:$0xff]
  %v82 = vld [vmem:[%s0 + $0x1e4] sm:$0xff]
  %v83 = vld [vmem:[%s0 + $0x1ec] sm:$0xff]
  %v84 = vld [vmem:[%s0 + $0x1f4] sm:$0xf]
  %v85 = vld [vmem:[%s0 + $0x1f8] sm:$0xff]
  %v86 = vld [vmem:[%s0 + $0x200] sm:$0xff]
  %v87 = vld [vmem:[%s0 + $0x208] sm:$0xff]
  %v88 = vld [vmem:[%s0 + $0x210] sm:$0xff]
  %v89 = vld [vmem:[%s0 + $0x218] sm:$0xf]
  %v90 = vld [vmem:[%s0 + $0x21c] sm:$0xff]
  %v91 = vld [vmem:[%s0 + $0x224] sm:$0xff]
  %v92 = vld [vmem:[%s0 + $0x22c] sm:$0xff]
  %v93 = vld [vmem:[%s0 + $0x234] sm:$0xff]
  %v94 = vld [vmem:[%s0 + $0x23c] sm:$0xf]
  %v95 = vld [vmem:[%s0 + $0x240] sm:$0xff]
  %v96 = vld [vmem:[%s0 + $0x248] sm:$0xff]
  %v97 = vld [vmem:[%s0 + $0x250] sm:$0xff]
  %v98 = vld [vmem:[%s0 + $0x258] sm:$0xff]
  %v99 = vld [vmem:[%s0 + $0x260] sm:$0xf]
  %v100 = vld [vmem:[%s0 + $0x264] sm:$0xff]
  %v101 = vld [vmem:[%s0 + $0x26c] sm:$0xff]
  %v102 = vld [vmem:[%s0 + $0x274] sm:$0xff]
  %v103 = vld [vmem:[%s0 + $0x27c] sm:$0xff]
  %v104 = vld [vmem:[%s0 + $0x284] sm:$0xf]
  %v105 = vld [vmem:[%s0 + $0x288] sm:$0xff]
  %v106 = vld [vmem:[%s0 + $0x290] sm:$0xff]
  %v107 = vld [vmem:[%s0 + $0x298] sm:$0xff]
  %v108 = vld [vmem:[%s0 + $0x2a0] sm:$0xff]
  %v109 = vld [vmem:[%s0 + $0x2a8] sm:$0xf]
  %v110 = vld [vmem:[%s0 + $0x2ac] sm:$0xff]
  %v111 = vld [vmem:[%s0 + $0x2b4] sm:$0xff]
  %v112 = vld [vmem:[%s0 + $0x2bc] sm:$0xff]
  %v113 = vld [vmem:[%s0 + $0x2c4] sm:$0xff]
  %v114 = vld [vmem:[%s0 + $0x2cc] sm:$0xf]
  %v115 = vld [vmem:[%s0 + $0x2d0] sm:$0xff]
  %v116 = vld [vmem:[%s0 + $0x2d8] sm:$0xff]
  %v117 = vld [vmem:[%s0 + $0x2e0] sm:$0xff]
  %v118 = vld [vmem:[%s0 + $0x2e8] sm:$0xff]
  %v119 = vld [vmem:[%s0 + $0x2f0] sm:$0xf]
  %v120 = vld [vmem:[%s0 + $0x2f4] sm:$0xff]
  %v121 = vld [vmem:[%s0 + $0x2fc] sm:$0xff]
  %v122 = vld [vmem:[%s0 + $0x304] sm:$0xff]
  %v123 = vld [vmem:[%s0 + $0x30c] sm:$0xff]
  %v124 = vld [vmem:[%s0 + $0x314] sm:$0xf]
  %v125 = vld [vmem:[%s0 + $0x318] sm:$0xff]
  %v126 = vld [vmem:[%s0 + $0x320] sm:$0xff]
  %v127 = vld [vmem:[%s0 + $0x328] sm:$0xff]
  %v128 = vld [vmem:[%s0 + $0x330] sm:$0xff]
  %v129 = vld [vmem:[%s0 + $0x338] sm:$0xf]
  %v130 = vld [vmem:[%s0 + $0x33c] sm:$0xff]
  %v131 = vld [vmem:[%s0 + $0x344] sm:$0xff]
  %v132 = vld [vmem:[%s0 + $0x34c] sm:$0xff]
  %v133 = vld [vmem:[%s0 + $0x354] sm:$0xff]
  %v134 = vld [vmem:[%s0 + $0x35c] sm:$0xf]
  %v135 = vld [vmem:[%s1] sm:$0xf]
  %v136 = vld [vmem:[%s1 + $0x4] sm:$0xf]
  %v137 = vld [vmem:[%s1 + $0x8] sm:$0xf]
  %v138 = vld [vmem:[%s1 + $0xc] sm:$0xf]
  %v139 = vld [vmem:[%s1 + $0x10] sm:$0xf]
  %v140 = vld [vmem:[%s1 + $0x14] sm:$0xf]
  %v141 = vld [vmem:[%s1 + $0x18] sm:$0xf]
  %v142 = vld [vmem:[%s1 + $0x1c] sm:$0xf]
  %v143 = vld [vmem:[%s1 + $0x20] sm:$0xf]
  %v144 = vld [vmem:[%s1 + $0x24] sm:$0xf]
  %v145 = vld [vmem:[%s1 + $0x28] sm:$0xf]
  %v146 = vld [vmem:[%s1 + $0x2c] sm:$0xf]
  %v147 = vld [vmem:[%s1 + $0x30] sm:$0xf]
  %v148 = vld [vmem:[%s1 + $0x34] sm:$0xf]
  %v149 = vld [vmem:[%s1 + $0x38] sm:$0xf]
  %v150 = vld [vmem:[%s1 + $0x3c] sm:$0xf]
  %v151 = vld [vmem:[%s1 + $0x40] sm:$0xf]
  %v152 = vld [vmem:[%s1 + $0x44] sm:$0xf]
  %v153 = vld [vmem:[%s1 + $0x48] sm:$0xf]
  %v154 = vld [vmem:[%s1 + $0x4c] sm:$0xf]
  %v155 = vld [vmem:[%s1 + $0x50] sm:$0xf]
  %v156 = vld [vmem:[%s1 + $0x54] sm:$0xf]
  %v157 = vld [vmem:[%s1 + $0x58] sm:$0xf]
  %v158 = vld [vmem:[%s1 + $0x5c] sm:$0xf]
  %v159 = vld [vmem:[%s1 + $0x60] sm:$0xf]
  %v160 = vld [vmem:[%s1 + $0x64] sm:$0xf]
  %v161 = vld [vmem:[%s1 + $0x68] sm:$0xf]
  %v162 = vld [vmem:[%s1 + $0x6c] sm:$0xf]
  %v163 = vld [vmem:[%s1 + $0x70] sm:$0xf]
  %v164 = vld [vmem:[%s1 + $0x74] sm:$0xf]
  %v165 = vld [vmem:[%s1 + $0x78] sm:$0xf]
  %v166 = vld [vmem:[%s1 + $0x7c] sm:$0xf]
  %v167 = vld [vmem:[%s1 + $0x80] sm:$0xf]
  %v168 = vld [vmem:[%s1 + $0x84] sm:$0xf]
  %v169 = vld [vmem:[%s1 + $0x88] sm:$0xf]
  %v170 = vld [vmem:[%s1 + $0x8c] sm:$0xf]
  %v171 = vld [vmem:[%s1 + $0x90] sm:$0xf]
  %v172 = vld [vmem:[%s1 + $0x94] sm:$0xf]
  %v173 = vld [vmem:[%s1 + $0x98] sm:$0xf]
  %v174 = vld [vmem:[%s1 + $0x9c] sm:$0xf]
  %v175 = vld [vmem:[%s1 + $0xa0] sm:$0xf]
  %v176 = vld [vmem:[%s1 + $0xa4] sm:$0xf]
  %v177 = vld [vmem:[%s1 + $0xa8] sm:$0xf]
  %v178 = vld [vmem:[%s1 + $0xac] sm:$0xf]
  %v179 = vld [vmem:[%s1 + $0xb0] sm:$0xf]
  %v180 = vld [vmem:[%s1 + $0xb4] sm:$0xf]
  %v181 = vld [vmem:[%s1 + $0xb8] sm:$0xf]
  %v182 = vld [vmem:[%s1 + $0xbc] sm:$0xf]
  %v183 = vld [vmem:[%s1 + $0xc0] sm:$0xf]
  %v184 = vld [vmem:[%s1 + $0xc4] sm:$0xf]
  %v185 = vld [vmem:[%s1 + $0xc8] sm:$0xf]
  %v186 = vld [vmem:[%s1 + $0xcc] sm:$0xf]
  %v187 = vld [vmem:[%s1 + $0xd0] sm:$0xf]
  %v188 = vld [vmem:[%s1 + $0xd4] sm:$0xf]
  %v189 = vld [vmem:[%s1 + $0xd8] sm:$0xf]
  %v190 = vld [vmem:[%s1 + $0xdc] sm:$0xf]
  %v191 = vld [vmem:[%s1 + $0xe0] sm:$0xf]
  %v192 = vld [vmem:[%s1 + $0xe4] sm:$0xf]
  %v193 = vld [vmem:[%s1 + $0xe8] sm:$0xf]
  %v194 = vld [vmem:[%s1 + $0xec] sm:$0xf]
  %v195 = vld [vmem:[%s1 + $0xf0] sm:$0xf]
  %v196 = vld [vmem:[%s1 + $0xf4] sm:$0xf]
  %v197 = vld [vmem:[%s1 + $0xf8] sm:$0xf]
  %v198 = vld [vmem:[%s1 + $0xfc] sm:$0xf]
  %v199 = vld [vmem:[%s1 + $0x100] sm:$0xf]
  %v200 = vld [vmem:[%s1 + $0x104] sm:$0xf]
  %v201 = vld [vmem:[%s1 + $0x108] sm:$0xf]
  %v202 = vld [vmem:[%s1 + $0x10c] sm:$0xf]
  %v203 = vld [vmem:[%s1 + $0x110] sm:$0xf]
  %v204 = vld [vmem:[%s1 + $0x114] sm:$0xf]
  %v205 = vld [vmem:[%s1 + $0x118] sm:$0xf]
  %v206 = vld [vmem:[%s1 + $0x11c] sm:$0xf]
  %v207 = vld [vmem:[%s1 + $0x120] sm:$0xf]
  %v208 = vld [vmem:[%s1 + $0x124] sm:$0xf]
  %v209 = vld [vmem:[%s1 + $0x128] sm:$0xf]
  %v210 = vld [vmem:[%s1 + $0x12c] sm:$0xf]
  %v211 = vld [vmem:[%s1 + $0x130] sm:$0xf]
  %v212 = vld [vmem:[%s1 + $0x134] sm:$0xf]
  %v213 = vld [vmem:[%s1 + $0x138] sm:$0xf]
  %v214 = vld [vmem:[%s1 + $0x13c] sm:$0xf]
  %v215 = vld [vmem:[%s1 + $0x140] sm:$0xf]
  %v216 = vld [vmem:[%s1 + $0x144] sm:$0xf]
  %v217 = vld [vmem:[%s1 + $0x148] sm:$0xf]
  %v218 = vld [vmem:[%s1 + $0x14c] sm:$0xf]
  %v219 = vld [vmem:[%s1 + $0x150] sm:$0xf]
  %v220 = vld [vmem:[%s1 + $0x154] sm:$0xf]
  %v221 = vld [vmem:[%s1 + $0x158] sm:$0xf]
  %v222 = vld [vmem:[%s1 + $0x15c] sm:$0xf]
  %v223 = vld [vmem:[%s1 + $0x160] sm:$0xf]
  %v224 = vld [vmem:[%s1 + $0x164] sm:$0xf]
  %v225 = vld [vmem:[%s1 + $0x168] sm:$0xf]
  %v226 = vld [vmem:[%s1 + $0x16c] sm:$0xf]
  %v227 = vld [vmem:[%s1 + $0x170] sm:$0xf]
  %v228 = vld [vmem:[%s1 + $0x174] sm:$0xf]
  %v229 = vld [vmem:[%s1 + $0x178] sm:$0xf]
  %v230 = vld [vmem:[%s1 + $0x17c] sm:$0xf]
  %v231 = vld [vmem:[%s1 + $0x180] sm:$0xf]
  %v232 = vld [vmem:[%s1 + $0x184] sm:$0xf]
  %v233 = vld [vmem:[%s1 + $0x188] sm:$0xf]
  %v234 = vld [vmem:[%s1 + $0x18c] sm:$0xf]
  %v235 = vld [vmem:[%s1 + $0x190] sm:$0xf]
  %v236 = vld [vmem:[%s1 + $0x194] sm:$0xf]
  %v237 = vld [vmem:[%s1 + $0x198] sm:$0xf]
  %v238 = vld [vmem:[%s1 + $0x19c] sm:$0xf]
  %v239 = vld [vmem:[%s1 + $0x1a0] sm:$0xf]
  %v240 = vld [vmem:[%s1 + $0x1a4] sm:$0xf]
  %v241 = vld [vmem:[%s1 + $0x1a8] sm:$0xf]
  %v242 = vld [vmem:[%s1 + $0x1ac] sm:$0xf]
  %v243 = vld [vmem:[%s1 + $0x1b0] sm:$0xf]
  %v244 = vld [vmem:[%s1 + $0x1b4] sm:$0xf]
  %v245 = vld [vmem:[%s1 + $0x1b8] sm:$0xf]
  %v246 = vld [vmem:[%s1 + $0x1bc] sm:$0xf]
  %v247 = vld [vmem:[%s1 + $0x1c0] sm:$0xf]
  %v248 = vld [vmem:[%s1 + $0x1c4] sm:$0xf]
  %v249 = vld [vmem:[%s1 + $0x1c8] sm:$0xf]
  %v250 = vld [vmem:[%s1 + $0x1cc] sm:$0xf]
  %v251 = vld [vmem:[%s1 + $0x1d0] sm:$0xf]
  %v252 = vld [vmem:[%s1 + $0x1d4] sm:$0xf]
  %v253 = vld [vmem:[%s1 + $0x1d8] sm:$0xf]
  %v254 = vld [vmem:[%s1 + $0x1dc] sm:$0xf]
  %v255 = vld [vmem:[%s1 + $0x1e0] sm:$0xf]
  %v256 = vld [vmem:[%s1 + $0x1e4] sm:$0xf]
  %v257 = vld [vmem:[%s1 + $0x1e8] sm:$0xf]
  %v258 = vld [vmem:[%s1 + $0x1ec] sm:$0xf]
  %v259 = vld [vmem:[%s1 + $0x1f0] sm:$0xf]
  %v260 = vld [vmem:[%s1 + $0x1f4] sm:$0xf]
  %v261 = vld [vmem:[%s1 + $0x1f8] sm:$0xf]
  %v262 = vld [vmem:[%s1 + $0x1fc] sm:$0xf]
  %v263 = vld [vmem:[%s1 + $0x200] sm:$0xf]
  %v264 = vld [vmem:[%s1 + $0x204] sm:$0xf]
  %v265 = vld [vmem:[%s1 + $0x208] sm:$0xf]
  %v266 = vld [vmem:[%s1 + $0x20c] sm:$0xf]
  %v267 = vld [vmem:[%s1 + $0x210] sm:$0xf]
  %v268 = vld [vmem:[%s1 + $0x214] sm:$0xf]
  %v269 = vld [vmem:[%s1 + $0x218] sm:$0xf]
  %v270 = vld [vmem:[%s1 + $0x21c] sm:$0xf]
  %v271 = vld [vmem:[%s1 + $0x220] sm:$0xf]
  %v272 = vld [vmem:[%s1 + $0x224] sm:$0xf]
  %v273 = vld [vmem:[%s1 + $0x228] sm:$0xf]
  %v274 = vld [vmem:[%s1 + $0x22c] sm:$0xf]
  %v275 = vld [vmem:[%s2] sm:$0x1]
  %v277 = vperm.slane %v275, 0
  %v399 = vunpack.c.l.b16 %v15
  %v400 = vunpack.c.h.b16 %v15
  %v401 = vunpack.c.l.b16 %v16
  %v402 = vunpack.c.h.b16 %v16
  %v403 = vunpack.c.l.b16 %v17
  %v404 = vunpack.c.h.b16 %v17
  %v405 = vunpack.c.l.b16 %v18
  %v406 = vunpack.c.h.b16 %v18
  %v407 = vunpack.c.l.b16 %v19
  %v408 = vunpack.c.l.b16 %v20
  %v409 = vunpack.c.h.b16 %v20
  %v410 = vunpack.c.l.b16 %v21
  %v411 = vunpack.c.h.b16 %v21
  %v412 = vunpack.c.l.b16 %v22
  %v413 = vunpack.c.h.b16 %v22
  %v414 = vunpack.c.l.b16 %v23
  %v415 = vunpack.c.h.b16 %v23
  %v416 = vunpack.c.l.b16 %v24
  %v417 = vunpack.c.l.b16 %v25
  %v418 = vunpack.c.h.b16 %v25
  %v419 = vunpack.c.l.b16 %v26
  %v420 = vunpack.c.h.b16 %v26
  %v421 = vunpack.c.l.b16 %v27
  %v422 = vunpack.c.h.b16 %v27
  %v423 = vunpack.c.l.b16 %v28
  %v424 = vunpack.c.h.b16 %v28
  %v425 = vunpack.c.l.b16 %v29
  %v426 = vunpack.c.l.b16 %v30
  %v427 = vunpack.c.h.b16 %v30
  %v428 = vunpack.c.l.b16 %v31
  %v429 = vunpack.c.h.b16 %v31
  %v430 = vunpack.c.l.b16 %v32
  %v431 = vunpack.c.h.b16 %v32
  %v432 = vunpack.c.l.b16 %v33
  %v433 = vunpack.c.h.b16 %v33
  %v434 = vunpack.c.l.b16 %v34
  %v435 = vunpack.c.l.b16 %v35
  %v436 = vunpack.c.h.b16 %v35
  %v437 = vunpack.c.l.b16 %v36
  %v438 = vunpack.c.h.b16 %v36
  %v439 = vunpack.c.l.b16 %v37
  %v440 = vunpack.c.h.b16 %v37
  %v441 = vunpack.c.l.b16 %v38
  %v442 = vunpack.c.h.b16 %v38
  %v443 = vunpack.c.l.b16 %v39
  %v444 = vunpack.c.l.b16 %v40
  %v445 = vunpack.c.h.b16 %v40
  %v446 = vunpack.c.l.b16 %v41
  %v447 = vunpack.c.h.b16 %v41
  %v448 = vunpack.c.l.b16 %v42
  %v449 = vunpack.c.h.b16 %v42
  %v450 = vunpack.c.l.b16 %v43
  %v451 = vunpack.c.h.b16 %v43
  %v452 = vunpack.c.l.b16 %v44
  %v453 = vunpack.c.l.b16 %v45
  %v454 = vunpack.c.h.b16 %v45
  %v455 = vunpack.c.l.b16 %v46
  %v456 = vunpack.c.h.b16 %v46
  %v457 = vunpack.c.l.b16 %v47
  %v458 = vunpack.c.h.b16 %v47
  %v459 = vunpack.c.l.b16 %v48
  %v460 = vunpack.c.h.b16 %v48
  %v461 = vunpack.c.l.b16 %v49
  %v462 = vunpack.c.l.b16 %v50
  %v463 = vunpack.c.h.b16 %v50
  %v464 = vunpack.c.l.b16 %v51
  %v465 = vunpack.c.h.b16 %v51
  %v466 = vunpack.c.l.b16 %v52
  %v467 = vunpack.c.h.b16 %v52
  %v468 = vunpack.c.l.b16 %v53
  %v469 = vunpack.c.h.b16 %v53
  %v470 = vunpack.c.l.b16 %v54
  %v471 = vunpack.c.l.b16 %v55
  %v472 = vunpack.c.h.b16 %v55
  %v473 = vunpack.c.l.b16 %v56
  %v474 = vunpack.c.h.b16 %v56
  %v475 = vunpack.c.l.b16 %v57
  %v476 = vunpack.c.h.b16 %v57
  %v477 = vunpack.c.l.b16 %v58
  %v478 = vunpack.c.h.b16 %v58
  %v479 = vunpack.c.l.b16 %v59
  %v480 = vunpack.c.l.b16 %v60
  %v481 = vunpack.c.h.b16 %v60
  %v482 = vunpack.c.l.b16 %v61
  %v483 = vunpack.c.h.b16 %v61
  %v484 = vunpack.c.l.b16 %v62
  %v485 = vunpack.c.h.b16 %v62
  %v486 = vunpack.c.l.b16 %v63
  %v487 = vunpack.c.h.b16 %v63
  %v488 = vunpack.c.l.b16 %v64
  %v489 = vunpack.c.l.b16 %v65
  %v490 = vunpack.c.h.b16 %v65
  %v491 = vunpack.c.l.b16 %v66
  %v492 = vunpack.c.h.b16 %v66
  %v493 = vunpack.c.l.b16 %v67
  %v494 = vunpack.c.h.b16 %v67
  %v495 = vunpack.c.l.b16 %v68
  %v496 = vunpack.c.h.b16 %v68
  %v497 = vunpack.c.l.b16 %v69
  %v498 = vunpack.c.l.b16 %v70
  %v499 = vunpack.c.h.b16 %v70
  %v500 = vunpack.c.l.b16 %v71
  %v501 = vunpack.c.h.b16 %v71
  %v502 = vunpack.c.l.b16 %v72
  %v503 = vunpack.c.h.b16 %v72
  %v504 = vunpack.c.l.b16 %v73
  %v505 = vunpack.c.h.b16 %v73
  %v506 = vunpack.c.l.b16 %v74
  %v507 = vunpack.c.l.b16 %v75
  %v508 = vunpack.c.h.b16 %v75
  %v509 = vunpack.c.l.b16 %v76
  %v510 = vunpack.c.h.b16 %v76
  %v511 = vunpack.c.l.b16 %v77
  %v512 = vunpack.c.h.b16 %v77
  %v513 = vunpack.c.l.b16 %v78
  %v514 = vunpack.c.h.b16 %v78
  %v515 = vunpack.c.l.b16 %v79
  %v516 = vunpack.c.l.b16 %v80
  %v517 = vunpack.c.h.b16 %v80
  %v518 = vunpack.c.l.b16 %v81
  %v519 = vunpack.c.h.b16 %v81
  %v520 = vunpack.c.l.b16 %v82
  %v521 = vunpack.c.h.b16 %v82
  %v522 = vunpack.c.l.b16 %v83
  %v523 = vunpack.c.h.b16 %v83
  %v524 = vunpack.c.l.b16 %v84
  %v525 = vunpack.c.l.b16 %v85
  %v526 = vunpack.c.h.b16 %v85
  %v527 = vunpack.c.l.b16 %v86
  %v528 = vunpack.c.h.b16 %v86
  %v529 = vunpack.c.l.b16 %v87
  %v530 = vunpack.c.h.b16 %v87
  %v531 = vunpack.c.l.b16 %v88
  %v532 = vunpack.c.h.b16 %v88
  %v533 = vunpack.c.l.b16 %v89
  %v534 = vunpack.c.l.b16 %v90
  %v535 = vunpack.c.h.b16 %v90
  %v536 = vunpack.c.l.b16 %v91
  %v537 = vunpack.c.h.b16 %v91
  %v538 = vunpack.c.l.b16 %v92
  %v539 = vunpack.c.h.b16 %v92
  %v540 = vunpack.c.l.b16 %v93
  %v541 = vunpack.c.h.b16 %v93
  %v542 = vunpack.c.l.b16 %v94
  %v543 = vunpack.c.l.b16 %v95
  %v544 = vunpack.c.h.b16 %v95
  %v545 = vunpack.c.l.b16 %v96
  %v546 = vunpack.c.h.b16 %v96
  %v547 = vunpack.c.l.b16 %v97
  %v548 = vunpack.c.h.b16 %v97
  %v549 = vunpack.c.l.b16 %v98
  %v550 = vunpack.c.h.b16 %v98
  %v551 = vunpack.c.l.b16 %v99
  %v552 = vunpack.c.l.b16 %v100
  %v553 = vunpack.c.h.b16 %v100
  %v554 = vunpack.c.l.b16 %v101
  %v555 = vunpack.c.h.b16 %v101
  %v556 = vunpack.c.l.b16 %v102
  %v557 = vunpack.c.h.b16 %v102
  %v558 = vunpack.c.l.b16 %v103
  %v559 = vunpack.c.h.b16 %v103
  %v560 = vunpack.c.l.b16 %v104
  %v561 = vunpack.c.l.b16 %v105
  %v562 = vunpack.c.h.b16 %v105
  %v563 = vunpack.c.l.b16 %v106
  %v564 = vunpack.c.h.b16 %v106
  %v565 = vunpack.c.l.b16 %v107
  %v566 = vunpack.c.h.b16 %v107
  %v567 = vunpack.c.l.b16 %v108
  %v568 = vunpack.c.h.b16 %v108
  %v569 = vunpack.c.l.b16 %v109
  %v570 = vunpack.c.l.b16 %v110
  %v571 = vunpack.c.h.b16 %v110
  %v572 = vunpack.c.l.b16 %v111
  %v573 = vunpack.c.h.b16 %v111
  %v574 = vunpack.c.l.b16 %v112
  %v575 = vunpack.c.h.b16 %v112
  %v576 = vunpack.c.l.b16 %v113
  %v577 = vunpack.c.h.b16 %v113
  %v578 = vunpack.c.l.b16 %v114
  %v579 = vunpack.c.l.b16 %v115
  %v580 = vunpack.c.h.b16 %v115
  %v581 = vunpack.c.l.b16 %v116
  %v582 = vunpack.c.h.b16 %v116
  %v583 = vunpack.c.l.b16 %v117
  %v584 = vunpack.c.h.b16 %v117
  %v585 = vunpack.c.l.b16 %v118
  %v586 = vunpack.c.h.b16 %v118
  %v587 = vunpack.c.l.b16 %v119
  %v588 = vunpack.c.l.b16 %v120
  %v589 = vunpack.c.h.b16 %v120
  %v590 = vunpack.c.l.b16 %v121
  %v591 = vunpack.c.h.b16 %v121
  %v592 = vunpack.c.l.b16 %v122
  %v593 = vunpack.c.h.b16 %v122
  %v594 = vunpack.c.l.b16 %v123
  %v595 = vunpack.c.h.b16 %v123
  %v596 = vunpack.c.l.b16 %v124
  %v597 = vunpack.c.l.b16 %v125
  %v598 = vunpack.c.h.b16 %v125
  %v599 = vunpack.c.l.b16 %v126
  %v600 = vunpack.c.h.b16 %v126
  %v601 = vunpack.c.l.b16 %v127
  %v602 = vunpack.c.h.b16 %v127
  %v603 = vunpack.c.l.b16 %v128
  %v604 = vunpack.c.h.b16 %v128
  %v605 = vunpack.c.l.b16 %v129
  %v606 = vunpack.c.l.b16 %v130
  %v607 = vunpack.c.h.b16 %v130
  %v608 = vunpack.c.l.b16 %v131
  %v609 = vunpack.c.h.b16 %v131
  %v610 = vunpack.c.l.b16 %v132
  %v611 = vunpack.c.h.b16 %v132
  %v612 = vunpack.c.l.b16 %v133
  %v613 = vunpack.c.h.b16 %v133
  %v614 = vunpack.c.l.b16 %v134
  %v615 = vpack.c.b16 %v408, %v399
  %v616 = vpack.c.b16 %v409, %v400
  %v617 = vpack.c.b16 %v410, %v401
  %v618 = vpack.c.b16 %v411, %v402
  %v619 = vpack.c.b16 %v412, %v403
  %v620 = vpack.c.b16 %v413, %v404
  %v621 = vpack.c.b16 %v414, %v405
  %v622 = vpack.c.b16 %v415, %v406
  %v623 = vpack.c.b16 %v416, %v407
  %v624 = vpack.c.b16 %v426, %v417
  %v625 = vpack.c.b16 %v427, %v418
  %v626 = vpack.c.b16 %v428, %v419
  %v627 = vpack.c.b16 %v429, %v420
  %v628 = vpack.c.b16 %v430, %v421
  %v629 = vpack.c.b16 %v431, %v422
  %v630 = vpack.c.b16 %v432, %v423
  %v631 = vpack.c.b16 %v433, %v424
  %v632 = vpack.c.b16 %v434, %v425
  %v633 = vpack.c.b16 %v444, %v435
  %v634 = vpack.c.b16 %v445, %v436
  %v635 = vpack.c.b16 %v446, %v437
  %v636 = vpack.c.b16 %v447, %v438
  %v637 = vpack.c.b16 %v448, %v439
  %v638 = vpack.c.b16 %v449, %v440
  %v639 = vpack.c.b16 %v450, %v441
  %v640 = vpack.c.b16 %v451, %v442
  %v641 = vpack.c.b16 %v452, %v443
  %v642 = vpack.c.b16 %v462, %v453
  %v643 = vpack.c.b16 %v463, %v454
  %v644 = vpack.c.b16 %v464, %v455
  %v645 = vpack.c.b16 %v465, %v456
  %v646 = vpack.c.b16 %v466, %v457
  %v647 = vpack.c.b16 %v467, %v458
  %v648 = vpack.c.b16 %v468, %v459
  %v649 = vpack.c.b16 %v469, %v460
  %v650 = vpack.c.b16 %v470, %v461
  %v651 = vpack.c.b16 %v480, %v471
  %v652 = vpack.c.b16 %v481, %v472
  %v653 = vpack.c.b16 %v482, %v473
  %v654 = vpack.c.b16 %v483, %v474
  %v655 = vpack.c.b16 %v484, %v475
  %v656 = vpack.c.b16 %v485, %v476
  %v657 = vpack.c.b16 %v486, %v477
  %v658 = vpack.c.b16 %v487, %v478
  %v659 = vpack.c.b16 %v488, %v479
  %v660 = vpack.c.b16 %v498, %v489
  %v661 = vpack.c.b16 %v499, %v490
  %v662 = vpack.c.b16 %v500, %v491
  %v663 = vpack.c.b16 %v501, %v492
  %v664 = vpack.c.b16 %v502, %v493
  %v665 = vpack.c.b16 %v503, %v494
  %v666 = vpack.c.b16 %v504, %v495
  %v667 = vpack.c.b16 %v505, %v496
  %v668 = vpack.c.b16 %v506, %v497
  %v669 = vpack.c.b16 %v516, %v507
  %v670 = vpack.c.b16 %v517, %v508
  %v671 = vpack.c.b16 %v518, %v509
  %v672 = vpack.c.b16 %v519, %v510
  %v673 = vpack.c.b16 %v520, %v511
  %v674 = vpack.c.b16 %v521, %v512
  %v675 = vpack.c.b16 %v522, %v513
  %v676 = vpack.c.b16 %v523, %v514
  %v677 = vpack.c.b16 %v524, %v515
  %v678 = vpack.c.b16 %v534, %v525
  %v679 = vpack.c.b16 %v535, %v526
  %v680 = vpack.c.b16 %v536, %v527
  %v681 = vpack.c.b16 %v537, %v528
  %v682 = vpack.c.b16 %v538, %v529
  %v683 = vpack.c.b16 %v539, %v530
  %v684 = vpack.c.b16 %v540, %v531
  %v685 = vpack.c.b16 %v541, %v532
  %v686 = vpack.c.b16 %v542, %v533
  %v687 = vpack.c.b16 %v552, %v543
  %v688 = vpack.c.b16 %v553, %v544
  %v689 = vpack.c.b16 %v554, %v545
  %v690 = vpack.c.b16 %v555, %v546
  %v691 = vpack.c.b16 %v556, %v547
  %v692 = vpack.c.b16 %v557, %v548
  %v693 = vpack.c.b16 %v558, %v549
  %v694 = vpack.c.b16 %v559, %v550
  %v695 = vpack.c.b16 %v560, %v551
  %v696 = vpack.c.b16 %v570, %v561
  %v697 = vpack.c.b16 %v571, %v562
  %v698 = vpack.c.b16 %v572, %v563
  %v699 = vpack.c.b16 %v573, %v564
  %v700 = vpack.c.b16 %v574, %v565
  %v701 = vpack.c.b16 %v575, %v566
  %v702 = vpack.c.b16 %v576, %v567
  %v703 = vpack.c.b16 %v577, %v568
  %v704 = vpack.c.b16 %v578, %v569
  %v705 = vpack.c.b16 %v588, %v579
  %v706 = vpack.c.b16 %v589, %v580
  %v707 = vpack.c.b16 %v590, %v581
  %v708 = vpack.c.b16 %v591, %v582
  %v709 = vpack.c.b16 %v592, %v583
  %v710 = vpack.c.b16 %v593, %v584
  %v711 = vpack.c.b16 %v594, %v585
  %v712 = vpack.c.b16 %v595, %v586
  %v713 = vpack.c.b16 %v596, %v587
  %v714 = vpack.c.b16 %v606, %v597
  %v715 = vpack.c.b16 %v607, %v598
  %v716 = vpack.c.b16 %v608, %v599
  %v717 = vpack.c.b16 %v609, %v600
  %v718 = vpack.c.b16 %v610, %v601
  %v719 = vpack.c.b16 %v611, %v602
  %v720 = vpack.c.b16 %v612, %v603
  %v721 = vpack.c.b16 %v613, %v604
  %v722 = vpack.c.b16 %v614, %v605
  %v959 = vunpack.c.l.b16 %v135
  %v960 = vunpack.c.l.b16 %v136
  %v961 = vunpack.c.l.b16 %v137
  %v962 = vunpack.c.l.b16 %v138
  %v963 = vunpack.c.l.b16 %v139
  %v964 = vunpack.c.l.b16 %v140
  %v965 = vunpack.c.l.b16 %v141
  %v966 = vunpack.c.l.b16 %v142
  %v967 = vunpack.c.l.b16 %v143
  %v968 = vunpack.c.l.b16 %v144
  %v969 = vunpack.c.l.b16 %v145
  %v970 = vunpack.c.l.b16 %v146
  %v971 = vunpack.c.l.b16 %v147
  %v972 = vunpack.c.l.b16 %v148
  %v973 = vunpack.c.l.b16 %v149
  %v974 = vunpack.c.l.b16 %v150
  %v975 = vunpack.c.l.b16 %v151
  %v976 = vunpack.c.l.b16 %v152
  %v977 = vunpack.c.l.b16 %v153
  %v978 = vunpack.c.l.b16 %v154
  %v979 = vunpack.c.l.b16 %v155
  %v980 = vunpack.c.l.b16 %v156
  %v981 = vunpack.c.l.b16 %v157
  %v982 = vunpack.c.l.b16 %v158
  %v983 = vunpack.c.l.b16 %v159
  %v984 = vunpack.c.l.b16 %v160
  %v985 = vunpack.c.l.b16 %v161
  %v986 = vunpack.c.l.b16 %v162
  %v987 = vunpack.c.l.b16 %v163
  %v988 = vunpack.c.l.b16 %v164
  %v989 = vunpack.c.l.b16 %v165
  %v990 = vunpack.c.l.b16 %v166
  %v991 = vunpack.c.l.b16 %v167
  %v992 = vunpack.c.l.b16 %v168
  %v993 = vunpack.c.l.b16 %v169
  %v994 = vunpack.c.l.b16 %v170
  %v995 = vunpack.c.l.b16 %v171
  %v996 = vunpack.c.l.b16 %v172
  %v997 = vunpack.c.l.b16 %v173
  %v998 = vunpack.c.l.b16 %v174
  %v999 = vunpack.c.l.b16 %v175
  %v1000 = vunpack.c.l.b16 %v176
  %v1001 = vunpack.c.l.b16 %v177
  %v1002 = vunpack.c.l.b16 %v178
  %v1003 = vunpack.c.l.b16 %v179
  %v1004 = vunpack.c.l.b16 %v180
  %v1005 = vunpack.c.l.b16 %v181
  %v1006 = vunpack.c.l.b16 %v182
  %v1007 = vunpack.c.l.b16 %v183
  %v1008 = vunpack.c.l.b16 %v184
  %v1009 = vunpack.c.l.b16 %v185
  %v1010 = vunpack.c.l.b16 %v186
  %v1011 = vunpack.c.l.b16 %v187
  %v1012 = vunpack.c.l.b16 %v188
  %v1013 = vunpack.c.l.b16 %v189
  %v1014 = vunpack.c.l.b16 %v190
  %v1015 = vunpack.c.l.b16 %v191
  %v1016 = vunpack.c.l.b16 %v192
  %v1017 = vunpack.c.l.b16 %v193
  %v1018 = vunpack.c.l.b16 %v194
  %v1019 = vunpack.c.l.b16 %v195
  %v1020 = vunpack.c.l.b16 %v196
  %v1021 = vunpack.c.l.b16 %v197
  %v1022 = vunpack.c.l.b16 %v198
  %v1023 = vunpack.c.l.b16 %v199
  %v1024 = vunpack.c.l.b16 %v200
  %v1025 = vunpack.c.l.b16 %v201
  %v1026 = vunpack.c.l.b16 %v202
  %v1027 = vunpack.c.l.b16 %v203
  %v1028 = vunpack.c.l.b16 %v204
  %v1029 = vunpack.c.l.b16 %v205
  %v1030 = vunpack.c.l.b16 %v206
  %v1031 = vunpack.c.l.b16 %v207
  %v1032 = vunpack.c.l.b16 %v208
  %v1033 = vunpack.c.l.b16 %v209
  %v1034 = vunpack.c.l.b16 %v210
  %v1035 = vunpack.c.l.b16 %v211
  %v1036 = vunpack.c.l.b16 %v212
  %v1037 = vunpack.c.l.b16 %v213
  %v1038 = vunpack.c.l.b16 %v214
  %v1039 = vunpack.c.l.b16 %v215
  %v1040 = vunpack.c.l.b16 %v216
  %v1041 = vunpack.c.l.b16 %v217
  %v1042 = vunpack.c.l.b16 %v218
  %v1043 = vunpack.c.l.b16 %v219
  %v1044 = vunpack.c.l.b16 %v220
  %v1045 = vunpack.c.l.b16 %v221
  %v1046 = vunpack.c.l.b16 %v222
  %v1047 = vunpack.c.l.b16 %v223
  %v1048 = vunpack.c.l.b16 %v224
  %v1049 = vunpack.c.l.b16 %v225
  %v1050 = vunpack.c.l.b16 %v226
  %v1051 = vunpack.c.l.b16 %v227
  %v1052 = vunpack.c.l.b16 %v228
  %v1053 = vunpack.c.l.b16 %v229
  %v1054 = vunpack.c.l.b16 %v230
  %v1055 = vunpack.c.l.b16 %v231
  %v1056 = vunpack.c.l.b16 %v232
  %v1057 = vunpack.c.l.b16 %v233
  %v1058 = vunpack.c.l.b16 %v234
  %v1059 = vunpack.c.l.b16 %v235
  %v1060 = vunpack.c.l.b16 %v236
  %v1061 = vunpack.c.l.b16 %v237
  %v1062 = vunpack.c.l.b16 %v238
  %v1063 = vunpack.c.l.b16 %v239
  %v1064 = vunpack.c.l.b16 %v240
  %v1065 = vunpack.c.l.b16 %v241
  %v1066 = vunpack.c.l.b16 %v242
  %v1067 = vunpack.c.l.b16 %v243
  %v1068 = vunpack.c.l.b16 %v244
  %v1069 = vunpack.c.l.b16 %v245
  %v1070 = vunpack.c.l.b16 %v246
  %v1071 = vunpack.c.l.b16 %v247
  %v1072 = vunpack.c.l.b16 %v248
  %v1073 = vunpack.c.l.b16 %v249
  %v1074 = vunpack.c.l.b16 %v250
  %v1075 = vunpack.c.l.b16 %v251
  %v1076 = vunpack.c.l.b16 %v252
  %v1077 = vunpack.c.l.b16 %v253
  %v1078 = vunpack.c.l.b16 %v254
  %v1079 = vunpack.c.l.b16 %v255
  %v1080 = vunpack.c.l.b16 %v256
  %v1081 = vunpack.c.l.b16 %v257
  %v1082 = vunpack.c.l.b16 %v258
  %v1083 = vunpack.c.l.b16 %v259
  %v1084 = vunpack.c.l.b16 %v260
  %v1085 = vunpack.c.l.b16 %v261
  %v1086 = vunpack.c.l.b16 %v262
  %v1087 = vunpack.c.l.b16 %v263
  %v1088 = vunpack.c.l.b16 %v264
  %v1089 = vunpack.c.l.b16 %v265
  %v1090 = vunpack.c.l.b16 %v266
  %v1091 = vunpack.c.l.b16 %v267
  %v1092 = vunpack.c.l.b16 %v268
  %v1093 = vunpack.c.l.b16 %v269
  %v1094 = vunpack.c.l.b16 %v270
  %v1095 = vunpack.c.l.b16 %v271
  %v1096 = vunpack.c.l.b16 %v272
  %v1097 = vunpack.c.l.b16 %v273
  %v1098 = vunpack.c.l.b16 %v274
  %v1099 = vpack.c.b16 %v960, %v959
  %v1100 = vpack.c.b16 %v962, %v961
  %v1101 = vpack.c.b16 %v964, %v963
  %v1102 = vpack.c.b16 %v966, %v965
  %v1103 = vpack.c.b16 %v968, %v967
  %v1104 = vpack.c.b16 %v970, %v969
  %v1105 = vpack.c.b16 %v972, %v971
  %v1106 = vpack.c.b16 %v974, %v973
  %v1107 = vpack.c.b16 %v976, %v975
  %v1108 = vpack.c.b16 %v978, %v977
  %v1109 = vpack.c.b16 %v980, %v979
  %v1110 = vpack.c.b16 %v982, %v981
  %v1111 = vpack.c.b16 %v984, %v983
  %v1112 = vpack.c.b16 %v986, %v985
  %v1113 = vpack.c.b16 %v988, %v987
  %v1114 = vpack.c.b16 %v990, %v989
  %v1115 = vpack.c.b16 %v992, %v991
  %v1116 = vpack.c.b16 %v994, %v993
  %v1117 = vpack.c.b16 %v996, %v995
  %v1118 = vpack.c.b16 %v998, %v997
  %v1119 = vpack.c.b16 %v1000, %v999
  %v1120 = vpack.c.b16 %v1002, %v1001
  %v1121 = vpack.c.b16 %v1004, %v1003
  %v1122 = vpack.c.b16 %v1006, %v1005
  %v1123 = vpack.c.b16 %v1008, %v1007
  %v1124 = vpack.c.b16 %v1010, %v1009
  %v1125 = vpack.c.b16 %v1012, %v1011
  %v1126 = vpack.c.b16 %v1014, %v1013
  %v1127 = vpack.c.b16 %v1016, %v1015
  %v1128 = vpack.c.b16 %v1018, %v1017
  %v1129 = vpack.c.b16 %v1020, %v1019
  %v1130 = vpack.c.b16 %v1022, %v1021
  %v1131 = vpack.c.b16 %v1024, %v1023
  %v1132 = vpack.c.b16 %v1026, %v1025
  %v1133 = vpack.c.b16 %v1028, %v1027
  %v1134 = vpack.c.b16 %v1030, %v1029
  %v1135 = vpack.c.b16 %v1032, %v1031
  %v1136 = vpack.c.b16 %v1034, %v1033
  %v1137 = vpack.c.b16 %v1036, %v1035
  %v1138 = vpack.c.b16 %v1038, %v1037
  %v1139 = vpack.c.b16 %v1040, %v1039
  %v1140 = vpack.c.b16 %v1042, %v1041
  %v1141 = vpack.c.b16 %v1044, %v1043
  %v1142 = vpack.c.b16 %v1046, %v1045
  %v1143 = vpack.c.b16 %v1048, %v1047
  %v1144 = vpack.c.b16 %v1050, %v1049
  %v1145 = vpack.c.b16 %v1052, %v1051
  %v1146 = vpack.c.b16 %v1054, %v1053
  %v1147 = vpack.c.b16 %v1056, %v1055
  %v1148 = vpack.c.b16 %v1058, %v1057
  %v1149 = vpack.c.b16 %v1060, %v1059
  %v1150 = vpack.c.b16 %v1062, %v1061
  %v1151 = vpack.c.b16 %v1064, %v1063
  %v1152 = vpack.c.b16 %v1066, %v1065
  %v1153 = vpack.c.b16 %v1068, %v1067
  %v1154 = vpack.c.b16 %v1070, %v1069
  %v1155 = vpack.c.b16 %v1072, %v1071
  %v1156 = vpack.c.b16 %v1074, %v1073
  %v1157 = vpack.c.b16 %v1076, %v1075
  %v1158 = vpack.c.b16 %v1078, %v1077
  %v1159 = vpack.c.b16 %v1080, %v1079
  %v1160 = vpack.c.b16 %v1082, %v1081
  %v1161 = vpack.c.b16 %v1084, %v1083
  %v1162 = vpack.c.b16 %v1086, %v1085
  %v1163 = vpack.c.b16 %v1088, %v1087
  %v1164 = vpack.c.b16 %v1090, %v1089
  %v1165 = vpack.c.b16 %v1092, %v1091
  %v1166 = vpack.c.b16 %v1094, %v1093
  %v1167 = vpack.c.b16 %v1096, %v1095
  %v1168 = vpack.c.b16 %v1098, %v1097
  %vm1239 = vcmask 785408
  %v1241 = vsel %vm1239, %v623, 0
  %v1244 = vsel %vm1239, %v632, 0
  %v1247 = vsel %vm1239, %v641, 0
  %v1250 = vsel %vm1239, %v650, 0
  %v1253 = vsel %vm1239, %v659, 0
  %v1256 = vsel %vm1239, %v668, 0
  %v1259 = vsel %vm1239, %v677, 0
  %v1262 = vsel %vm1239, %v686, 0
  %v1265 = vsel %vm1239, %v695, 0
  %v1268 = vsel %vm1239, %v704, 0
  %v1271 = vsel %vm1239, %v713, 0
  %v1274 = vsel %vm1239, %v722, 0
  %1276 = vmatpush.bf16.msra.mxu0 %v1106
  %1277 = vmatpush.bf16.msra.mxu0 %v1105
  %1278 = vmatpush.bf16.msra.mxu0 %v1104
  %1279 = vmatpush.bf16.msra.mxu0 %v1103
  %1280 = vmatpush.bf16.msra.mxu0 %v1102
  %1281 = vmatpush.bf16.msra.mxu0 %v1101
  %1282 = vmatpush.bf16.msra.mxu0 %v1100
  %1283 = vmatpush.bf16.msra.mxu0 %v1099
  %1284 = vmatmul.bf16.gmra.mxu0 %v615
  %v1285 = vpop.f32.mrf.mxu0
  %v1286 = vadd.f32 %v277, %v1285
  %v1287 = vpop.f32.mrf.mxu0
  %v1288 = vadd.f32 %v277, %v1287
  %1289 = vmatmul.bf16.gmra.mxu0 %v624
  %v1290 = vpop.f32.mrf.mxu0
  %v1291 = vadd.f32 %v277, %v1290
  %v1292 = vpop.f32.mrf.mxu0
  %v1293 = vadd.f32 %v277, %v1292
  %1294 = vmatmul.bf16.gmra.mxu0 %v633
  %v1295 = vpop.f32.mrf.mxu0
  %v1296 = vadd.f32 %v277, %v1295
  %v1297 = vpop.f32.mrf.mxu0
  %v1298 = vadd.f32 %v277, %v1297
  %1299 = vmatmul.bf16.gmra.mxu0 %v642
  %v1300 = vpop.f32.mrf.mxu0
  %v1301 = vadd.f32 %v277, %v1300
  %v1302 = vpop.f32.mrf.mxu0
  %v1303 = vadd.f32 %v277, %v1302
  %1304 = vmatmul.bf16.gmra.mxu0 %v651
  %v1305 = vpop.f32.mrf.mxu0
  %v1306 = vadd.f32 %v277, %v1305
  %v1307 = vpop.f32.mrf.mxu0
  %v1308 = vadd.f32 %v277, %v1307
  %1309 = vmatmul.bf16.gmra.mxu0 %v660
  %v1310 = vpop.f32.mrf.mxu0
  %v1311 = vadd.f32 %v277, %v1310
  %v1312 = vpop.f32.mrf.mxu0
  %v1313 = vadd.f32 %v277, %v1312
  %1314 = vmatmul.bf16.gmra.mxu0 %v669
  %v1315 = vpop.f32.mrf.mxu0
  %v1316 = vadd.f32 %v277, %v1315
  %v1317 = vpop.f32.mrf.mxu0
  %v1318 = vadd.f32 %v277, %v1317
  %1319 = vmatmul.bf16.gmra.mxu0 %v678
  %v1320 = vpop.f32.mrf.mxu0
  %v1321 = vadd.f32 %v277, %v1320
  %v1322 = vpop.f32.mrf.mxu0
  %v1323 = vadd.f32 %v277, %v1322
  %1324 = vmatmul.bf16.gmra.mxu0 %v687
  %v1325 = vpop.f32.mrf.mxu0
  %v1326 = vadd.f32 %v277, %v1325
  %v1327 = vpop.f32.mrf.mxu0
  %v1328 = vadd.f32 %v277, %v1327
  %1329 = vmatmul.bf16.gmra.mxu0 %v696
  %v1330 = vpop.f32.mrf.mxu0
  %v1331 = vadd.f32 %v277, %v1330
  %v1332 = vpop.f32.mrf.mxu0
  %v1333 = vadd.f32 %v277, %v1332
  %1334 = vmatmul.bf16.gmra.mxu0 %v705
  %v1335 = vpop.f32.mrf.mxu0
  %v1336 = vadd.f32 %v277, %v1335
  %v1337 = vpop.f32.mrf.mxu0
  %v1338 = vadd.f32 %v277, %v1337
  %1339 = vmatmul.bf16.gmra.mxu0 %v714
  %v1340 = vpop.f32.mrf.mxu0
  %v1341 = vadd.f32 %v277, %v1340
  %v1342 = vpop.f32.mrf.mxu0
  %v1343 = vadd.f32 %v277, %v1342
  %1344 = vdwg.mxu0
  %1345 = vmatpush.bf16.msra.mxu0 %v1114
  %1346 = vmatpush.bf16.msra.mxu0 %v1113
  %1347 = vmatpush.bf16.msra.mxu0 %v1112
  %1348 = vmatpush.bf16.msra.mxu0 %v1111
  %1349 = vmatpush.bf16.msra.mxu0 %v1110
  %1350 = vmatpush.bf16.msra.mxu0 %v1109
  %1351 = vmatpush.bf16.msra.mxu0 %v1108
  %1352 = vmatpush.bf16.msra.mxu0 %v1107
  %1353 = vmatmul.bf16.gmra.mxu0 %v616
  %v1354 = vpop.f32.mrf.mxu0
  %v1355 = vadd.f32 %v1286, %v1354
  %v1356 = vpop.f32.mrf.mxu0
  %v1357 = vadd.f32 %v1288, %v1356
  %1358 = vmatmul.bf16.gmra.mxu0 %v625
  %v1359 = vpop.f32.mrf.mxu0
  %v1360 = vadd.f32 %v1291, %v1359
  %v1361 = vpop.f32.mrf.mxu0
  %v1362 = vadd.f32 %v1293, %v1361
  %1363 = vmatmul.bf16.gmra.mxu0 %v634
  %v1364 = vpop.f32.mrf.mxu0
  %v1365 = vadd.f32 %v1296, %v1364
  %v1366 = vpop.f32.mrf.mxu0
  %v1367 = vadd.f32 %v1298, %v1366
  %1368 = vmatmul.bf16.gmra.mxu0 %v643
  %v1369 = vpop.f32.mrf.mxu0
  %v1370 = vadd.f32 %v1301, %v1369
  %v1371 = vpop.f32.mrf.mxu0
  %v1372 = vadd.f32 %v1303, %v1371
  %1373 = vmatmul.bf16.gmra.mxu0 %v652
  %v1374 = vpop.f32.mrf.mxu0
  %v1375 = vadd.f32 %v1306, %v1374
  %v1376 = vpop.f32.mrf.mxu0
  %v1377 = vadd.f32 %v1308, %v1376
  %1378 = vmatmul.bf16.gmra.mxu0 %v661
  %v1379 = vpop.f32.mrf.mxu0
  %v1380 = vadd.f32 %v1311, %v1379
  %v1381 = vpop.f32.mrf.mxu0
  %v1382 = vadd.f32 %v1313, %v1381
  %1383 = vmatmul.bf16.gmra.mxu0 %v670
  %v1384 = vpop.f32.mrf.mxu0
  %v1385 = vadd.f32 %v1316, %v1384
  %v1386 = vpop.f32.mrf.mxu0
  %v1387 = vadd.f32 %v1318, %v1386
  %1388 = vmatmul.bf16.gmra.mxu0 %v679
  %v1389 = vpop.f32.mrf.mxu0
  %v1390 = vadd.f32 %v1321, %v1389
  %v1391 = vpop.f32.mrf.mxu0
  %v1392 = vadd.f32 %v1323, %v1391
  %1393 = vmatmul.bf16.gmra.mxu0 %v688
  %v1394 = vpop.f32.mrf.mxu0
  %v1395 = vadd.f32 %v1326, %v1394
  %v1396 = vpop.f32.mrf.mxu0
  %v1397 = vadd.f32 %v1328, %v1396
  %1398 = vmatmul.bf16.gmra.mxu0 %v697
  %v1399 = vpop.f32.mrf.mxu0
  %v1400 = vadd.f32 %v1331, %v1399
  %v1401 = vpop.f32.mrf.mxu0
  %v1402 = vadd.f32 %v1333, %v1401
  %1403 = vmatmul.bf16.gmra.mxu0 %v706
  %v1404 = vpop.f32.mrf.mxu0
  %v1405 = vadd.f32 %v1336, %v1404
  %v1406 = vpop.f32.mrf.mxu0
  %v1407 = vadd.f32 %v1338, %v1406
  %1408 = vmatmul.bf16.gmra.mxu0 %v715
  %v1409 = vpop.f32.mrf.mxu0
  %v1410 = vadd.f32 %v1341, %v1409
  %v1411 = vpop.f32.mrf.mxu0
  %v1412 = vadd.f32 %v1343, %v1411
  %1413 = vdwg.mxu0
  %1414 = vmatpush.bf16.msra.mxu0 %v1122
  %1415 = vmatpush.bf16.msra.mxu0 %v1121
  %1416 = vmatpush.bf16.msra.mxu0 %v1120
  %1417 = vmatpush.bf16.msra.mxu0 %v1119
  %1418 = vmatpush.bf16.msra.mxu0 %v1118
  %1419 = vmatpush.bf16.msra.mxu0 %v1117
  %1420 = vmatpush.bf16.msra.mxu0 %v1116
  %1421 = vmatpush.bf16.msra.mxu0 %v1115
  %1422 = vmatmul.bf16.gmra.mxu0 %v617
  %v1423 = vpop.f32.mrf.mxu0
  %v1424 = vadd.f32 %v1355, %v1423
  %v1425 = vpop.f32.mrf.mxu0
  %v1426 = vadd.f32 %v1357, %v1425
  %1427 = vmatmul.bf16.gmra.mxu0 %v626
  %v1428 = vpop.f32.mrf.mxu0
  %v1429 = vadd.f32 %v1360, %v1428
  %v1430 = vpop.f32.mrf.mxu0
  %v1431 = vadd.f32 %v1362, %v1430
  %1432 = vmatmul.bf16.gmra.mxu0 %v635
  %v1433 = vpop.f32.mrf.mxu0
  %v1434 = vadd.f32 %v1365, %v1433
  %v1435 = vpop.f32.mrf.mxu0
  %v1436 = vadd.f32 %v1367, %v1435
  %1437 = vmatmul.bf16.gmra.mxu0 %v644
  %v1438 = vpop.f32.mrf.mxu0
  %v1439 = vadd.f32 %v1370, %v1438
  %v1440 = vpop.f32.mrf.mxu0
  %v1441 = vadd.f32 %v1372, %v1440
  %1442 = vmatmul.bf16.gmra.mxu0 %v653
  %v1443 = vpop.f32.mrf.mxu0
  %v1444 = vadd.f32 %v1375, %v1443
  %v1445 = vpop.f32.mrf.mxu0
  %v1446 = vadd.f32 %v1377, %v1445
  %1447 = vmatmul.bf16.gmra.mxu0 %v662
  %v1448 = vpop.f32.mrf.mxu0
  %v1449 = vadd.f32 %v1380, %v1448
  %v1450 = vpop.f32.mrf.mxu0
  %v1451 = vadd.f32 %v1382, %v1450
  %1452 = vmatmul.bf16.gmra.mxu0 %v671
  %v1453 = vpop.f32.mrf.mxu0
  %v1454 = vadd.f32 %v1385, %v1453
  %v1455 = vpop.f32.mrf.mxu0
  %v1456 = vadd.f32 %v1387, %v1455
  %1457 = vmatmul.bf16.gmra.mxu0 %v680
  %v1458 = vpop.f32.mrf.mxu0
  %v1459 = vadd.f32 %v1390, %v1458
  %v1460 = vpop.f32.mrf.mxu0
  %v1461 = vadd.f32 %v1392, %v1460
  %1462 = vmatmul.bf16.gmra.mxu0 %v689
  %v1463 = vpop.f32.mrf.mxu0
  %v1464 = vadd.f32 %v1395, %v1463
  %v1465 = vpop.f32.mrf.mxu0
  %v1466 = vadd.f32 %v1397, %v1465
  %1467 = vmatmul.bf16.gmra.mxu0 %v698
  %v1468 = vpop.f32.mrf.mxu0
  %v1469 = vadd.f32 %v1400, %v1468
  %v1470 = vpop.f32.mrf.mxu0
  %v1471 = vadd.f32 %v1402, %v1470
  %1472 = vmatmul.bf16.gmra.mxu0 %v707
  %v1473 = vpop.f32.mrf.mxu0
  %v1474 = vadd.f32 %v1405, %v1473
  %v1475 = vpop.f32.mrf.mxu0
  %v1476 = vadd.f32 %v1407, %v1475
  %1477 = vmatmul.bf16.gmra.mxu0 %v716
  %v1478 = vpop.f32.mrf.mxu0
  %v1479 = vadd.f32 %v1410, %v1478
  %v1480 = vpop.f32.mrf.mxu0
  %v1481 = vadd.f32 %v1412, %v1480
  %1482 = vdwg.mxu0
  %1483 = vmatpush.bf16.msra.mxu0 %v1130
  %1484 = vmatpush.bf16.msra.mxu0 %v1129
  %1485 = vmatpush.bf16.msra.mxu0 %v1128
  %1486 = vmatpush.bf16.msra.mxu0 %v1127
  %1487 = vmatpush.bf16.msra.mxu0 %v1126
  %1488 = vmatpush.bf16.msra.mxu0 %v1125
  %1489 = vmatpush.bf16.msra.mxu0 %v1124
  %1490 = vmatpush.bf16.msra.mxu0 %v1123
  %1491 = vmatmul.bf16.gmra.mxu0 %v618
  %v1492 = vpop.f32.mrf.mxu0
  %v1493 = vadd.f32 %v1424, %v1492
  %v1494 = vpop.f32.mrf.mxu0
  %v1495 = vadd.f32 %v1426, %v1494
  %1496 = vmatmul.bf16.gmra.mxu0 %v627
  %v1497 = vpop.f32.mrf.mxu0
  %v1498 = vadd.f32 %v1429, %v1497
  %v1499 = vpop.f32.mrf.mxu0
  %v1500 = vadd.f32 %v1431, %v1499
  %1501 = vmatmul.bf16.gmra.mxu0 %v636
  %v1502 = vpop.f32.mrf.mxu0
  %v1503 = vadd.f32 %v1434, %v1502
  %v1504 = vpop.f32.mrf.mxu0
  %v1505 = vadd.f32 %v1436, %v1504
  %1506 = vmatmul.bf16.gmra.mxu0 %v645
  %v1507 = vpop.f32.mrf.mxu0
  %v1508 = vadd.f32 %v1439, %v1507
  %v1509 = vpop.f32.mrf.mxu0
  %v1510 = vadd.f32 %v1441, %v1509
  %1511 = vmatmul.bf16.gmra.mxu0 %v654
  %v1512 = vpop.f32.mrf.mxu0
  %v1513 = vadd.f32 %v1444, %v1512
  %v1514 = vpop.f32.mrf.mxu0
  %v1515 = vadd.f32 %v1446, %v1514
  %1516 = vmatmul.bf16.gmra.mxu0 %v663
  %v1517 = vpop.f32.mrf.mxu0
  %v1518 = vadd.f32 %v1449, %v1517
  %v1519 = vpop.f32.mrf.mxu0
  %v1520 = vadd.f32 %v1451, %v1519
  %1521 = vmatmul.bf16.gmra.mxu0 %v672
  %v1522 = vpop.f32.mrf.mxu0
  %v1523 = vadd.f32 %v1454, %v1522
  %v1524 = vpop.f32.mrf.mxu0
  %v1525 = vadd.f32 %v1456, %v1524
  %1526 = vmatmul.bf16.gmra.mxu0 %v681
  %v1527 = vpop.f32.mrf.mxu0
  %v1528 = vadd.f32 %v1459, %v1527
  %v1529 = vpop.f32.mrf.mxu0
  %v1530 = vadd.f32 %v1461, %v1529
  %1531 = vmatmul.bf16.gmra.mxu0 %v690
  %v1532 = vpop.f32.mrf.mxu0
  %v1533 = vadd.f32 %v1464, %v1532
  %v1534 = vpop.f32.mrf.mxu0
  %v1535 = vadd.f32 %v1466, %v1534
  %1536 = vmatmul.bf16.gmra.mxu0 %v699
  %v1537 = vpop.f32.mrf.mxu0
  %v1538 = vadd.f32 %v1469, %v1537
  %v1539 = vpop.f32.mrf.mxu0
  %v1540 = vadd.f32 %v1471, %v1539
  %1541 = vmatmul.bf16.gmra.mxu0 %v708
  %v1542 = vpop.f32.mrf.mxu0
  %v1543 = vadd.f32 %v1474, %v1542
  %v1544 = vpop.f32.mrf.mxu0
  %v1545 = vadd.f32 %v1476, %v1544
  %1546 = vmatmul.bf16.gmra.mxu0 %v717
  %v1547 = vpop.f32.mrf.mxu0
  %v1548 = vadd.f32 %v1479, %v1547
  %v1549 = vpop.f32.mrf.mxu0
  %v1550 = vadd.f32 %v1481, %v1549
  %1551 = vdwg.mxu0
  %1552 = vmatpush.bf16.msra.mxu0 %v1138
  %1553 = vmatpush.bf16.msra.mxu0 %v1137
  %1554 = vmatpush.bf16.msra.mxu0 %v1136
  %1555 = vmatpush.bf16.msra.mxu0 %v1135
  %1556 = vmatpush.bf16.msra.mxu0 %v1134
  %1557 = vmatpush.bf16.msra.mxu0 %v1133
  %1558 = vmatpush.bf16.msra.mxu0 %v1132
  %1559 = vmatpush.bf16.msra.mxu0 %v1131
  %1560 = vmatmul.bf16.gmra.mxu0 %v619
  %v1561 = vpop.f32.mrf.mxu0
  %v1562 = vadd.f32 %v1493, %v1561
  %v1563 = vpop.f32.mrf.mxu0
  %v1564 = vadd.f32 %v1495, %v1563
  %1565 = vmatmul.bf16.gmra.mxu0 %v628
  %v1566 = vpop.f32.mrf.mxu0
  %v1567 = vadd.f32 %v1498, %v1566
  %v1568 = vpop.f32.mrf.mxu0
  %v1569 = vadd.f32 %v1500, %v1568
  %1570 = vmatmul.bf16.gmra.mxu0 %v637
  %v1571 = vpop.f32.mrf.mxu0
  %v1572 = vadd.f32 %v1503, %v1571
  %v1573 = vpop.f32.mrf.mxu0
  %v1574 = vadd.f32 %v1505, %v1573
  %1575 = vmatmul.bf16.gmra.mxu0 %v646
  %v1576 = vpop.f32.mrf.mxu0
  %v1577 = vadd.f32 %v1508, %v1576
  %v1578 = vpop.f32.mrf.mxu0
  %v1579 = vadd.f32 %v1510, %v1578
  %1580 = vmatmul.bf16.gmra.mxu0 %v655
  %v1581 = vpop.f32.mrf.mxu0
  %v1582 = vadd.f32 %v1513, %v1581
  %v1583 = vpop.f32.mrf.mxu0
  %v1584 = vadd.f32 %v1515, %v1583
  %1585 = vmatmul.bf16.gmra.mxu0 %v664
  %v1586 = vpop.f32.mrf.mxu0
  %v1587 = vadd.f32 %v1518, %v1586
  %v1588 = vpop.f32.mrf.mxu0
  %v1589 = vadd.f32 %v1520, %v1588
  %1590 = vmatmul.bf16.gmra.mxu0 %v673
  %v1591 = vpop.f32.mrf.mxu0
  %v1592 = vadd.f32 %v1523, %v1591
  %v1593 = vpop.f32.mrf.mxu0
  %v1594 = vadd.f32 %v1525, %v1593
  %1595 = vmatmul.bf16.gmra.mxu0 %v682
  %v1596 = vpop.f32.mrf.mxu0
  %v1597 = vadd.f32 %v1528, %v1596
  %v1598 = vpop.f32.mrf.mxu0
  %v1599 = vadd.f32 %v1530, %v1598
  %1600 = vmatmul.bf16.gmra.mxu0 %v691
  %v1601 = vpop.f32.mrf.mxu0
  %v1602 = vadd.f32 %v1533, %v1601
  %v1603 = vpop.f32.mrf.mxu0
  %v1604 = vadd.f32 %v1535, %v1603
  %1605 = vmatmul.bf16.gmra.mxu0 %v700
  %v1606 = vpop.f32.mrf.mxu0
  %v1607 = vadd.f32 %v1538, %v1606
  %v1608 = vpop.f32.mrf.mxu0
  %v1609 = vadd.f32 %v1540, %v1608
  %1610 = vmatmul.bf16.gmra.mxu0 %v709
  %v1611 = vpop.f32.mrf.mxu0
  %v1612 = vadd.f32 %v1543, %v1611
  %v1613 = vpop.f32.mrf.mxu0
  %v1614 = vadd.f32 %v1545, %v1613
  %1615 = vmatmul.bf16.gmra.mxu0 %v718
  %v1616 = vpop.f32.mrf.mxu0
  %v1617 = vadd.f32 %v1548, %v1616
  %v1618 = vpop.f32.mrf.mxu0
  %v1619 = vadd.f32 %v1550, %v1618
  %1620 = vdwg.mxu0
  %1621 = vmatpush.bf16.msra.mxu0 %v1146
  %1622 = vmatpush.bf16.msra.mxu0 %v1145
  %1623 = vmatpush.bf16.msra.mxu0 %v1144
  %1624 = vmatpush.bf16.msra.mxu0 %v1143
  %1625 = vmatpush.bf16.msra.mxu0 %v1142
  %1626 = vmatpush.bf16.msra.mxu0 %v1141
  %1627 = vmatpush.bf16.msra.mxu0 %v1140
  %1628 = vmatpush.bf16.msra.mxu0 %v1139
  %1629 = vmatmul.bf16.gmra.mxu0 %v620
  %v1630 = vpop.f32.mrf.mxu0
  %v1631 = vadd.f32 %v1562, %v1630
  %v1632 = vpop.f32.mrf.mxu0
  %v1633 = vadd.f32 %v1564, %v1632
  %1634 = vmatmul.bf16.gmra.mxu0 %v629
  %v1635 = vpop.f32.mrf.mxu0
  %v1636 = vadd.f32 %v1567, %v1635
  %v1637 = vpop.f32.mrf.mxu0
  %v1638 = vadd.f32 %v1569, %v1637
  %1639 = vmatmul.bf16.gmra.mxu0 %v638
  %v1640 = vpop.f32.mrf.mxu0
  %v1641 = vadd.f32 %v1572, %v1640
  %v1642 = vpop.f32.mrf.mxu0
  %v1643 = vadd.f32 %v1574, %v1642
  %1644 = vmatmul.bf16.gmra.mxu0 %v647
  %v1645 = vpop.f32.mrf.mxu0
  %v1646 = vadd.f32 %v1577, %v1645
  %v1647 = vpop.f32.mrf.mxu0
  %v1648 = vadd.f32 %v1579, %v1647
  %1649 = vmatmul.bf16.gmra.mxu0 %v656
  %v1650 = vpop.f32.mrf.mxu0
  %v1651 = vadd.f32 %v1582, %v1650
  %v1652 = vpop.f32.mrf.mxu0
  %v1653 = vadd.f32 %v1584, %v1652
  %1654 = vmatmul.bf16.gmra.mxu0 %v665
  %v1655 = vpop.f32.mrf.mxu0
  %v1656 = vadd.f32 %v1587, %v1655
  %v1657 = vpop.f32.mrf.mxu0
  %v1658 = vadd.f32 %v1589, %v1657
  %1659 = vmatmul.bf16.gmra.mxu0 %v674
  %v1660 = vpop.f32.mrf.mxu0
  %v1661 = vadd.f32 %v1592, %v1660
  %v1662 = vpop.f32.mrf.mxu0
  %v1663 = vadd.f32 %v1594, %v1662
  %1664 = vmatmul.bf16.gmra.mxu0 %v683
  %v1665 = vpop.f32.mrf.mxu0
  %v1666 = vadd.f32 %v1597, %v1665
  %v1667 = vpop.f32.mrf.mxu0
  %v1668 = vadd.f32 %v1599, %v1667
  %1669 = vmatmul.bf16.gmra.mxu0 %v692
  %v1670 = vpop.f32.mrf.mxu0
  %v1671 = vadd.f32 %v1602, %v1670
  %v1672 = vpop.f32.mrf.mxu0
  %v1673 = vadd.f32 %v1604, %v1672
  %1674 = vmatmul.bf16.gmra.mxu0 %v701
  %v1675 = vpop.f32.mrf.mxu0
  %v1676 = vadd.f32 %v1607, %v1675
  %v1677 = vpop.f32.mrf.mxu0
  %v1678 = vadd.f32 %v1609, %v1677
  %1679 = vmatmul.bf16.gmra.mxu0 %v710
  %v1680 = vpop.f32.mrf.mxu0
  %v1681 = vadd.f32 %v1612, %v1680
  %v1682 = vpop.f32.mrf.mxu0
  %v1683 = vadd.f32 %v1614, %v1682
  %1684 = vmatmul.bf16.gmra.mxu0 %v719
  %v1685 = vpop.f32.mrf.mxu0
  %v1686 = vadd.f32 %v1617, %v1685
  %v1687 = vpop.f32.mrf.mxu0
  %v1688 = vadd.f32 %v1619, %v1687
  %1689 = vdwg.mxu0
  %1690 = vmatpush.bf16.msra.mxu0 %v1154
  %1691 = vmatpush.bf16.msra.mxu0 %v1153
  %1692 = vmatpush.bf16.msra.mxu0 %v1152
  %1693 = vmatpush.bf16.msra.mxu0 %v1151
  %1694 = vmatpush.bf16.msra.mxu0 %v1150
  %1695 = vmatpush.bf16.msra.mxu0 %v1149
  %1696 = vmatpush.bf16.msra.mxu0 %v1148
  %1697 = vmatpush.bf16.msra.mxu0 %v1147
  %1698 = vmatmul.bf16.gmra.mxu0 %v621
  %v1699 = vpop.f32.mrf.mxu0
  %v1700 = vadd.f32 %v1631, %v1699
  %v1701 = vpop.f32.mrf.mxu0
  %v1702 = vadd.f32 %v1633, %v1701
  %1703 = vmatmul.bf16.gmra.mxu0 %v630
  %v1704 = vpop.f32.mrf.mxu0
  %v1705 = vadd.f32 %v1636, %v1704
  %v1706 = vpop.f32.mrf.mxu0
  %v1707 = vadd.f32 %v1638, %v1706
  %1708 = vmatmul.bf16.gmra.mxu0 %v639
  %v1709 = vpop.f32.mrf.mxu0
  %v1710 = vadd.f32 %v1641, %v1709
  %v1711 = vpop.f32.mrf.mxu0
  %v1712 = vadd.f32 %v1643, %v1711
  %1713 = vmatmul.bf16.gmra.mxu0 %v648
  %v1714 = vpop.f32.mrf.mxu0
  %v1715 = vadd.f32 %v1646, %v1714
  %v1716 = vpop.f32.mrf.mxu0
  %v1717 = vadd.f32 %v1648, %v1716
  %1718 = vmatmul.bf16.gmra.mxu0 %v657
  %v1719 = vpop.f32.mrf.mxu0
  %v1720 = vadd.f32 %v1651, %v1719
  %v1721 = vpop.f32.mrf.mxu0
  %v1722 = vadd.f32 %v1653, %v1721
  %1723 = vmatmul.bf16.gmra.mxu0 %v666
  %v1724 = vpop.f32.mrf.mxu0
  %v1725 = vadd.f32 %v1656, %v1724
  %v1726 = vpop.f32.mrf.mxu0
  %v1727 = vadd.f32 %v1658, %v1726
  %1728 = vmatmul.bf16.gmra.mxu0 %v675
  %v1729 = vpop.f32.mrf.mxu0
  %v1730 = vadd.f32 %v1661, %v1729
  %v1731 = vpop.f32.mrf.mxu0
  %v1732 = vadd.f32 %v1663, %v1731
  %1733 = vmatmul.bf16.gmra.mxu0 %v684
  %v1734 = vpop.f32.mrf.mxu0
  %v1735 = vadd.f32 %v1666, %v1734
  %v1736 = vpop.f32.mrf.mxu0
  %v1737 = vadd.f32 %v1668, %v1736
  %1738 = vmatmul.bf16.gmra.mxu0 %v693
  %v1739 = vpop.f32.mrf.mxu0
  %v1740 = vadd.f32 %v1671, %v1739
  %v1741 = vpop.f32.mrf.mxu0
  %v1742 = vadd.f32 %v1673, %v1741
  %1743 = vmatmul.bf16.gmra.mxu0 %v702
  %v1744 = vpop.f32.mrf.mxu0
  %v1745 = vadd.f32 %v1676, %v1744
  %v1746 = vpop.f32.mrf.mxu0
  %v1747 = vadd.f32 %v1678, %v1746
  %1748 = vmatmul.bf16.gmra.mxu0 %v711
  %v1749 = vpop.f32.mrf.mxu0
  %v1750 = vadd.f32 %v1681, %v1749
  %v1751 = vpop.f32.mrf.mxu0
  %v1752 = vadd.f32 %v1683, %v1751
  %1753 = vmatmul.bf16.gmra.mxu0 %v720
  %v1754 = vpop.f32.mrf.mxu0
  %v1755 = vadd.f32 %v1686, %v1754
  %v1756 = vpop.f32.mrf.mxu0
  %v1757 = vadd.f32 %v1688, %v1756
  %1758 = vdwg.mxu0
  %1759 = vmatpush.bf16.msra.mxu0 %v1162
  %1760 = vmatpush.bf16.msra.mxu0 %v1161
  %1761 = vmatpush.bf16.msra.mxu0 %v1160
  %1762 = vmatpush.bf16.msra.mxu0 %v1159
  %1763 = vmatpush.bf16.msra.mxu0 %v1158
  %1764 = vmatpush.bf16.msra.mxu0 %v1157
  %1765 = vmatpush.bf16.msra.mxu0 %v1156
  %1766 = vmatpush.bf16.msra.mxu0 %v1155
  %1767 = vmatmul.bf16.gmra.mxu0 %v622
  %v1768 = vpop.f32.mrf.mxu0
  %v1769 = vadd.f32 %v1700, %v1768
  %v1770 = vpop.f32.mrf.mxu0
  %v1771 = vadd.f32 %v1702, %v1770
  %1772 = vmatmul.bf16.gmra.mxu0 %v631
  %v1773 = vpop.f32.mrf.mxu0
  %v1774 = vadd.f32 %v1705, %v1773
  %v1775 = vpop.f32.mrf.mxu0
  %v1776 = vadd.f32 %v1707, %v1775
  %1777 = vmatmul.bf16.gmra.mxu0 %v640
  %v1778 = vpop.f32.mrf.mxu0
  %v1779 = vadd.f32 %v1710, %v1778
  %v1780 = vpop.f32.mrf.mxu0
  %v1781 = vadd.f32 %v1712, %v1780
  %1782 = vmatmul.bf16.gmra.mxu0 %v649
  %v1783 = vpop.f32.mrf.mxu0
  %v1784 = vadd.f32 %v1715, %v1783
  %v1785 = vpop.f32.mrf.mxu0
  %v1786 = vadd.f32 %v1717, %v1785
  %1787 = vmatmul.bf16.gmra.mxu0 %v658
  %v1788 = vpop.f32.mrf.mxu0
  %v1789 = vadd.f32 %v1720, %v1788
  %v1790 = vpop.f32.mrf.mxu0
  %v1791 = vadd.f32 %v1722, %v1790
  %1792 = vmatmul.bf16.gmra.mxu0 %v667
  %v1793 = vpop.f32.mrf.mxu0
  %v1794 = vadd.f32 %v1725, %v1793
  %v1795 = vpop.f32.mrf.mxu0
  %v1796 = vadd.f32 %v1727, %v1795
  %1797 = vmatmul.bf16.gmra.mxu0 %v676
  %v1798 = vpop.f32.mrf.mxu0
  %v1799 = vadd.f32 %v1730, %v1798
  %v1800 = vpop.f32.mrf.mxu0
  %v1801 = vadd.f32 %v1732, %v1800
  %1802 = vmatmul.bf16.gmra.mxu0 %v685
  %v1803 = vpop.f32.mrf.mxu0
  %v1804 = vadd.f32 %v1735, %v1803
  %v1805 = vpop.f32.mrf.mxu0
  %v1806 = vadd.f32 %v1737, %v1805
  %1807 = vmatmul.bf16.gmra.mxu0 %v694
  %v1808 = vpop.f32.mrf.mxu0
  %v1809 = vadd.f32 %v1740, %v1808
  %v1810 = vpop.f32.mrf.mxu0
  %v1811 = vadd.f32 %v1742, %v1810
  %1812 = vmatmul.bf16.gmra.mxu0 %v703
  %v1813 = vpop.f32.mrf.mxu0
  %v1814 = vadd.f32 %v1745, %v1813
  %v1815 = vpop.f32.mrf.mxu0
  %v1816 = vadd.f32 %v1747, %v1815
  %1817 = vmatmul.bf16.gmra.mxu0 %v712
  %v1818 = vpop.f32.mrf.mxu0
  %v1819 = vadd.f32 %v1750, %v1818
  %v1820 = vpop.f32.mrf.mxu0
  %v1821 = vadd.f32 %v1752, %v1820
  %1822 = vmatmul.bf16.gmra.mxu0 %v721
  %v1823 = vpop.f32.mrf.mxu0
  %v1824 = vadd.f32 %v1755, %v1823
  %v1825 = vpop.f32.mrf.mxu0
  %v1826 = vadd.f32 %v1757, %v1825
  %1827 = vdwg.mxu0
  %1828 = vmatpush.bf16.msra.mxu0 0
  %1829 = vmatpush.bf16.msra.mxu0 0
  %1830 = vmatpush.bf16.msra.mxu0 %v1168
  %1831 = vmatpush.bf16.msra.mxu0 %v1167
  %1832 = vmatpush.bf16.msra.mxu0 %v1166
  %1833 = vmatpush.bf16.msra.mxu0 %v1165
  %1834 = vmatpush.bf16.msra.mxu0 %v1164
  %1835 = vmatpush.bf16.msra.mxu0 %v1163
  %1836 = vmatmul.bf16.gmra.mxu0 %v1241
  %v1837 = vpop.f32.mrf.mxu0
  %v1838 = vadd.f32 %v1769, %v1837
  %v1839 = vpop.f32.mrf.mxu0
  %v1840 = vadd.f32 %v1771, %v1839
  %1841 = vmatmul.bf16.gmra.mxu0 %v1244
  %v1842 = vpop.f32.mrf.mxu0
  %v1843 = vadd.f32 %v1774, %v1842
  %v1844 = vpop.f32.mrf.mxu0
  %v1845 = vadd.f32 %v1776, %v1844
  %1846 = vmatmul.bf16.gmra.mxu0 %v1247
  %v1847 = vpop.f32.mrf.mxu0
  %v1848 = vadd.f32 %v1779, %v1847
  %v1849 = vpop.f32.mrf.mxu0
  %v1850 = vadd.f32 %v1781, %v1849
  %1851 = vmatmul.bf16.gmra.mxu0 %v1250
  %v1852 = vpop.f32.mrf.mxu0
  %v1853 = vadd.f32 %v1784, %v1852
  %v1854 = vpop.f32.mrf.mxu0
  %v1855 = vadd.f32 %v1786, %v1854
  %1856 = vmatmul.bf16.gmra.mxu0 %v1253
  %v1857 = vpop.f32.mrf.mxu0
  %v1858 = vadd.f32 %v1789, %v1857
  %v1859 = vpop.f32.mrf.mxu0
  %v1860 = vadd.f32 %v1791, %v1859
  %1861 = vmatmul.bf16.gmra.mxu0 %v1256
  %v1862 = vpop.f32.mrf.mxu0
  %v1863 = vadd.f32 %v1794, %v1862
  %v1864 = vpop.f32.mrf.mxu0
  %v1865 = vadd.f32 %v1796, %v1864
  %1866 = vmatmul.bf16.gmra.mxu0 %v1259
  %v1867 = vpop.f32.mrf.mxu0
  %v1868 = vadd.f32 %v1799, %v1867
  %v1869 = vpop.f32.mrf.mxu0
  %v1870 = vadd.f32 %v1801, %v1869
  %1871 = vmatmul.bf16.gmra.mxu0 %v1262
  %v1872 = vpop.f32.mrf.mxu0
  %v1873 = vadd.f32 %v1804, %v1872
  %v1874 = vpop.f32.mrf.mxu0
  %v1875 = vadd.f32 %v1806, %v1874
  %1876 = vmatmul.bf16.gmra.mxu0 %v1265
  %v1877 = vpop.f32.mrf.mxu0
  %v1878 = vadd.f32 %v1809, %v1877
  %v1879 = vpop.f32.mrf.mxu0
  %v1880 = vadd.f32 %v1811, %v1879
  %1881 = vmatmul.bf16.gmra.mxu0 %v1268
  %v1882 = vpop.f32.mrf.mxu0
  %v1883 = vadd.f32 %v1814, %v1882
  %v1884 = vpop.f32.mrf.mxu0
  %v1885 = vadd.f32 %v1816, %v1884
  %1886 = vmatmul.bf16.gmra.mxu0 %v1271
  %v1887 = vpop.f32.mrf.mxu0
  %v1888 = vadd.f32 %v1819, %v1887
  %v1889 = vpop.f32.mrf.mxu0
  %v1890 = vadd.f32 %v1821, %v1889
  %1891 = vmatmul.bf16.gmra.mxu0 %v1274
  %v1892 = vpop.f32.mrf.mxu0
  %v1893 = vadd.f32 %v1824, %v1892
  %v1894 = vpop.f32.mrf.mxu0
  %v1895 = vadd.f32 %v1826, %v1894
  %1896 = vdwg.mxu0
  %v1897 = vmax.f32 %v1838, 0.0
  %v1898 = vmax.f32 %v1840, 0.0
  %v1899 = vmax.f32 %v1843, 0.0
  %v1900 = vmax.f32 %v1845, 0.0
  %v1901 = vmax.f32 %v1848, 0.0
  %v1902 = vmax.f32 %v1850, 0.0
  %v1903 = vmax.f32 %v1853, 0.0
  %v1904 = vmax.f32 %v1855, 0.0
  %v1905 = vmax.f32 %v1858, 0.0
  %v1906 = vmax.f32 %v1860, 0.0
  %v1907 = vmax.f32 %v1863, 0.0
  %v1908 = vmax.f32 %v1865, 0.0
  %v1909 = vmax.f32 %v1868, 0.0
  %v1910 = vmax.f32 %v1870, 0.0
  %v1911 = vmax.f32 %v1873, 0.0
  %v1912 = vmax.f32 %v1875, 0.0
  %v1913 = vmax.f32 %v1878, 0.0
  %v1914 = vmax.f32 %v1880, 0.0
  %v1915 = vmax.f32 %v1883, 0.0
  %v1916 = vmax.f32 %v1885, 0.0
  %v1917 = vmax.f32 %v1888, 0.0
  %v1918 = vmax.f32 %v1890, 0.0
  %v1919 = vmax.f32 %v1893, 0.0
  %v1920 = vmax.f32 %v1895, 0.0
  %vm1921 = vcmask 261120
  %1922 = vst.msk [vmem:[%s3] sm:$0xff] %vm1921, %v1897
  %1923 = vst.msk [vmem:[%s3 + $0x8] sm:$0xff] %vm1921, %v1898
  %1924 = vst.msk [vmem:[%s3 + $0x10] sm:$0xff] %vm1921, %v1899
  %1925 = vst.msk [vmem:[%s3 + $0x18] sm:$0xff] %vm1921, %v1900
  %1926 = vst.msk [vmem:[%s3 + $0x20] sm:$0xff] %vm1921, %v1901
  %1927 = vst.msk [vmem:[%s3 + $0x28] sm:$0xff] %vm1921, %v1902
  %1928 = vst.msk [vmem:[%s3 + $0x30] sm:$0xff] %vm1921, %v1903
  %1929 = vst.msk [vmem:[%s3 + $0x38] sm:$0xff] %vm1921, %v1904
  %1930 = vst.msk [vmem:[%s3 + $0x40] sm:$0xff] %vm1921, %v1905
  %1931 = vst.msk [vmem:[%s3 + $0x48] sm:$0xff] %vm1921, %v1906
  %1932 = vst.msk [vmem:[%s3 + $0x50] sm:$0xff] %vm1921, %v1907
  %1933 = vst.msk [vmem:[%s3 + $0x58] sm:$0xff] %vm1921, %v1908
  %1934 = vst.msk [vmem:[%s3 + $0x60] sm:$0xff] %vm1921, %v1909
  %1935 = vst.msk [vmem:[%s3 + $0x68] sm:$0xff] %vm1921, %v1910
  %1936 = vst.msk [vmem:[%s3 + $0x70] sm:$0xff] %vm1921, %v1911
  %1937 = vst.msk [vmem:[%s3 + $0x78] sm:$0xff] %vm1921, %v1912
  %1938 = vst.msk [vmem:[%s3 + $0x80] sm:$0xff] %vm1921, %v1913
  %1939 = vst.msk [vmem:[%s3 + $0x88] sm:$0xff] %vm1921, %v1914
  %1940 = vst.msk [vmem:[%s3 + $0x90] sm:$0xff] %vm1921, %v1915
  %1941 = vst.msk [vmem:[%s3 + $0x98] sm:$0xff] %vm1921, %v1916
  %1942 = vst.msk [vmem:[%s3 + $0xa0] sm:$0xff] %vm1921, %v1917
  %1943 = vst.msk [vmem:[%s3 + $0xa8] sm:$0xff] %vm1921, %v1918
  %1944 = vst.msk [vmem:[%s3 + $0xb0] sm:$0xff] %vm1921, %v1919
  %1945 = vst.msk [vmem:[%s3 + $0xb8] sm:$0xff] %vm1921, %v1920
  // Predicated region
  $region14: #{f0spec_forward.8} parent=0 // pred_check
    _
  $region15: #{f0spec_forward.8} parent=0 // pred_check_branch
    %1947 = sbr.rel (0) target = $region17
  $region16: #{f0spec_forward.8} parent=0 // pred_region
    _
  $region17: #{f0spec_forward.8} parent=0 // pred_fallthru
    _
  // Predicated region
  $region18: #{f0spec_forward.8} parent=0 // pred_check
    _
  $region19: #{f0spec_forward.8} parent=0 // pred_check_branch
    %1949 = sbr.rel (0) target = $region21
  $region20: #{f0spec_forward.8} parent=0 // pred_region
    _
  $region21: #{f0spec_forward.8} parent=0 // pred_fallthru
    _

// kernel: f0spec_forward.9
$region0: #{f0spec_forward.9}
  #allocation0 [shape = 'u32[]', space=smem, size = 0x4, offset = 0x4, fixed_abs, tag = 'smem constant byte address 0x4 - core index']
  #allocation1 [shape = 'u32[72,128]{1,0:T(1,128)}', space=vmem, size = 0x9000, scoped, tag = 'internal scratch']
  %s0 = inlined_call_operand.vmem [shape: bf16[32,1120], index: 0, kind: input, shape index: {}]
  %s1 = inlined_call_operand.vmem [shape: bf16[1120,32], index: 1, kind: input, shape index: {}]
  %s2 = inlined_call_operand.vmem [shape: f32[1,32], index: 2, kind: input, shape index: {}]
  %s3 = inlined_call_operand.vmem [shape: f32[32,32], index: 3, kind: output, shape index: {}]
  %s4 = sld [smem:[#allocation0]]
  $region22: #{f0spec_forward.9} parent=0
    _
  %s6 = ssub.s32 1, %s4
  %s7 = scalar_select 0, %s6, %s4
  // Predicated region
  $region2: #{f0spec_forward.9} parent=0 // pred_check
    _
  $region3: #{f0spec_forward.9} parent=0 // pred_check_branch
    %9 = sbr.rel (0) target = $region5
  $region4: #{f0spec_forward.9} parent=0 // pred_region
    _
  $region5: #{f0spec_forward.9} parent=0 // pred_fallthru
    _
  // Predicated region
  $region6: #{f0spec_forward.9} parent=0 // pred_check
    _
  $region7: #{f0spec_forward.9} parent=0 // pred_check_branch
    %11 = sbr.rel (0) target = $region9
  $region8: #{f0spec_forward.9} parent=0 // pred_region
    _
  $region9: #{f0spec_forward.9} parent=0 // pred_fallthru
    _
  // Predicated region
  $region10: #{f0spec_forward.9} parent=0 // pred_check
    _
  $region11: #{f0spec_forward.9} parent=0 // pred_check_branch
    %13 = sbr.rel (0) target = $region13
  $region12: #{f0spec_forward.9} parent=0 // pred_region
    _
  $region13: #{f0spec_forward.9} parent=0 // pred_fallthru
    _
  %v15 = vld [vmem:[%s0] sm:$0xff]
  %v16 = vld [vmem:[%s0 + $0x8] sm:$0xff]
  %v17 = vld [vmem:[%s0 + $0x10] sm:$0xff]
  %v18 = vld [vmem:[%s0 + $0x18] sm:$0xff]
  %v19 = vld [vmem:[%s0 + $0x20] sm:$0xf]
  %v20 = vld [vmem:[%s0 + $0x24] sm:$0xff]
  %v21 = vld [vmem:[%s0 + $0x2c] sm:$0xff]
  %v22 = vld [vmem:[%s0 + $0x34] sm:$0xff]
  %v23 = vld [vmem:[%s0 + $0x3c] sm:$0xff]
  %v24 = vld [vmem:[%s0 + $0x44] sm:$0xf]
  %v25 = vld [vmem:[%s0 + $0x48] sm:$0xff]
  %v26 = vld [vmem:[%s0 + $0x50] sm:$0xff]
  %v27 = vld [vmem:[%s0 + $0x58] sm:$0xff]
  %v28 = vld [vmem:[%s0 + $0x60] sm:$0xff]
  %v29 = vld [vmem:[%s0 + $0x68] sm:$0xf]
  %v30 = vld [vmem:[%s0 + $0x6c] sm:$0xff]
  %v31 = vld [vmem:[%s0 + $0x74] sm:$0xff]
  %v32 = vld [vmem:[%s0 + $0x7c] sm:$0xff]
  %v33 = vld [vmem:[%s0 + $0x84] sm:$0xff]
  %v34 = vld [vmem:[%s0 + $0x8c] sm:$0xf]
  %v35 = vld [vmem:[%s1] sm:$0xf]
  %v36 = vld [vmem:[%s1 + $0x4] sm:$0xf]
  %v37 = vld [vmem:[%s1 + $0x8] sm:$0xf]
  %v38 = vld [vmem:[%s1 + $0xc] sm:$0xf]
  %v39 = vld [vmem:[%s1 + $0x10] sm:$0xf]
  %v40 = vld [vmem:[%s1 + $0x14] sm:$0xf]
  %v41 = vld [vmem:[%s1 + $0x18] sm:$0xf]
  %v42 = vld [vmem:[%s1 + $0x1c] sm:$0xf]
  %v43 = vld [vmem:[%s1 + $0x20] sm:$0xf]
  %v44 = vld [vmem:[%s1 + $0x24] sm:$0xf]
  %v45 = vld [vmem:[%s1 + $0x28] sm:$0xf]
  %v46 = vld [vmem:[%s1 + $0x2c] sm:$0xf]
  %v47 = vld [vmem:[%s1 + $0x30] sm:$0xf]
  %v48 = vld [vmem:[%s1 + $0x34] sm:$0xf]
  %v49 = vld [vmem:[%s1 + $0x38] sm:$0xf]
  %v50 = vld [vmem:[%s1 + $0x3c] sm:$0xf]
  %v51 = vld [vmem:[%s1 + $0x40] sm:$0xf]
  %v52 = vld [vmem:[%s1 + $0x44] sm:$0xf]
  %v53 = vld [vmem:[%s1 + $0x48] sm:$0xf]
  %v54 = vld [vmem:[%s1 + $0x4c] sm:$0xf]
  %v55 = vld [vmem:[%s1 + $0x50] sm:$0xf]
  %v56 = vld [vmem:[%s1 + $0x54] sm:$0xf]
  %v57 = vld [vmem:[%s1 + $0x58] sm:$0xf]
  %v58 = vld [vmem:[%s1 + $0x5c] sm:$0xf]
  %v59 = vld [vmem:[%s1 + $0x60] sm:$0xf]
  %v60 = vld [vmem:[%s1 + $0x64] sm:$0xf]
  %v61 = vld [vmem:[%s1 + $0x68] sm:$0xf]
  %v62 = vld [vmem:[%s1 + $0x6c] sm:$0xf]
  %v63 = vld [vmem:[%s1 + $0x70] sm:$0xf]
  %v64 = vld [vmem:[%s1 + $0x74] sm:$0xf]
  %v65 = vld [vmem:[%s1 + $0x78] sm:$0xf]
  %v66 = vld [vmem:[%s1 + $0x7c] sm:$0xf]
  %v67 = vld [vmem:[%s1 + $0x80] sm:$0xf]
  %v68 = vld [vmem:[%s1 + $0x84] sm:$0xf]
  %v69 = vld [vmem:[%s1 + $0x88] sm:$0xf]
  %v70 = vld [vmem:[%s1 + $0x8c] sm:$0xf]
  %v71 = vld [vmem:[%s1 + $0x90] sm:$0xf]
  %v72 = vld [vmem:[%s1 + $0x94] sm:$0xf]
  %v73 = vld [vmem:[%s1 + $0x98] sm:$0xf]
  %v74 = vld [vmem:[%s1 + $0x9c] sm:$0xf]
  %v75 = vld [vmem:[%s1 + $0xa0] sm:$0xf]
  %v76 = vld [vmem:[%s1 + $0xa4] sm:$0xf]
  %v77 = vld [vmem:[%s1 + $0xa8] sm:$0xf]
  %v78 = vld [vmem:[%s1 + $0xac] sm:$0xf]
  %v79 = vld [vmem:[%s1 + $0xb0] sm:$0xf]
  %v80 = vld [vmem:[%s1 + $0xb4] sm:$0xf]
  %v81 = vld [vmem:[%s1 + $0xb8] sm:$0xf]
  %v82 = vld [vmem:[%s1 + $0xbc] sm:$0xf]
  %v83 = vld [vmem:[%s1 + $0xc0] sm:$0xf]
  %v84 = vld [vmem:[%s1 + $0xc4] sm:$0xf]
  %v85 = vld [vmem:[%s1 + $0xc8] sm:$0xf]
  %v86 = vld [vmem:[%s1 + $0xcc] sm:$0xf]
  %v87 = vld [vmem:[%s1 + $0xd0] sm:$0xf]
  %v88 = vld [vmem:[%s1 + $0xd4] sm:$0xf]
  %v89 = vld [vmem:[%s1 + $0xd8] sm:$0xf]
  %v90 = vld [vmem:[%s1 + $0xdc] sm:$0xf]
  %v91 = vld [vmem:[%s1 + $0xe0] sm:$0xf]
  %v92 = vld [vmem:[%s1 + $0xe4] sm:$0xf]
  %v93 = vld [vmem:[%s1 + $0xe8] sm:$0xf]
  %v94 = vld [vmem:[%s1 + $0xec] sm:$0xf]
  %v95 = vld [vmem:[%s1 + $0xf0] sm:$0xf]
  %v96 = vld [vmem:[%s1 + $0xf4] sm:$0xf]
  %v97 = vld [vmem:[%s1 + $0xf8] sm:$0xf]
  %v98 = vld [vmem:[%s1 + $0xfc] sm:$0xf]
  %v99 = vld [vmem:[%s1 + $0x100] sm:$0xf]
  %v100 = vld [vmem:[%s1 + $0x104] sm:$0xf]
  %v101 = vld [vmem:[%s1 + $0x108] sm:$0xf]
  %v102 = vld [vmem:[%s1 + $0x10c] sm:$0xf]
  %v103 = vld [vmem:[%s1 + $0x110] sm:$0xf]
  %v104 = vld [vmem:[%s1 + $0x114] sm:$0xf]
  %v105 = vld [vmem:[%s1 + $0x118] sm:$0xf]
  %v106 = vld [vmem:[%s1 + $0x11c] sm:$0xf]
  %v107 = vld [vmem:[%s1 + $0x120] sm:$0xf]
  %v108 = vld [vmem:[%s1 + $0x124] sm:$0xf]
  %v109 = vld [vmem:[%s1 + $0x128] sm:$0xf]
  %v110 = vld [vmem:[%s1 + $0x12c] sm:$0xf]
  %v111 = vld [vmem:[%s1 + $0x130] sm:$0xf]
  %v112 = vld [vmem:[%s1 + $0x134] sm:$0xf]
  %v113 = vld [vmem:[%s1 + $0x138] sm:$0xf]
  %v114 = vld [vmem:[%s1 + $0x13c] sm:$0xf]
  %v115 = vld [vmem:[%s1 + $0x140] sm:$0xf]
  %v116 = vld [vmem:[%s1 + $0x144] sm:$0xf]
  %v117 = vld [vmem:[%s1 + $0x148] sm:$0xf]
  %v118 = vld [vmem:[%s1 + $0x14c] sm:$0xf]
  %v119 = vld [vmem:[%s1 + $0x150] sm:$0xf]
  %v120 = vld [vmem:[%s1 + $0x154] sm:$0xf]
  %v121 = vld [vmem:[%s1 + $0x158] sm:$0xf]
  %v122 = vld [vmem:[%s1 + $0x15c] sm:$0xf]
  %v123 = vld [vmem:[%s1 + $0x160] sm:$0xf]
  %v124 = vld [vmem:[%s1 + $0x164] sm:$0xf]
  %v125 = vld [vmem:[%s1 + $0x168] sm:$0xf]
  %v126 = vld [vmem:[%s1 + $0x16c] sm:$0xf]
  %v127 = vld [vmem:[%s1 + $0x170] sm:$0xf]
  %v128 = vld [vmem:[%s1 + $0x174] sm:$0xf]
  %v129 = vld [vmem:[%s1 + $0x178] sm:$0xf]
  %v130 = vld [vmem:[%s1 + $0x17c] sm:$0xf]
  %v131 = vld [vmem:[%s1 + $0x180] sm:$0xf]
  %v132 = vld [vmem:[%s1 + $0x184] sm:$0xf]
  %v133 = vld [vmem:[%s1 + $0x188] sm:$0xf]
  %v134 = vld [vmem:[%s1 + $0x18c] sm:$0xf]
  %v135 = vld [vmem:[%s1 + $0x190] sm:$0xf]
  %v136 = vld [vmem:[%s1 + $0x194] sm:$0xf]
  %v137 = vld [vmem:[%s1 + $0x198] sm:$0xf]
  %v138 = vld [vmem:[%s1 + $0x19c] sm:$0xf]
  %v139 = vld [vmem:[%s1 + $0x1a0] sm:$0xf]
  %v140 = vld [vmem:[%s1 + $0x1a4] sm:$0xf]
  %v141 = vld [vmem:[%s1 + $0x1a8] sm:$0xf]
  %v142 = vld [vmem:[%s1 + $0x1ac] sm:$0xf]
  %v143 = vld [vmem:[%s1 + $0x1b0] sm:$0xf]
  %v144 = vld [vmem:[%s1 + $0x1b4] sm:$0xf]
  %v145 = vld [vmem:[%s1 + $0x1b8] sm:$0xf]
  %v146 = vld [vmem:[%s1 + $0x1bc] sm:$0xf]
  %v147 = vld [vmem:[%s1 + $0x1c0] sm:$0xf]
  %v148 = vld [vmem:[%s1 + $0x1c4] sm:$0xf]
  %v149 = vld [vmem:[%s1 + $0x1c8] sm:$0xf]
  %v150 = vld [vmem:[%s1 + $0x1cc] sm:$0xf]
  %v151 = vld [vmem:[%s1 + $0x1d0] sm:$0xf]
  %v152 = vld [vmem:[%s1 + $0x1d4] sm:$0xf]
  %v153 = vld [vmem:[%s1 + $0x1d8] sm:$0xf]
  %v154 = vld [vmem:[%s1 + $0x1dc] sm:$0xf]
  %v155 = vld [vmem:[%s1 + $0x1e0] sm:$0xf]
  %v156 = vld [vmem:[%s1 + $0x1e4] sm:$0xf]
  %v157 = vld [vmem:[%s1 + $0x1e8] sm:$0xf]
  %v158 = vld [vmem:[%s1 + $0x1ec] sm:$0xf]
  %v159 = vld [vmem:[%s1 + $0x1f0] sm:$0xf]
  %v160 = vld [vmem:[%s1 + $0x1f4] sm:$0xf]
  %v161 = vld [vmem:[%s1 + $0x1f8] sm:$0xf]
  %v162 = vld [vmem:[%s1 + $0x1fc] sm:$0xf]
  %v163 = vld [vmem:[%s1 + $0x200] sm:$0xf]
  %v164 = vld [vmem:[%s1 + $0x204] sm:$0xf]
  %v165 = vld [vmem:[%s1 + $0x208] sm:$0xf]
  %v166 = vld [vmem:[%s1 + $0x20c] sm:$0xf]
  %v167 = vld [vmem:[%s1 + $0x210] sm:$0xf]
  %v168 = vld [vmem:[%s1 + $0x214] sm:$0xf]
  %v169 = vld [vmem:[%s1 + $0x218] sm:$0xf]
  %v170 = vld [vmem:[%s1 + $0x21c] sm:$0xf]
  %v171 = vld [vmem:[%s1 + $0x220] sm:$0xf]
  %v172 = vld [vmem:[%s1 + $0x224] sm:$0xf]
  %v173 = vld [vmem:[%s1 + $0x228] sm:$0xf]
  %v174 = vld [vmem:[%s1 + $0x22c] sm:$0xf]
  %v175 = vld [vmem:[%s2] sm:$0x1]
  %v177 = vperm.slane %v175, 0
  %v199 = vunpack.c.l.b16 %v15
  %v200 = vunpack.c.h.b16 %v15
  %v201 = vunpack.c.l.b16 %v16
  %v202 = vunpack.c.h.b16 %v16
  %v203 = vunpack.c.l.b16 %v17
  %v204 = vunpack.c.h.b16 %v17
  %v205 = vunpack.c.l.b16 %v18
  %v206 = vunpack.c.h.b16 %v18
  %v207 = vunpack.c.l.b16 %v19
  %v208 = vunpack.c.l.b16 %v20
  %v209 = vunpack.c.h.b16 %v20
  %v210 = vunpack.c.l.b16 %v21
  %v211 = vunpack.c.h.b16 %v21
  %v212 = vunpack.c.l.b16 %v22
  %v213 = vunpack.c.h.b16 %v22
  %v214 = vunpack.c.l.b16 %v23
  %v215 = vunpack.c.h.b16 %v23
  %v216 = vunpack.c.l.b16 %v24
  %v217 = vunpack.c.l.b16 %v25
  %v218 = vunpack.c.h.b16 %v25
  %v219 = vunpack.c.l.b16 %v26
  %v220 = vunpack.c.h.b16 %v26
  %v221 = vunpack.c.l.b16 %v27
  %v222 = vunpack.c.h.b16 %v27
  %v223 = vunpack.c.l.b16 %v28
  %v224 = vunpack.c.h.b16 %v28
  %v225 = vunpack.c.l.b16 %v29
  %v226 = vunpack.c.l.b16 %v30
  %v227 = vunpack.c.h.b16 %v30
  %v228 = vunpack.c.l.b16 %v31
  %v229 = vunpack.c.h.b16 %v31
  %v230 = vunpack.c.l.b16 %v32
  %v231 = vunpack.c.h.b16 %v32
  %v232 = vunpack.c.l.b16 %v33
  %v233 = vunpack.c.h.b16 %v33
  %v234 = vunpack.c.l.b16 %v34
  %v235 = vpack.c.b16 %v208, %v199
  %v236 = vpack.c.b16 %v209, %v200
  %v237 = vpack.c.b16 %v210, %v201
  %v238 = vpack.c.b16 %v211, %v202
  %v239 = vpack.c.b16 %v212, %v203
  %v240 = vpack.c.b16 %v213, %v204
  %v241 = vpack.c.b16 %v214, %v205
  %v242 = vpack.c.b16 %v215, %v206
  %v243 = vpack.c.b16 %v216, %v207
  %v244 = vpack.c.b16 %v226, %v217
  %v245 = vpack.c.b16 %v227, %v218
  %v246 = vpack.c.b16 %v228, %v219
  %v247 = vpack.c.b16 %v229, %v220
  %v248 = vpack.c.b16 %v230, %v221
  %v249 = vpack.c.b16 %v231, %v222
  %v250 = vpack.c.b16 %v232, %v223
  %v251 = vpack.c.b16 %v233, %v224
  %v252 = vpack.c.b16 %v234, %v225
  %v409 = vunpack.c.l.b16 %v35
  %v410 = vunpack.c.l.b16 %v36
  %v411 = vunpack.c.l.b16 %v37
  %v412 = vunpack.c.l.b16 %v38
  %v413 = vunpack.c.l.b16 %v39
  %v414 = vunpack.c.l.b16 %v40
  %v415 = vunpack.c.l.b16 %v41
  %v416 = vunpack.c.l.b16 %v42
  %v417 = vunpack.c.l.b16 %v43
  %v418 = vunpack.c.l.b16 %v44
  %v419 = vunpack.c.l.b16 %v45
  %v420 = vunpack.c.l.b16 %v46
  %v421 = vunpack.c.l.b16 %v47
  %v422 = vunpack.c.l.b16 %v48
  %v423 = vunpack.c.l.b16 %v49
  %v424 = vunpack.c.l.b16 %v50
  %v425 = vunpack.c.l.b16 %v51
  %v426 = vunpack.c.l.b16 %v52
  %v427 = vunpack.c.l.b16 %v53
  %v428 = vunpack.c.l.b16 %v54
  %v429 = vunpack.c.l.b16 %v55
  %v430 = vunpack.c.l.b16 %v56
  %v431 = vunpack.c.l.b16 %v57
  %v432 = vunpack.c.l.b16 %v58
  %v433 = vunpack.c.l.b16 %v59
  %v434 = vunpack.c.l.b16 %v60
  %v435 = vunpack.c.l.b16 %v61
  %v436 = vunpack.c.l.b16 %v62
  %v437 = vunpack.c.l.b16 %v63
  %v438 = vunpack.c.l.b16 %v64
  %v439 = vunpack.c.l.b16 %v65
  %v440 = vunpack.c.l.b16 %v66
  %v441 = vunpack.c.l.b16 %v67
  %v442 = vunpack.c.l.b16 %v68
  %v443 = vunpack.c.l.b16 %v69
  %v444 = vunpack.c.l.b16 %v70
  %v445 = vunpack.c.l.b16 %v71
  %v446 = vunpack.c.l.b16 %v72
  %v447 = vunpack.c.l.b16 %v73
  %v448 = vunpack.c.l.b16 %v74
  %v449 = vunpack.c.l.b16 %v75
  %v450 = vunpack.c.l.b16 %v76
  %v451 = vunpack.c.l.b16 %v77
  %v452 = vunpack.c.l.b16 %v78
  %v453 = vunpack.c.l.b16 %v79
  %v454 = vunpack.c.l.b16 %v80
  %v455 = vunpack.c.l.b16 %v81
  %v456 = vunpack.c.l.b16 %v82
  %v457 = vunpack.c.l.b16 %v83
  %v458 = vunpack.c.l.b16 %v84
  %v459 = vunpack.c.l.b16 %v85
  %v460 = vunpack.c.l.b16 %v86
  %v461 = vunpack.c.l.b16 %v87
  %v462 = vunpack.c.l.b16 %v88
  %v463 = vunpack.c.l.b16 %v89
  %v464 = vunpack.c.l.b16 %v90
  %v465 = vunpack.c.l.b16 %v91
  %v466 = vunpack.c.l.b16 %v92
  %v467 = vunpack.c.l.b16 %v93
  %v468 = vunpack.c.l.b16 %v94
  %v469 = vunpack.c.l.b16 %v95
  %v470 = vunpack.c.l.b16 %v96
  %v471 = vunpack.c.l.b16 %v97
  %v472 = vunpack.c.l.b16 %v98
  %v473 = vunpack.c.l.b16 %v99
  %v474 = vunpack.c.l.b16 %v100
  %v475 = vunpack.c.l.b16 %v101
  %v476 = vunpack.c.l.b16 %v102
  %v477 = vunpack.c.l.b16 %v103
  %v478 = vunpack.c.l.b16 %v104
  %v479 = vunpack.c.l.b16 %v105
  %v480 = vunpack.c.l.b16 %v106
  %v481 = vunpack.c.l.b16 %v107
  %v482 = vunpack.c.l.b16 %v108
  %v483 = vunpack.c.l.b16 %v109
  %v484 = vunpack.c.l.b16 %v110
  %v485 = vunpack.c.l.b16 %v111
  %v486 = vunpack.c.l.b16 %v112
  %v487 = vunpack.c.l.b16 %v113
  %v488 = vunpack.c.l.b16 %v114
  %v489 = vunpack.c.l.b16 %v115
  %v490 = vunpack.c.l.b16 %v116
  %v491 = vunpack.c.l.b16 %v117
  %v492 = vunpack.c.l.b16 %v118
  %v493 = vunpack.c.l.b16 %v119
  %v494 = vunpack.c.l.b16 %v120
  %v495 = vunpack.c.l.b16 %v121
  %v496 = vunpack.c.l.b16 %v122
  %v497 = vunpack.c.l.b16 %v123
  %v498 = vunpack.c.l.b16 %v124
  %v499 = vunpack.c.l.b16 %v125
  %v500 = vunpack.c.l.b16 %v126
  %v501 = vunpack.c.l.b16 %v127
  %v502 = vunpack.c.l.b16 %v128
  %v503 = vunpack.c.l.b16 %v129
  %v504 = vunpack.c.l.b16 %v130
  %v505 = vunpack.c.l.b16 %v131
  %v506 = vunpack.c.l.b16 %v132
  %v507 = vunpack.c.l.b16 %v133
  %v508 = vunpack.c.l.b16 %v134
  %v509 = vunpack.c.l.b16 %v135
  %v510 = vunpack.c.l.b16 %v136
  %v511 = vunpack.c.l.b16 %v137
  %v512 = vunpack.c.l.b16 %v138
  %v513 = vunpack.c.l.b16 %v139
  %v514 = vunpack.c.l.b16 %v140
  %v515 = vunpack.c.l.b16 %v141
  %v516 = vunpack.c.l.b16 %v142
  %v517 = vunpack.c.l.b16 %v143
  %v518 = vunpack.c.l.b16 %v144
  %v519 = vunpack.c.l.b16 %v145
  %v520 = vunpack.c.l.b16 %v146
  %v521 = vunpack.c.l.b16 %v147
  %v522 = vunpack.c.l.b16 %v148
  %v523 = vunpack.c.l.b16 %v149
  %v524 = vunpack.c.l.b16 %v150
  %v525 = vunpack.c.l.b16 %v151
  %v526 = vunpack.c.l.b16 %v152
  %v527 = vunpack.c.l.b16 %v153
  %v528 = vunpack.c.l.b16 %v154
  %v529 = vunpack.c.l.b16 %v155
  %v530 = vunpack.c.l.b16 %v156
  %v531 = vunpack.c.l.b16 %v157
  %v532 = vunpack.c.l.b16 %v158
  %v533 = vunpack.c.l.b16 %v159
  %v534 = vunpack.c.l.b16 %v160
  %v535 = vunpack.c.l.b16 %v161
  %v536 = vunpack.c.l.b16 %v162
  %v537 = vunpack.c.l.b16 %v163
  %v538 = vunpack.c.l.b16 %v164
  %v539 = vunpack.c.l.b16 %v165
  %v540 = vunpack.c.l.b16 %v166
  %v541 = vunpack.c.l.b16 %v167
  %v542 = vunpack.c.l.b16 %v168
  %v543 = vunpack.c.l.b16 %v169
  %v544 = vunpack.c.l.b16 %v170
  %v545 = vunpack.c.l.b16 %v171
  %v546 = vunpack.c.l.b16 %v172
  %v547 = vunpack.c.l.b16 %v173
  %v548 = vunpack.c.l.b16 %v174
  %v549 = vpack.c.b16 %v410, %v409
  %v550 = vpack.c.b16 %v412, %v411
  %v551 = vpack.c.b16 %v414, %v413
  %v552 = vpack.c.b16 %v416, %v415
  %v553 = vpack.c.b16 %v418, %v417
  %v554 = vpack.c.b16 %v420, %v419
  %v555 = vpack.c.b16 %v422, %v421
  %v556 = vpack.c.b16 %v424, %v423
  %v557 = vpack.c.b16 %v426, %v425
  %v558 = vpack.c.b16 %v428, %v427
  %v559 = vpack.c.b16 %v430, %v429
  %v560 = vpack.c.b16 %v432, %v431
  %v561 = vpack.c.b16 %v434, %v433
  %v562 = vpack.c.b16 %v436, %v435
  %v563 = vpack.c.b16 %v438, %v437
  %v564 = vpack.c.b16 %v440, %v439
  %v565 = vpack.c.b16 %v442, %v441
  %v566 = vpack.c.b16 %v444, %v443
  %v567 = vpack.c.b16 %v446, %v445
  %v568 = vpack.c.b16 %v448, %v447
  %v569 = vpack.c.b16 %v450, %v449
  %v570 = vpack.c.b16 %v452, %v451
  %v571 = vpack.c.b16 %v454, %v453
  %v572 = vpack.c.b16 %v456, %v455
  %v573 = vpack.c.b16 %v458, %v457
  %v574 = vpack.c.b16 %v460, %v459
  %v575 = vpack.c.b16 %v462, %v461
  %v576 = vpack.c.b16 %v464, %v463
  %v577 = vpack.c.b16 %v466, %v465
  %v578 = vpack.c.b16 %v468, %v467
  %v579 = vpack.c.b16 %v470, %v469
  %v580 = vpack.c.b16 %v472, %v471
  %v581 = vpack.c.b16 %v474, %v473
  %v582 = vpack.c.b16 %v476, %v475
  %v583 = vpack.c.b16 %v478, %v477
  %v584 = vpack.c.b16 %v480, %v479
  %v585 = vpack.c.b16 %v482, %v481
  %v586 = vpack.c.b16 %v484, %v483
  %v587 = vpack.c.b16 %v486, %v485
  %v588 = vpack.c.b16 %v488, %v487
  %v589 = vpack.c.b16 %v490, %v489
  %v590 = vpack.c.b16 %v492, %v491
  %v591 = vpack.c.b16 %v494, %v493
  %v592 = vpack.c.b16 %v496, %v495
  %v593 = vpack.c.b16 %v498, %v497
  %v594 = vpack.c.b16 %v500, %v499
  %v595 = vpack.c.b16 %v502, %v501
  %v596 = vpack.c.b16 %v504, %v503
  %v597 = vpack.c.b16 %v506, %v505
  %v598 = vpack.c.b16 %v508, %v507
  %v599 = vpack.c.b16 %v510, %v509
  %v600 = vpack.c.b16 %v512, %v511
  %v601 = vpack.c.b16 %v514, %v513
  %v602 = vpack.c.b16 %v516, %v515
  %v603 = vpack.c.b16 %v518, %v517
  %v604 = vpack.c.b16 %v520, %v519
  %v605 = vpack.c.b16 %v522, %v521
  %v606 = vpack.c.b16 %v524, %v523
  %v607 = vpack.c.b16 %v526, %v525
  %v608 = vpack.c.b16 %v528, %v527
  %v609 = vpack.c.b16 %v530, %v529
  %v610 = vpack.c.b16 %v532, %v531
  %v611 = vpack.c.b16 %v534, %v533
  %v612 = vpack.c.b16 %v536, %v535
  %v613 = vpack.c.b16 %v538, %v537
  %v614 = vpack.c.b16 %v540, %v539
  %v615 = vpack.c.b16 %v542, %v541
  %v616 = vpack.c.b16 %v544, %v543
  %v617 = vpack.c.b16 %v546, %v545
  %v618 = vpack.c.b16 %v548, %v547
  %vm689 = vcmask 785408
  %v691 = vsel %vm689, %v243, 0
  %v694 = vsel %vm689, %v252, 0
  %696 = vmatpush.bf16.msra.mxu0 %v556
  %697 = vmatpush.bf16.msra.mxu0 %v555
  %698 = vmatpush.bf16.msra.mxu0 %v554
  %699 = vmatpush.bf16.msra.mxu0 %v553
  %700 = vmatpush.bf16.msra.mxu0 %v552
  %701 = vmatpush.bf16.msra.mxu0 %v551
  %702 = vmatpush.bf16.msra.mxu0 %v550
  %703 = vmatpush.bf16.msra.mxu0 %v549
  %704 = vmatmul.bf16.gmra.mxu0 %v235
  %v705 = vpop.f32.mrf.mxu0
  %v706 = vadd.f32 %v177, %v705
  %v707 = vpop.f32.mrf.mxu0
  %v708 = vadd.f32 %v177, %v707
  %709 = vmatmul.bf16.gmra.mxu0 %v244
  %v710 = vpop.f32.mrf.mxu0
  %v711 = vadd.f32 %v177, %v710
  %v712 = vpop.f32.mrf.mxu0
  %v713 = vadd.f32 %v177, %v712
  %714 = vdwg.mxu0
  %715 = vmatpush.bf16.msra.mxu0 %v564
  %716 = vmatpush.bf16.msra.mxu0 %v563
  %717 = vmatpush.bf16.msra.mxu0 %v562
  %718 = vmatpush.bf16.msra.mxu0 %v561
  %719 = vmatpush.bf16.msra.mxu0 %v560
  %720 = vmatpush.bf16.msra.mxu0 %v559
  %721 = vmatpush.bf16.msra.mxu0 %v558
  %722 = vmatpush.bf16.msra.mxu0 %v557
  %723 = vmatmul.bf16.gmra.mxu0 %v236
  %v724 = vpop.f32.mrf.mxu0
  %v725 = vadd.f32 %v706, %v724
  %v726 = vpop.f32.mrf.mxu0
  %v727 = vadd.f32 %v708, %v726
  %728 = vmatmul.bf16.gmra.mxu0 %v245
  %v729 = vpop.f32.mrf.mxu0
  %v730 = vadd.f32 %v711, %v729
  %v731 = vpop.f32.mrf.mxu0
  %v732 = vadd.f32 %v713, %v731
  %733 = vdwg.mxu0
  %734 = vmatpush.bf16.msra.mxu0 %v572
  %735 = vmatpush.bf16.msra.mxu0 %v571
  %736 = vmatpush.bf16.msra.mxu0 %v570
  %737 = vmatpush.bf16.msra.mxu0 %v569
  %738 = vmatpush.bf16.msra.mxu0 %v568
  %739 = vmatpush.bf16.msra.mxu0 %v567
  %740 = vmatpush.bf16.msra.mxu0 %v566
  %741 = vmatpush.bf16.msra.mxu0 %v565
  %742 = vmatmul.bf16.gmra.mxu0 %v237
  %v743 = vpop.f32.mrf.mxu0
  %v744 = vadd.f32 %v725, %v743
  %v745 = vpop.f32.mrf.mxu0
  %v746 = vadd.f32 %v727, %v745
  %747 = vmatmul.bf16.gmra.mxu0 %v246
  %v748 = vpop.f32.mrf.mxu0
  %v749 = vadd.f32 %v730, %v748
  %v750 = vpop.f32.mrf.mxu0
  %v751 = vadd.f32 %v732, %v750
  %752 = vdwg.mxu0
  %753 = vmatpush.bf16.msra.mxu0 %v580
  %754 = vmatpush.bf16.msra.mxu0 %v579
  %755 = vmatpush.bf16.msra.mxu0 %v578
  %756 = vmatpush.bf16.msra.mxu0 %v577
  %757 = vmatpush.bf16.msra.mxu0 %v576
  %758 = vmatpush.bf16.msra.mxu0 %v575
  %759 = vmatpush.bf16.msra.mxu0 %v574
  %760 = vmatpush.bf16.msra.mxu0 %v573
  %761 = vmatmul.bf16.gmra.mxu0 %v238
  %v762 = vpop.f32.mrf.mxu0
  %v763 = vadd.f32 %v744, %v762
  %v764 = vpop.f32.mrf.mxu0
  %v765 = vadd.f32 %v746, %v764
  %766 = vmatmul.bf16.gmra.mxu0 %v247
  %v767 = vpop.f32.mrf.mxu0
  %v768 = vadd.f32 %v749, %v767
  %v769 = vpop.f32.mrf.mxu0
  %v770 = vadd.f32 %v751, %v769
  %771 = vdwg.mxu0
  %772 = vmatpush.bf16.msra.mxu0 %v588
  %773 = vmatpush.bf16.msra.mxu0 %v587
  %774 = vmatpush.bf16.msra.mxu0 %v586
  %775 = vmatpush.bf16.msra.mxu0 %v585
  %776 = vmatpush.bf16.msra.mxu0 %v584
  %777 = vmatpush.bf16.msra.mxu0 %v583
  %778 = vmatpush.bf16.msra.mxu0 %v582
  %779 = vmatpush.bf16.msra.mxu0 %v581
  %780 = vmatmul.bf16.gmra.mxu0 %v239
  %v781 = vpop.f32.mrf.mxu0
  %v782 = vadd.f32 %v763, %v781
  %v783 = vpop.f32.mrf.mxu0
  %v784 = vadd.f32 %v765, %v783
  %785 = vmatmul.bf16.gmra.mxu0 %v248
  %v786 = vpop.f32.mrf.mxu0
  %v787 = vadd.f32 %v768, %v786
  %v788 = vpop.f32.mrf.mxu0
  %v789 = vadd.f32 %v770, %v788
  %790 = vdwg.mxu0
  %791 = vmatpush.bf16.msra.mxu0 %v596
  %792 = vmatpush.bf16.msra.mxu0 %v595
  %793 = vmatpush.bf16.msra.mxu0 %v594
  %794 = vmatpush.bf16.msra.mxu0 %v593
  %795 = vmatpush.bf16.msra.mxu0 %v592
  %796 = vmatpush.bf16.msra.mxu0 %v591
  %797 = vmatpush.bf16.msra.mxu0 %v590
  %798 = vmatpush.bf16.msra.mxu0 %v589
  %799 = vmatmul.bf16.gmra.mxu0 %v240
  %v800 = vpop.f32.mrf.mxu0
  %v801 = vadd.f32 %v782, %v800
  %v802 = vpop.f32.mrf.mxu0
  %v803 = vadd.f32 %v784, %v802
  %804 = vmatmul.bf16.gmra.mxu0 %v249
  %v805 = vpop.f32.mrf.mxu0
  %v806 = vadd.f32 %v787, %v805
  %v807 = vpop.f32.mrf.mxu0
  %v808 = vadd.f32 %v789, %v807
  %809 = vdwg.mxu0
  %810 = vmatpush.bf16.msra.mxu0 %v604
  %811 = vmatpush.bf16.msra.mxu0 %v603
  %812 = vmatpush.bf16.msra.mxu0 %v602
  %813 = vmatpush.bf16.msra.mxu0 %v601
  %814 = vmatpush.bf16.msra.mxu0 %v600
  %815 = vmatpush.bf16.msra.mxu0 %v599
  %816 = vmatpush.bf16.msra.mxu0 %v598
  %817 = vmatpush.bf16.msra.mxu0 %v597
  %818 = vmatmul.bf16.gmra.mxu0 %v241
  %v819 = vpop.f32.mrf.mxu0
  %v820 = vadd.f32 %v801, %v819
  %v821 = vpop.f32.mrf.mxu0
  %v822 = vadd.f32 %v803, %v821
  %823 = vmatmul.bf16.gmra.mxu0 %v250
  %v824 = vpop.f32.mrf.mxu0
  %v825 = vadd.f32 %v806, %v824
  %v826 = vpop.f32.mrf.mxu0
  %v827 = vadd.f32 %v808, %v826
  %828 = vdwg.mxu0
  %829 = vmatpush.bf16.msra.mxu0 %v612
  %830 = vmatpush.bf16.msra.mxu0 %v611
  %831 = vmatpush.bf16.msra.mxu0 %v610
  %832 = vmatpush.bf16.msra.mxu0 %v609
  %833 = vmatpush.bf16.msra.mxu0 %v608
  %834 = vmatpush.bf16.msra.mxu0 %v607
  %835 = vmatpush.bf16.msra.mxu0 %v606
  %836 = vmatpush.bf16.msra.mxu0 %v605
  %837 = vmatmul.bf16.gmra.mxu0 %v242
  %v838 = vpop.f32.mrf.mxu0
  %v839 = vadd.f32 %v820, %v838
  %v840 = vpop.f32.mrf.mxu0
  %v841 = vadd.f32 %v822, %v840
  %842 = vmatmul.bf16.gmra.mxu0 %v251
  %v843 = vpop.f32.mrf.mxu0
  %v844 = vadd.f32 %v825, %v843
  %v845 = vpop.f32.mrf.mxu0
  %v846 = vadd.f32 %v827, %v845
  %847 = vdwg.mxu0
  %848 = vmatpush.bf16.msra.mxu0 0
  %849 = vmatpush.bf16.msra.mxu0 0
  %850 = vmatpush.bf16.msra.mxu0 %v618
  %851 = vmatpush.bf16.msra.mxu0 %v617
  %852 = vmatpush.bf16.msra.mxu0 %v616
  %853 = vmatpush.bf16.msra.mxu0 %v615
  %854 = vmatpush.bf16.msra.mxu0 %v614
  %855 = vmatpush.bf16.msra.mxu0 %v613
  %856 = vmatmul.bf16.gmra.mxu0 %v691
  %v857 = vpop.f32.mrf.mxu0
  %v858 = vadd.f32 %v839, %v857
  %v859 = vpop.f32.mrf.mxu0
  %v860 = vadd.f32 %v841, %v859
  %861 = vmatmul.bf16.gmra.mxu0 %v694
  %v862 = vpop.f32.mrf.mxu0
  %v863 = vadd.f32 %v844, %v862
  %v864 = vpop.f32.mrf.mxu0
  %v865 = vadd.f32 %v846, %v864
  %866 = vdwg.mxu0
  %v867 = vmax.f32 %v858, 0.0
  %v868 = vmax.f32 %v860, 0.0
  %v869 = vmax.f32 %v863, 0.0
  %v870 = vmax.f32 %v865, 0.0
  %vm871 = vcmask 261120
  %872 = vst.msk [vmem:[%s3] sm:$0xff] %vm871, %v867
  %873 = vst.msk [vmem:[%s3 + $0x8] sm:$0xff] %vm871, %v868
  %874 = vst.msk [vmem:[%s3 + $0x10] sm:$0xff] %vm871, %v869
  %875 = vst.msk [vmem:[%s3 + $0x18] sm:$0xff] %vm871, %v870
  // Predicated region
  $region14: #{f0spec_forward.9} parent=0 // pred_check
    _
  $region15: #{f0spec_forward.9} parent=0 // pred_check_branch
    %877 = sbr.rel (0) target = $region17
  $region16: #{f0spec_forward.9} parent=0 // pred_region
    _
  $region17: #{f0spec_forward.9} parent=0 // pred_fallthru
    _
  // Predicated region
  $region18: #{f0spec_forward.9} parent=0 // pred_check
    _
  $region19: #{f0spec_forward.9} parent=0 // pred_check_branch
    %879 = sbr.rel (0) target = $region21
  $region20: #{f0spec_forward.9} parent=0 // pred_region
    _
  $region21: #{f0spec_forward.9} parent=0 // pred_fallthru
    _

// kernel: f0spec_forward.10
$region0: #{f0spec_forward.10}
  #allocation0 [shape = 'u32[]', space=smem, size = 0x4, offset = 0x4, fixed_abs, tag = 'smem constant byte address 0x4 - core index']
  #allocation1 [shape = 'u32[72,128]{1,0:T(1,128)}', space=vmem, size = 0x9000, scoped, tag = 'internal scratch']
  %s0 = inlined_call_operand.vmem [shape: bf16[16,1120], index: 0, kind: input, shape index: {}]
  %s1 = inlined_call_operand.vmem [shape: bf16[1120,32], index: 1, kind: input, shape index: {}]
  %s2 = inlined_call_operand.vmem [shape: f32[1,32], index: 2, kind: input, shape index: {}]
  %s3 = inlined_call_operand.vmem [shape: f32[16,32], index: 3, kind: output, shape index: {}]
  %s4 = sld [smem:[#allocation0]]
  $region22: #{f0spec_forward.10} parent=0
    _
  %s6 = ssub.s32 1, %s4
  %s7 = scalar_select 0, %s6, %s4
  // Predicated region
  $region2: #{f0spec_forward.10} parent=0 // pred_check
    _
  $region3: #{f0spec_forward.10} parent=0 // pred_check_branch
    %9 = sbr.rel (0) target = $region5
  $region4: #{f0spec_forward.10} parent=0 // pred_region
    _
  $region5: #{f0spec_forward.10} parent=0 // pred_fallthru
    _
  // Predicated region
  $region6: #{f0spec_forward.10} parent=0 // pred_check
    _
  $region7: #{f0spec_forward.10} parent=0 // pred_check_branch
    %11 = sbr.rel (0) target = $region9
  $region8: #{f0spec_forward.10} parent=0 // pred_region
    _
  $region9: #{f0spec_forward.10} parent=0 // pred_fallthru
    _
  // Predicated region
  $region10: #{f0spec_forward.10} parent=0 // pred_check
    _
  $region11: #{f0spec_forward.10} parent=0 // pred_check_branch
    %13 = sbr.rel (0) target = $region13
  $region12: #{f0spec_forward.10} parent=0 // pred_region
    _
  $region13: #{f0spec_forward.10} parent=0 // pred_fallthru
    _
  %v15 = vld [vmem:[%s0] sm:$0xff]
  %v16 = vld [vmem:[%s0 + $0x8] sm:$0xff]
  %v17 = vld [vmem:[%s0 + $0x10] sm:$0xff]
  %v18 = vld [vmem:[%s0 + $0x18] sm:$0xff]
  %v19 = vld [vmem:[%s0 + $0x20] sm:$0xf]
  %v20 = vld [vmem:[%s0 + $0x24] sm:$0xff]
  %v21 = vld [vmem:[%s0 + $0x2c] sm:$0xff]
  %v22 = vld [vmem:[%s0 + $0x34] sm:$0xff]
  %v23 = vld [vmem:[%s0 + $0x3c] sm:$0xff]
  %v24 = vld [vmem:[%s0 + $0x44] sm:$0xf]
  %v25 = vld [vmem:[%s1] sm:$0xf]
  %v26 = vld [vmem:[%s1 + $0x4] sm:$0xf]
  %v27 = vld [vmem:[%s1 + $0x8] sm:$0xf]
  %v28 = vld [vmem:[%s1 + $0xc] sm:$0xf]
  %v29 = vld [vmem:[%s1 + $0x10] sm:$0xf]
  %v30 = vld [vmem:[%s1 + $0x14] sm:$0xf]
  %v31 = vld [vmem:[%s1 + $0x18] sm:$0xf]
  %v32 = vld [vmem:[%s1 + $0x1c] sm:$0xf]
  %v33 = vld [vmem:[%s1 + $0x20] sm:$0xf]
  %v34 = vld [vmem:[%s1 + $0x24] sm:$0xf]
  %v35 = vld [vmem:[%s1 + $0x28] sm:$0xf]
  %v36 = vld [vmem:[%s1 + $0x2c] sm:$0xf]
  %v37 = vld [vmem:[%s1 + $0x30] sm:$0xf]
  %v38 = vld [vmem:[%s1 + $0x34] sm:$0xf]
  %v39 = vld [vmem:[%s1 + $0x38] sm:$0xf]
  %v40 = vld [vmem:[%s1 + $0x3c] sm:$0xf]
  %v41 = vld [vmem:[%s1 + $0x40] sm:$0xf]
  %v42 = vld [vmem:[%s1 + $0x44] sm:$0xf]
  %v43 = vld [vmem:[%s1 + $0x48] sm:$0xf]
  %v44 = vld [vmem:[%s1 + $0x4c] sm:$0xf]
  %v45 = vld [vmem:[%s1 + $0x50] sm:$0xf]
  %v46 = vld [vmem:[%s1 + $0x54] sm:$0xf]
  %v47 = vld [vmem:[%s1 + $0x58] sm:$0xf]
  %v48 = vld [vmem:[%s1 + $0x5c] sm:$0xf]
  %v49 = vld [vmem:[%s1 + $0x60] sm:$0xf]
  %v50 = vld [vmem:[%s1 + $0x64] sm:$0xf]
  %v51 = vld [vmem:[%s1 + $0x68] sm:$0xf]
  %v52 = vld [vmem:[%s1 + $0x6c] sm:$0xf]
  %v53 = vld [vmem:[%s1 + $0x70] sm:$0xf]
  %v54 = vld [vmem:[%s1 + $0x74] sm:$0xf]
  %v55 = vld [vmem:[%s1 + $0x78] sm:$0xf]
  %v56 = vld [vmem:[%s1 + $0x7c] sm:$0xf]
  %v57 = vld [vmem:[%s1 + $0x80] sm:$0xf]
  %v58 = vld [vmem:[%s1 + $0x84] sm:$0xf]
  %v59 = vld [vmem:[%s1 + $0x88] sm:$0xf]
  %v60 = vld [vmem:[%s1 + $0x8c] sm:$0xf]
  %v61 = vld [vmem:[%s1 + $0x90] sm:$0xf]
  %v62 = vld [vmem:[%s1 + $0x94] sm:$0xf]
  %v63 = vld [vmem:[%s1 + $0x98] sm:$0xf]
  %v64 = vld [vmem:[%s1 + $0x9c] sm:$0xf]
  %v65 = vld [vmem:[%s1 + $0xa0] sm:$0xf]
  %v66 = vld [vmem:[%s1 + $0xa4] sm:$0xf]
  %v67 = vld [vmem:[%s1 + $0xa8] sm:$0xf]
  %v68 = vld [vmem:[%s1 + $0xac] sm:$0xf]
  %v69 = vld [vmem:[%s1 + $0xb0] sm:$0xf]
  %v70 = vld [vmem:[%s1 + $0xb4] sm:$0xf]
  %v71 = vld [vmem:[%s1 + $0xb8] sm:$0xf]
  %v72 = vld [vmem:[%s1 + $0xbc] sm:$0xf]
  %v73 = vld [vmem:[%s1 + $0xc0] sm:$0xf]
  %v74 = vld [vmem:[%s1 + $0xc4] sm:$0xf]
  %v75 = vld [vmem:[%s1 + $0xc8] sm:$0xf]
  %v76 = vld [vmem:[%s1 + $0xcc] sm:$0xf]
  %v77 = vld [vmem:[%s1 + $0xd0] sm:$0xf]
  %v78 = vld [vmem:[%s1 + $0xd4] sm:$0xf]
  %v79 = vld [vmem:[%s1 + $0xd8] sm:$0xf]
  %v80 = vld [vmem:[%s1 + $0xdc] sm:$0xf]
  %v81 = vld [vmem:[%s1 + $0xe0] sm:$0xf]
  %v82 = vld [vmem:[%s1 + $0xe4] sm:$0xf]
  %v83 = vld [vmem:[%s1 + $0xe8] sm:$0xf]
  %v84 = vld [vmem:[%s1 + $0xec] sm:$0xf]
  %v85 = vld [vmem:[%s1 + $0xf0] sm:$0xf]
  %v86 = vld [vmem:[%s1 + $0xf4] sm:$0xf]
  %v87 = vld [vmem:[%s1 + $0xf8] sm:$0xf]
  %v88 = vld [vmem:[%s1 + $0xfc] sm:$0xf]
  %v89 = vld [vmem:[%s1 + $0x100] sm:$0xf]
  %v90 = vld [vmem:[%s1 + $0x104] sm:$0xf]
  %v91 = vld [vmem:[%s1 + $0x108] sm:$0xf]
  %v92 = vld [vmem:[%s1 + $0x10c] sm:$0xf]
  %v93 = vld [vmem:[%s1 + $0x110] sm:$0xf]
  %v94 = vld [vmem:[%s1 + $0x114] sm:$0xf]
  %v95 = vld [vmem:[%s1 + $0x118] sm:$0xf]
  %v96 = vld [vmem:[%s1 + $0x11c] sm:$0xf]
  %v97 = vld [vmem:[%s1 + $0x120] sm:$0xf]
  %v98 = vld [vmem:[%s1 + $0x124] sm:$0xf]
  %v99 = vld [vmem:[%s1 + $0x128] sm:$0xf]
  %v100 = vld [vmem:[%s1 + $0x12c] sm:$0xf]
  %v101 = vld [vmem:[%s1 + $0x130] sm:$0xf]
  %v102 = vld [vmem:[%s1 + $0x134] sm:$0xf]
  %v103 = vld [vmem:[%s1 + $0x138] sm:$0xf]
  %v104 = vld [vmem:[%s1 + $0x13c] sm:$0xf]
  %v105 = vld [vmem:[%s1 + $0x140] sm:$0xf]
  %v106 = vld [vmem:[%s1 + $0x144] sm:$0xf]
  %v107 = vld [vmem:[%s1 + $0x148] sm:$0xf]
  %v108 = vld [vmem:[%s1 + $0x14c] sm:$0xf]
  %v109 = vld [vmem:[%s1 + $0x150] sm:$0xf]
  %v110 = vld [vmem:[%s1 + $0x154] sm:$0xf]
  %v111 = vld [vmem:[%s1 + $0x158] sm:$0xf]
  %v112 = vld [vmem:[%s1 + $0x15c] sm:$0xf]
  %v113 = vld [vmem:[%s1 + $0x160] sm:$0xf]
  %v114 = vld [vmem:[%s1 + $0x164] sm:$0xf]
  %v115 = vld [vmem:[%s1 + $0x168] sm:$0xf]
  %v116 = vld [vmem:[%s1 + $0x16c] sm:$0xf]
  %v117 = vld [vmem:[%s1 + $0x170] sm:$0xf]
  %v118 = vld [vmem:[%s1 + $0x174] sm:$0xf]
  %v119 = vld [vmem:[%s1 + $0x178] sm:$0xf]
  %v120 = vld [vmem:[%s1 + $0x17c] sm:$0xf]
  %v121 = vld [vmem:[%s1 + $0x180] sm:$0xf]
  %v122 = vld [vmem:[%s1 + $0x184] sm:$0xf]
  %v123 = vld [vmem:[%s1 + $0x188] sm:$0xf]
  %v124 = vld [vmem:[%s1 + $0x18c] sm:$0xf]
  %v125 = vld [vmem:[%s1 + $0x190] sm:$0xf]
  %v126 = vld [vmem:[%s1 + $0x194] sm:$0xf]
  %v127 = vld [vmem:[%s1 + $0x198] sm:$0xf]
  %v128 = vld [vmem:[%s1 + $0x19c] sm:$0xf]
  %v129 = vld [vmem:[%s1 + $0x1a0] sm:$0xf]
  %v130 = vld [vmem:[%s1 + $0x1a4] sm:$0xf]
  %v131 = vld [vmem:[%s1 + $0x1a8] sm:$0xf]
  %v132 = vld [vmem:[%s1 + $0x1ac] sm:$0xf]
  %v133 = vld [vmem:[%s1 + $0x1b0] sm:$0xf]
  %v134 = vld [vmem:[%s1 + $0x1b4] sm:$0xf]
  %v135 = vld [vmem:[%s1 + $0x1b8] sm:$0xf]
  %v136 = vld [vmem:[%s1 + $0x1bc] sm:$0xf]
  %v137 = vld [vmem:[%s1 + $0x1c0] sm:$0xf]
  %v138 = vld [vmem:[%s1 + $0x1c4] sm:$0xf]
  %v139 = vld [vmem:[%s1 + $0x1c8] sm:$0xf]
  %v140 = vld [vmem:[%s1 + $0x1cc] sm:$0xf]
  %v141 = vld [vmem:[%s1 + $0x1d0] sm:$0xf]
  %v142 = vld [vmem:[%s1 + $0x1d4] sm:$0xf]
  %v143 = vld [vmem:[%s1 + $0x1d8] sm:$0xf]
  %v144 = vld [vmem:[%s1 + $0x1dc] sm:$0xf]
  %v145 = vld [vmem:[%s1 + $0x1e0] sm:$0xf]
  %v146 = vld [vmem:[%s1 + $0x1e4] sm:$0xf]
  %v147 = vld [vmem:[%s1 + $0x1e8] sm:$0xf]
  %v148 = vld [vmem:[%s1 + $0x1ec] sm:$0xf]
  %v149 = vld [vmem:[%s1 + $0x1f0] sm:$0xf]
  %v150 = vld [vmem:[%s1 + $0x1f4] sm:$0xf]
  %v151 = vld [vmem:[%s1 + $0x1f8] sm:$0xf]
  %v152 = vld [vmem:[%s1 + $0x1fc] sm:$0xf]
  %v153 = vld [vmem:[%s1 + $0x200] sm:$0xf]
  %v154 = vld [vmem:[%s1 + $0x204] sm:$0xf]
  %v155 = vld [vmem:[%s1 + $0x208] sm:$0xf]
  %v156 = vld [vmem:[%s1 + $0x20c] sm:$0xf]
  %v157 = vld [vmem:[%s1 + $0x210] sm:$0xf]
  %v158 = vld [vmem:[%s1 + $0x214] sm:$0xf]
  %v159 = vld [vmem:[%s1 + $0x218] sm:$0xf]
  %v160 = vld [vmem:[%s1 + $0x21c] sm:$0xf]
  %v161 = vld [vmem:[%s1 + $0x220] sm:$0xf]
  %v162 = vld [vmem:[%s1 + $0x224] sm:$0xf]
  %v163 = vld [vmem:[%s1 + $0x228] sm:$0xf]
  %v164 = vld [vmem:[%s1 + $0x22c] sm:$0xf]
  %v165 = vld [vmem:[%s2] sm:$0x1]
  %v167 = vperm.slane %v165, 0
  %v179 = vunpack.c.l.b16 %v15
  %v180 = vunpack.c.h.b16 %v15
  %v181 = vunpack.c.l.b16 %v16
  %v182 = vunpack.c.h.b16 %v16
  %v183 = vunpack.c.l.b16 %v17
  %v184 = vunpack.c.h.b16 %v17
  %v185 = vunpack.c.l.b16 %v18
  %v186 = vunpack.c.h.b16 %v18
  %v187 = vunpack.c.l.b16 %v19
  %v188 = vunpack.c.l.b16 %v20
  %v189 = vunpack.c.h.b16 %v20
  %v190 = vunpack.c.l.b16 %v21
  %v191 = vunpack.c.h.b16 %v21
  %v192 = vunpack.c.l.b16 %v22
  %v193 = vunpack.c.h.b16 %v22
  %v194 = vunpack.c.l.b16 %v23
  %v195 = vunpack.c.h.b16 %v23
  %v196 = vunpack.c.l.b16 %v24
  %v197 = vpack.c.b16 %v188, %v179
  %v198 = vpack.c.b16 %v189, %v180
  %v199 = vpack.c.b16 %v190, %v181
  %v200 = vpack.c.b16 %v191, %v182
  %v201 = vpack.c.b16 %v192, %v183
  %v202 = vpack.c.b16 %v193, %v184
  %v203 = vpack.c.b16 %v194, %v185
  %v204 = vpack.c.b16 %v195, %v186
  %v205 = vpack.c.b16 %v196, %v187
  %v354 = vunpack.c.l.b16 %v25
  %v355 = vunpack.c.l.b16 %v26
  %v356 = vunpack.c.l.b16 %v27
  %v357 = vunpack.c.l.b16 %v28
  %v358 = vunpack.c.l.b16 %v29
  %v359 = vunpack.c.l.b16 %v30
  %v360 = vunpack.c.l.b16 %v31
  %v361 = vunpack.c.l.b16 %v32
  %v362 = vunpack.c.l.b16 %v33
  %v363 = vunpack.c.l.b16 %v34
  %v364 = vunpack.c.l.b16 %v35
  %v365 = vunpack.c.l.b16 %v36
  %v366 = vunpack.c.l.b16 %v37
  %v367 = vunpack.c.l.b16 %v38
  %v368 = vunpack.c.l.b16 %v39
  %v369 = vunpack.c.l.b16 %v40
  %v370 = vunpack.c.l.b16 %v41
  %v371 = vunpack.c.l.b16 %v42
  %v372 = vunpack.c.l.b16 %v43
  %v373 = vunpack.c.l.b16 %v44
  %v374 = vunpack.c.l.b16 %v45
  %v375 = vunpack.c.l.b16 %v46
  %v376 = vunpack.c.l.b16 %v47
  %v377 = vunpack.c.l.b16 %v48
  %v378 = vunpack.c.l.b16 %v49
  %v379 = vunpack.c.l.b16 %v50
  %v380 = vunpack.c.l.b16 %v51
  %v381 = vunpack.c.l.b16 %v52
  %v382 = vunpack.c.l.b16 %v53
  %v383 = vunpack.c.l.b16 %v54
  %v384 = vunpack.c.l.b16 %v55
  %v385 = vunpack.c.l.b16 %v56
  %v386 = vunpack.c.l.b16 %v57
  %v387 = vunpack.c.l.b16 %v58
  %v388 = vunpack.c.l.b16 %v59
  %v389 = vunpack.c.l.b16 %v60
  %v390 = vunpack.c.l.b16 %v61
  %v391 = vunpack.c.l.b16 %v62
  %v392 = vunpack.c.l.b16 %v63
  %v393 = vunpack.c.l.b16 %v64
  %v394 = vunpack.c.l.b16 %v65
  %v395 = vunpack.c.l.b16 %v66
  %v396 = vunpack.c.l.b16 %v67
  %v397 = vunpack.c.l.b16 %v68
  %v398 = vunpack.c.l.b16 %v69
  %v399 = vunpack.c.l.b16 %v70
  %v400 = vunpack.c.l.b16 %v71
  %v401 = vunpack.c.l.b16 %v72
  %v402 = vunpack.c.l.b16 %v73
  %v403 = vunpack.c.l.b16 %v74
  %v404 = vunpack.c.l.b16 %v75
  %v405 = vunpack.c.l.b16 %v76
  %v406 = vunpack.c.l.b16 %v77
  %v407 = vunpack.c.l.b16 %v78
  %v408 = vunpack.c.l.b16 %v79
  %v409 = vunpack.c.l.b16 %v80
  %v410 = vunpack.c.l.b16 %v81
  %v411 = vunpack.c.l.b16 %v82
  %v412 = vunpack.c.l.b16 %v83
  %v413 = vunpack.c.l.b16 %v84
  %v414 = vunpack.c.l.b16 %v85
  %v415 = vunpack.c.l.b16 %v86
  %v416 = vunpack.c.l.b16 %v87
  %v417 = vunpack.c.l.b16 %v88
  %v418 = vunpack.c.l.b16 %v89
  %v419 = vunpack.c.l.b16 %v90
  %v420 = vunpack.c.l.b16 %v91
  %v421 = vunpack.c.l.b16 %v92
  %v422 = vunpack.c.l.b16 %v93
  %v423 = vunpack.c.l.b16 %v94
  %v424 = vunpack.c.l.b16 %v95
  %v425 = vunpack.c.l.b16 %v96
  %v426 = vunpack.c.l.b16 %v97
  %v427 = vunpack.c.l.b16 %v98
  %v428 = vunpack.c.l.b16 %v99
  %v429 = vunpack.c.l.b16 %v100
  %v430 = vunpack.c.l.b16 %v101
  %v431 = vunpack.c.l.b16 %v102
  %v432 = vunpack.c.l.b16 %v103
  %v433 = vunpack.c.l.b16 %v104
  %v434 = vunpack.c.l.b16 %v105
  %v435 = vunpack.c.l.b16 %v106
  %v436 = vunpack.c.l.b16 %v107
  %v437 = vunpack.c.l.b16 %v108
  %v438 = vunpack.c.l.b16 %v109
  %v439 = vunpack.c.l.b16 %v110
  %v440 = vunpack.c.l.b16 %v111
  %v441 = vunpack.c.l.b16 %v112
  %v442 = vunpack.c.l.b16 %v113
  %v443 = vunpack.c.l.b16 %v114
  %v444 = vunpack.c.l.b16 %v115
  %v445 = vunpack.c.l.b16 %v116
  %v446 = vunpack.c.l.b16 %v117
  %v447 = vunpack.c.l.b16 %v118
  %v448 = vunpack.c.l.b16 %v119
  %v449 = vunpack.c.l.b16 %v120
  %v450 = vunpack.c.l.b16 %v121
  %v451 = vunpack.c.l.b16 %v122
  %v452 = vunpack.c.l.b16 %v123
  %v453 = vunpack.c.l.b16 %v124
  %v454 = vunpack.c.l.b16 %v125
  %v455 = vunpack.c.l.b16 %v126
  %v456 = vunpack.c.l.b16 %v127
  %v457 = vunpack.c.l.b16 %v128
  %v458 = vunpack.c.l.b16 %v129
  %v459 = vunpack.c.l.b16 %v130
  %v460 = vunpack.c.l.b16 %v131
  %v461 = vunpack.c.l.b16 %v132
  %v462 = vunpack.c.l.b16 %v133
  %v463 = vunpack.c.l.b16 %v134
  %v464 = vunpack.c.l.b16 %v135
  %v465 = vunpack.c.l.b16 %v136
  %v466 = vunpack.c.l.b16 %v137
  %v467 = vunpack.c.l.b16 %v138
  %v468 = vunpack.c.l.b16 %v139
  %v469 = vunpack.c.l.b16 %v140
  %v470 = vunpack.c.l.b16 %v141
  %v471 = vunpack.c.l.b16 %v142
  %v472 = vunpack.c.l.b16 %v143
  %v473 = vunpack.c.l.b16 %v144
  %v474 = vunpack.c.l.b16 %v145
  %v475 = vunpack.c.l.b16 %v146
  %v476 = vunpack.c.l.b16 %v147
  %v477 = vunpack.c.l.b16 %v148
  %v478 = vunpack.c.l.b16 %v149
  %v479 = vunpack.c.l.b16 %v150
  %v480 = vunpack.c.l.b16 %v151
  %v481 = vunpack.c.l.b16 %v152
  %v482 = vunpack.c.l.b16 %v153
  %v483 = vunpack.c.l.b16 %v154
  %v484 = vunpack.c.l.b16 %v155
  %v485 = vunpack.c.l.b16 %v156
  %v486 = vunpack.c.l.b16 %v157
  %v487 = vunpack.c.l.b16 %v158
  %v488 = vunpack.c.l.b16 %v159
  %v489 = vunpack.c.l.b16 %v160
  %v490 = vunpack.c.l.b16 %v161
  %v491 = vunpack.c.l.b16 %v162
  %v492 = vunpack.c.l.b16 %v163
  %v493 = vunpack.c.l.b16 %v164
  %v494 = vpack.c.b16 %v355, %v354
  %v495 = vpack.c.b16 %v357, %v356
  %v496 = vpack.c.b16 %v359, %v358
  %v497 = vpack.c.b16 %v361, %v360
  %v498 = vpack.c.b16 %v363, %v362
  %v499 = vpack.c.b16 %v365, %v364
  %v500 = vpack.c.b16 %v367, %v366
  %v501 = vpack.c.b16 %v369, %v368
  %v502 = vpack.c.b16 %v371, %v370
  %v503 = vpack.c.b16 %v373, %v372
  %v504 = vpack.c.b16 %v375, %v374
  %v505 = vpack.c.b16 %v377, %v376
  %v506 = vpack.c.b16 %v379, %v378
  %v507 = vpack.c.b16 %v381, %v380
  %v508 = vpack.c.b16 %v383, %v382
  %v509 = vpack.c.b16 %v385, %v384
  %v510 = vpack.c.b16 %v387, %v386
  %v511 = vpack.c.b16 %v389, %v388
  %v512 = vpack.c.b16 %v391, %v390
  %v513 = vpack.c.b16 %v393, %v392
  %v514 = vpack.c.b16 %v395, %v394
  %v515 = vpack.c.b16 %v397, %v396
  %v516 = vpack.c.b16 %v399, %v398
  %v517 = vpack.c.b16 %v401, %v400
  %v518 = vpack.c.b16 %v403, %v402
  %v519 = vpack.c.b16 %v405, %v404
  %v520 = vpack.c.b16 %v407, %v406
  %v521 = vpack.c.b16 %v409, %v408
  %v522 = vpack.c.b16 %v411, %v410
  %v523 = vpack.c.b16 %v413, %v412
  %v524 = vpack.c.b16 %v415, %v414
  %v525 = vpack.c.b16 %v417, %v416
  %v526 = vpack.c.b16 %v419, %v418
  %v527 = vpack.c.b16 %v421, %v420
  %v528 = vpack.c.b16 %v423, %v422
  %v529 = vpack.c.b16 %v425, %v424
  %v530 = vpack.c.b16 %v427, %v426
  %v531 = vpack.c.b16 %v429, %v428
  %v532 = vpack.c.b16 %v431, %v430
  %v533 = vpack.c.b16 %v433, %v432
  %v534 = vpack.c.b16 %v435, %v434
  %v535 = vpack.c.b16 %v437, %v436
  %v536 = vpack.c.b16 %v439, %v438
  %v537 = vpack.c.b16 %v441, %v440
  %v538 = vpack.c.b16 %v443, %v442
  %v539 = vpack.c.b16 %v445, %v444
  %v540 = vpack.c.b16 %v447, %v446
  %v541 = vpack.c.b16 %v449, %v448
  %v542 = vpack.c.b16 %v451, %v450
  %v543 = vpack.c.b16 %v453, %v452
  %v544 = vpack.c.b16 %v455, %v454
  %v545 = vpack.c.b16 %v457, %v456
  %v546 = vpack.c.b16 %v459, %v458
  %v547 = vpack.c.b16 %v461, %v460
  %v548 = vpack.c.b16 %v463, %v462
  %v549 = vpack.c.b16 %v465, %v464
  %v550 = vpack.c.b16 %v467, %v466
  %v551 = vpack.c.b16 %v469, %v468
  %v552 = vpack.c.b16 %v471, %v470
  %v553 = vpack.c.b16 %v473, %v472
  %v554 = vpack.c.b16 %v475, %v474
  %v555 = vpack.c.b16 %v477, %v476
  %v556 = vpack.c.b16 %v479, %v478
  %v557 = vpack.c.b16 %v481, %v480
  %v558 = vpack.c.b16 %v483, %v482
  %v559 = vpack.c.b16 %v485, %v484
  %v560 = vpack.c.b16 %v487, %v486
  %v561 = vpack.c.b16 %v489, %v488
  %v562 = vpack.c.b16 %v491, %v490
  %v563 = vpack.c.b16 %v493, %v492
  %vm634 = vcmask 785408
  %v636 = vsel %vm634, %v205, 0
  %638 = vmatpush.bf16.msra.mxu0 %v501
  %639 = vmatpush.bf16.msra.mxu0 %v500
  %640 = vmatpush.bf16.msra.mxu0 %v499
  %641 = vmatpush.bf16.msra.mxu0 %v498
  %642 = vmatpush.bf16.msra.mxu0 %v497
  %643 = vmatpush.bf16.msra.mxu0 %v496
  %644 = vmatpush.bf16.msra.mxu0 %v495
  %645 = vmatpush.bf16.msra.mxu0 %v494
  %646 = vmatmul.bf16.gmra.mxu0 %v197
  %v647 = vpop.f32.mrf.mxu0
  %v648 = vadd.f32 %v167, %v647
  %v649 = vpop.f32.mrf.mxu0
  %v650 = vadd.f32 %v167, %v649
  %651 = vdwg.mxu0
  %652 = vmatpush.bf16.msra.mxu0 %v509
  %653 = vmatpush.bf16.msra.mxu0 %v508
  %654 = vmatpush.bf16.msra.mxu0 %v507
  %655 = vmatpush.bf16.msra.mxu0 %v506
  %656 = vmatpush.bf16.msra.mxu0 %v505
  %657 = vmatpush.bf16.msra.mxu0 %v504
  %658 = vmatpush.bf16.msra.mxu0 %v503
  %659 = vmatpush.bf16.msra.mxu0 %v502
  %660 = vmatmul.bf16.gmra.mxu0 %v198
  %v661 = vpop.f32.mrf.mxu0
  %v662 = vadd.f32 %v648, %v661
  %v663 = vpop.f32.mrf.mxu0
  %v664 = vadd.f32 %v650, %v663
  %665 = vdwg.mxu0
  %666 = vmatpush.bf16.msra.mxu0 %v517
  %667 = vmatpush.bf16.msra.mxu0 %v516
  %668 = vmatpush.bf16.msra.mxu0 %v515
  %669 = vmatpush.bf16.msra.mxu0 %v514
  %670 = vmatpush.bf16.msra.mxu0 %v513
  %671 = vmatpush.bf16.msra.mxu0 %v512
  %672 = vmatpush.bf16.msra.mxu0 %v511
  %673 = vmatpush.bf16.msra.mxu0 %v510
  %674 = vmatmul.bf16.gmra.mxu0 %v199
  %v675 = vpop.f32.mrf.mxu0
  %v676 = vadd.f32 %v662, %v675
  %v677 = vpop.f32.mrf.mxu0
  %v678 = vadd.f32 %v664, %v677
  %679 = vdwg.mxu0
  %680 = vmatpush.bf16.msra.mxu0 %v525
  %681 = vmatpush.bf16.msra.mxu0 %v524
  %682 = vmatpush.bf16.msra.mxu0 %v523
  %683 = vmatpush.bf16.msra.mxu0 %v522
  %684 = vmatpush.bf16.msra.mxu0 %v521
  %685 = vmatpush.bf16.msra.mxu0 %v520
  %686 = vmatpush.bf16.msra.mxu0 %v519
  %687 = vmatpush.bf16.msra.mxu0 %v518
  %688 = vmatmul.bf16.gmra.mxu0 %v200
  %v689 = vpop.f32.mrf.mxu0
  %v690 = vadd.f32 %v676, %v689
  %v691 = vpop.f32.mrf.mxu0
  %v692 = vadd.f32 %v678, %v691
  %693 = vdwg.mxu0
  %694 = vmatpush.bf16.msra.mxu0 %v533
  %695 = vmatpush.bf16.msra.mxu0 %v532
  %696 = vmatpush.bf16.msra.mxu0 %v531
  %697 = vmatpush.bf16.msra.mxu0 %v530
  %698 = vmatpush.bf16.msra.mxu0 %v529
  %699 = vmatpush.bf16.msra.mxu0 %v528
  %700 = vmatpush.bf16.msra.mxu0 %v527
  %701 = vmatpush.bf16.msra.mxu0 %v526
  %702 = vmatmul.bf16.gmra.mxu0 %v201
  %v703 = vpop.f32.mrf.mxu0
  %v704 = vadd.f32 %v690, %v703
  %v705 = vpop.f32.mrf.mxu0
  %v706 = vadd.f32 %v692, %v705
  %707 = vdwg.mxu0
  %708 = vmatpush.bf16.msra.mxu0 %v541
  %709 = vmatpush.bf16.msra.mxu0 %v540
  %710 = vmatpush.bf16.msra.mxu0 %v539
  %711 = vmatpush.bf16.msra.mxu0 %v538
  %712 = vmatpush.bf16.msra.mxu0 %v537
  %713 = vmatpush.bf16.msra.mxu0 %v536
  %714 = vmatpush.bf16.msra.mxu0 %v535
  %715 = vmatpush.bf16.msra.mxu0 %v534
  %716 = vmatmul.bf16.gmra.mxu0 %v202
  %v717 = vpop.f32.mrf.mxu0
  %v718 = vadd.f32 %v704, %v717
  %v719 = vpop.f32.mrf.mxu0
  %v720 = vadd.f32 %v706, %v719
  %721 = vdwg.mxu0
  %722 = vmatpush.bf16.msra.mxu0 %v549
  %723 = vmatpush.bf16.msra.mxu0 %v548
  %724 = vmatpush.bf16.msra.mxu0 %v547
  %725 = vmatpush.bf16.msra.mxu0 %v546
  %726 = vmatpush.bf16.msra.mxu0 %v545
  %727 = vmatpush.bf16.msra.mxu0 %v544
  %728 = vmatpush.bf16.msra.mxu0 %v543
  %729 = vmatpush.bf16.msra.mxu0 %v542
  %730 = vmatmul.bf16.gmra.mxu0 %v203
  %v731 = vpop.f32.mrf.mxu0
  %v732 = vadd.f32 %v718, %v731
  %v733 = vpop.f32.mrf.mxu0
  %v734 = vadd.f32 %v720, %v733
  %735 = vdwg.mxu0
  %736 = vmatpush.bf16.msra.mxu0 %v557
  %737 = vmatpush.bf16.msra.mxu0 %v556
  %738 = vmatpush.bf16.msra.mxu0 %v555
  %739 = vmatpush.bf16.msra.mxu0 %v554
  %740 = vmatpush.bf16.msra.mxu0 %v553
  %741 = vmatpush.bf16.msra.mxu0 %v552
  %742 = vmatpush.bf16.msra.mxu0 %v551
  %743 = vmatpush.bf16.msra.mxu0 %v550
  %744 = vmatmul.bf16.gmra.mxu0 %v204
  %v745 = vpop.f32.mrf.mxu0
  %v746 = vadd.f32 %v732, %v745
  %v747 = vpop.f32.mrf.mxu0
  %v748 = vadd.f32 %v734, %v747
  %749 = vdwg.mxu0
  %750 = vmatpush.bf16.msra.mxu0 0
  %751 = vmatpush.bf16.msra.mxu0 0
  %752 = vmatpush.bf16.msra.mxu0 %v563
  %753 = vmatpush.bf16.msra.mxu0 %v562
  %754 = vmatpush.bf16.msra.mxu0 %v561
  %755 = vmatpush.bf16.msra.mxu0 %v560
  %756 = vmatpush.bf16.msra.mxu0 %v559
  %757 = vmatpush.bf16.msra.mxu0 %v558
  %758 = vmatmul.bf16.gmra.mxu0 %v636
  %v759 = vpop.f32.mrf.mxu0
  %v760 = vadd.f32 %v746, %v759
  %v761 = vpop.f32.mrf.mxu0
  %v762 = vadd.f32 %v748, %v761
  %763 = vdwg.mxu0
  %v764 = vmax.f32 %v760, 0.0
  %v765 = vmax.f32 %v762, 0.0
  %vm766 = vcmask 261120
  %767 = vst.msk [vmem:[%s3] sm:$0xff] %vm766, %v764
  %768 = vst.msk [vmem:[%s3 + $0x8] sm:$0xff] %vm766, %v765
  // Predicated region
  $region14: #{f0spec_forward.10} parent=0 // pred_check
    _
  $region15: #{f0spec_forward.10} parent=0 // pred_check_branch
    %770 = sbr.rel (0) target = $region17
  $region16: #{f0spec_forward.10} parent=0 // pred_region
    _
  $region17: #{f0spec_forward.10} parent=0 // pred_fallthru
    _
  // Predicated region
  $region18: #{f0spec_forward.10} parent=0 // pred_check
    _
  $region19: #{f0spec_forward.10} parent=0 // pred_check_branch
    %772 = sbr.rel (0) target = $region21
  $region20: #{f0spec_forward.10} parent=0 // pred_region
    _
  $region21: #{f0spec_forward.10} parent=0 // pred_fallthru
    _

// kernel: f0spec_forward.11
$region0: #{f0spec_forward.11}
  #allocation0 [shape = 'u32[]', space=smem, size = 0x4, offset = 0x4, fixed_abs, tag = 'smem constant byte address 0x4 - core index']
  #allocation1 [shape = 'u32[72,128]{1,0:T(1,128)}', space=vmem, size = 0x9000, scoped, tag = 'internal scratch']
  #allocation2 [shape = 'f32[8,8,128]{2,1,0:T(8,128)}', space=vmem, size = 0x8000, scoped, tag = 'scratch operand']
  #allocation3 [shape = 'f32[8,8,32]{2,1,0:T(8,128)}', space=vmem, size = 0x8000, scoped, tag = 'scratch operand']
  #allocation4 [shape = 'f32[1,1]{1,0:T(1,128)S(1)}', space=vmem, size = 0x200, scoped, tag = 'scoped memory for f0spec_forward.11']
  %s0 = inlined_call_operand.vmem [shape: f32[8,8,32], index: 0, kind: input, shape index: {}]
  %s1 = inlined_call_operand.vmem [shape: f32[8,8,1], index: 1, kind: input, shape index: {}]
  %s2 = inlined_call_operand.vmem [shape: bf16[32,128], index: 2, kind: input, shape index: {}]
  %s3 = inlined_call_operand.vmem [shape: bf16[32,128], index: 3, kind: input, shape index: {}]
  %s4 = inlined_call_operand.vmem [shape: f32[1,128], index: 4, kind: input, shape index: {}]
  %s5 = inlined_call_operand.vmem [shape: bf16[32,128], index: 5, kind: input, shape index: {}]
  %s6 = inlined_call_operand.vmem [shape: f32[1,128], index: 6, kind: input, shape index: {}]
  %s7 = inlined_call_operand.vmem [shape: bf16[128,1], index: 7, kind: input, shape index: {}]
  %s8 = inlined_call_operand.<no memory space> [shape: f32[1,1], index: 8, kind: input, shape index: {}]
  %s9 = inlined_call_operand.vmem [shape: f32[64,1], index: 9, kind: output, shape index: {}]
  %s10 = sld [smem:[#allocation0]]
  $region46: #{f0spec_forward.11} parent=0
    _
  %s12 = ssub.s32 1, %s10
  %s13 = scalar_select 0, %s12, %s10
  %v14 = vstv %s8
  %15 = vst [vmem:[#allocation4] sm:$0x1] %v14
  // Predicated region
  $region2: #{f0spec_forward.11} parent=0 // pred_check
    _
  $region3: #{f0spec_forward.11} parent=0 // pred_check_branch
    %17 = sbr.rel (0) target = $region5
  $region4: #{f0spec_forward.11} parent=0 // pred_region
    _
  $region5: #{f0spec_forward.11} parent=0 // pred_fallthru
    _
  // Predicated region
  $region6: #{f0spec_forward.11} parent=0 // pred_check
    _
  $region7: #{f0spec_forward.11} parent=0 // pred_check_branch
    %19 = sbr.rel (0) target = $region9
  $region8: #{f0spec_forward.11} parent=0 // pred_region
    _
  $region9: #{f0spec_forward.11} parent=0 // pred_fallthru
    _
  // Predicated region
  $region10: #{f0spec_forward.11} parent=0 // pred_check
    _
  $region11: #{f0spec_forward.11} parent=0 // pred_check_branch
    %21 = sbr.rel (0) target = $region13
  $region12: #{f0spec_forward.11} parent=0 // pred_region
    _
  $region13: #{f0spec_forward.11} parent=0 // pred_fallthru
    _
  // Predicated region
  $region14: #{f0spec_forward.11} parent=0 // pred_check
    _
  $region15: #{f0spec_forward.11} parent=0 // pred_check_branch
    %23 = sbr.rel (0) target = $region17
  $region16: #{f0spec_forward.11} parent=0 // pred_region
    _
  $region17: #{f0spec_forward.11} parent=0 // pred_fallthru
    _
  // Predicated region
  $region18: #{f0spec_forward.11} parent=0 // pred_check
    _
  $region19: #{f0spec_forward.11} parent=0 // pred_check_branch
    %25 = sbr.rel (0) target = $region21
  $region20: #{f0spec_forward.11} parent=0 // pred_region
    _
  $region21: #{f0spec_forward.11} parent=0 // pred_fallthru
    _
  // Predicated region
  $region22: #{f0spec_forward.11} parent=0 // pred_check
    _
  $region23: #{f0spec_forward.11} parent=0 // pred_check_branch
    %27 = sbr.rel (0) target = $region25
  $region24: #{f0spec_forward.11} parent=0 // pred_region
    _
  $region25: #{f0spec_forward.11} parent=0 // pred_fallthru
    _
  // Predicated region
  $region26: #{f0spec_forward.11} parent=0 // pred_check
    _
  $region27: #{f0spec_forward.11} parent=0 // pred_check_branch
    %29 = sbr.rel (0) target = $region29
  $region28: #{f0spec_forward.11} parent=0 // pred_region
    _
  $region29: #{f0spec_forward.11} parent=0 // pred_fallthru
    _
  // Predicated region
  $region30: #{f0spec_forward.11} parent=0 // pred_check
    _
  $region31: #{f0spec_forward.11} parent=0 // pred_check_branch
    %31 = sbr.rel (0) target = $region33
  $region32: #{f0spec_forward.11} parent=0 // pred_region
    _
  $region33: #{f0spec_forward.11} parent=0 // pred_fallthru
    _
  // Predicated region
  $region34: #{f0spec_forward.11} parent=0 // pred_check
    _
  $region35: #{f0spec_forward.11} parent=0 // pred_check_branch
    %33 = sbr.rel (0) target = $region37
  $region36: #{f0spec_forward.11} parent=0 // pred_region
    _
  $region37: #{f0spec_forward.11} parent=0 // pred_fallthru
    _
  %v35 = vld [vmem:[%s0] sm:$0xff]
  %v36 = vld [vmem:[%s0 + $0x8] sm:$0xff]
  %v37 = vld [vmem:[%s0 + $0x10] sm:$0xff]
  %v38 = vld [vmem:[%s0 + $0x18] sm:$0xff]
  %v39 = vld [vmem:[%s0 + $0x20] sm:$0xff]
  %v40 = vld [vmem:[%s0 + $0x28] sm:$0xff]
  %v41 = vld [vmem:[%s0 + $0x30] sm:$0xff]
  %v42 = vld [vmem:[%s0 + $0x38] sm:$0xff]
  %v43 = vpack.c.bf16 %v36, %v35
  %v44 = vpack.c.bf16 %v38, %v37
  %v45 = vpack.c.bf16 %v40, %v39
  %v46 = vpack.c.bf16 %v42, %v41
  %v47 = vld [vmem:[%s2] sm:$0xf]
  %v48 = vld [vmem:[%s2 + $0x4] sm:$0xf]
  %v49 = vld [vmem:[%s2 + $0x8] sm:$0xf]
  %v50 = vld [vmem:[%s2 + $0xc] sm:$0xf]
  %v51 = vld [vmem:[%s4] sm:$0x1]
  %v53 = vperm.slane %v51, 0
  %v59 = vunpack.c.l.b16 %v47
  %v60 = vunpack.c.l.b16 %v48
  %v61 = vunpack.c.l.b16 %v49
  %v62 = vunpack.c.l.b16 %v50
  %v63 = vpack.c.b16 %v60, %v59
  %v64 = vpack.c.b16 %v62, %v61
  %vm67 = vcmask 261120
  %v69 = vsel %vm67, %v43, 0
  %v72 = vsel %vm67, %v44, 0
  %v75 = vsel %vm67, %v45, 0
  %v78 = vsel %vm67, %v46, 0
  %80 = vmatpush.bf16.msra.mxu0 0
  %81 = vmatpush.bf16.msra.mxu0 0
  %82 = vmatpush.bf16.msra.mxu0 0
  %83 = vmatpush.bf16.msra.mxu0 0
  %84 = vmatpush.bf16.msra.mxu0 0
  %85 = vmatpush.bf16.msra.mxu0 0
  %86 = vmatpush.bf16.msra.mxu0 %v64
  %87 = vmatpush.bf16.msra.mxu0 %v63
  %88 = vmatmul.bf16.gmra.mxu0 %v69
  %v89 = vpop.f32.mrf.mxu0
  %v90 = vadd.f32 %v53, %v89
  %v91 = vpop.f32.mrf.mxu0
  %v92 = vadd.f32 %v53, %v91
  %93 = vmatmul.bf16.gmra.mxu0 %v72
  %v94 = vpop.f32.mrf.mxu0
  %v95 = vadd.f32 %v53, %v94
  %v96 = vpop.f32.mrf.mxu0
  %v97 = vadd.f32 %v53, %v96
  %98 = vmatmul.bf16.gmra.mxu0 %v75
  %v99 = vpop.f32.mrf.mxu0
  %v100 = vadd.f32 %v53, %v99
  %v101 = vpop.f32.mrf.mxu0
  %v102 = vadd.f32 %v53, %v101
  %103 = vmatmul.bf16.gmra.mxu0 %v78
  %v104 = vpop.f32.mrf.mxu0
  %v105 = vadd.f32 %v53, %v104
  %v106 = vpop.f32.mrf.mxu0
  %v107 = vadd.f32 %v53, %v106
  %108 = vdwg.mxu0
  %109 = vst [vmem:[#allocation2] sm:$0xff] %v90
  %110 = vst [vmem:[#allocation2 + $0x8] sm:$0xff] %v92
  %111 = vst [vmem:[#allocation2 + $0x10] sm:$0xff] %v95
  %112 = vst [vmem:[#allocation2 + $0x18] sm:$0xff] %v97
  %113 = vst [vmem:[#allocation2 + $0x20] sm:$0xff] %v100
  %114 = vst [vmem:[#allocation2 + $0x28] sm:$0xff] %v102
  %115 = vst [vmem:[#allocation2 + $0x30] sm:$0xff] %v105
  %116 = vst [vmem:[#allocation2 + $0x38] sm:$0xff] %v107
  %v117 = vld [vmem:[#allocation2] sm:$0xff]
  %v118 = vld [vmem:[%s3] sm:$0xf]
  %v119 = vld [vmem:[%s3 + $0x4] sm:$0xf]
  %v120 = vld [vmem:[%s3 + $0x8] sm:$0xf]
  %v121 = vld [vmem:[%s3 + $0xc] sm:$0xf]
  %v126 = vunpack.c.l.b16 %v118
  %v127 = vunpack.c.l.b16 %v119
  %v128 = vunpack.c.l.b16 %v120
  %v129 = vunpack.c.l.b16 %v121
  %v130 = vpack.c.b16 %v127, %v126
  %v131 = vpack.c.b16 %v129, %v128
  %v135 = vsel %vm67, 0, 0
  %137 = vmatpush.bf16.msra.mxu0 0
  %138 = vmatpush.bf16.msra.mxu0 0
  %139 = vmatpush.bf16.msra.mxu0 0
  %140 = vmatpush.bf16.msra.mxu0 0
  %141 = vmatpush.bf16.msra.mxu0 0
  %142 = vmatpush.bf16.msra.mxu0 0
  %143 = vmatpush.bf16.msra.mxu0 %v131
  %144 = vmatpush.bf16.msra.mxu0 %v130
  %145 = vmatmul.bf16.gmra.mxu0 %v135
  %v146 = vpop.f32.mrf.mxu0
  %v147 = vadd.f32 0.0, %v146
  %v148 = vpop.f32.mrf.mxu0
  %149 = vdwg.mxu0
  %v150 = vadd.f32 %v117, %v147
  %v151 = vxor.u32 %v150, 2147483648
  %v152 = vmul.f32 %v151, 1.442695
  %v153 = vpow.pop %v152
  %v154 = vadd.f32 %v153, 1.0
  %v155 = vrcp.pop %v154
  %v156 = vmul.f32 %v154, %v155
  %v157 = vsub.f32 1.0, %v156
  %v158 = vmul.f32 %v155, %v157
  %v159 = vadd.f32 %v155, %v158
  %vm160 = vweird.f32 %v154
  %vm161 = vweird.f32 %v155
  %vm162 = vmor %vm160, %vm161
  %v163 = vsel %vm162, %v155, %v159
  %v164 = vand.u32 2147483647, %v154
  %vm165 = vcmp.eq.f32.partialorder %v164, 8.507059e+37
  %v166 = vand.u32 %v154, 2147483648
  %v167 = vor.u32 1.1754944e-38, %v166
  %v168 = vsel %vm165, %v167, %v163
  %v169 = vmul.f32 1.0, %v168
  %v170 = vtanh.pop %v150
  %v171 = vmul.f32 %v169, 0.0
  %173 = vrot.lane.b32.xlu0 %v170, 64
  %v174 = vpop.permute.xlu0 %173
  %v176 = vmul.f32 %v169, %v174
  %178 = vrot.lane.b32.xlu0 %v176, 32
  %v179 = vpop.permute.xlu0 %178
  %v181 = vadd.f32 %v171, %v179
  %v182 = vtanh.pop %v181
  %184 = vrot.lane.b32.xlu0 %v182, 64
  %v185 = vpop.permute.xlu0 %184
  %v187 = vmul.f32 %v169, %v185
  %v188 = vld [vmem:[%s1] sm:$0xff]
  %190 = vset.pattern.permute.xlu0 0
  %191 = vperm.xlu0 %190, %v188
  %v192 = vpop.permute.xlu0 %191
  %v194 = vmul.f32 %v187, %v192
  %196 = vrot.lane.b32.xlu0 %v194, 32
  %v197 = vpop.permute.xlu0 %196
  %199 = vst.msk [vmem:[#allocation3] sm:$0xff] %vm67, %v197
  %s200 = scalar_lea.vmem [#allocation2], 8
  %v201 = vld [vmem:[%s200] sm:$0xff]
  %v202 = vpack.c.bf16 %v187, %v187
  %v203 = vld [vmem:[%s3] sm:$0xf]
  %v204 = vld [vmem:[%s3 + $0x4] sm:$0xf]
  %v205 = vld [vmem:[%s3 + $0x8] sm:$0xf]
  %v206 = vld [vmem:[%s3 + $0xc] sm:$0xf]
  %208 = vrot.lane.b32.xlu0 %v202, 32
  %v209 = vpop.permute.xlu0 %208
  %v214 = vunpack.c.l.b16 %v203
  %v215 = vunpack.c.l.b16 %v204
  %v216 = vunpack.c.l.b16 %v205
  %v217 = vunpack.c.l.b16 %v206
  %v218 = vpack.c.b16 %v215, %v214
  %v219 = vpack.c.b16 %v217, %v216
  %v223 = vsel %vm67, %v209, 0
  %225 = vmatpush.bf16.msra.mxu0 0
  %226 = vmatpush.bf16.msra.mxu0 0
  %227 = vmatpush.bf16.msra.mxu0 0
  %228 = vmatpush.bf16.msra.mxu0 0
  %229 = vmatpush.bf16.msra.mxu0 0
  %230 = vmatpush.bf16.msra.mxu0 0
  %231 = vmatpush.bf16.msra.mxu0 %v219
  %232 = vmatpush.bf16.msra.mxu0 %v218
  %233 = vmatmul.bf16.gmra.mxu0 %v223
  %v234 = vpop.f32.mrf.mxu0
  %v235 = vadd.f32 0.0, %v234
  %v236 = vpop.f32.mrf.mxu0
  %237 = vdwg.mxu0
  %v238 = vadd.f32 %v201, %v235
  %v239 = vxor.u32 %v238, 2147483648
  %v240 = vmul.f32 %v239, 1.442695
  %v241 = vpow.pop %v240
  %v242 = vadd.f32 %v241, 1.0
  %v243 = vrcp.pop %v242
  %v244 = vmul.f32 %v242, %v243
  %v245 = vsub.f32 1.0, %v244
  %v246 = vmul.f32 %v243, %v245
  %v247 = vadd.f32 %v243, %v246
  %vm248 = vweird.f32 %v242
  %vm249 = vweird.f32 %v243
  %vm250 = vmor %vm248, %vm249
  %v251 = vsel %vm250, %v243, %v247
  %v252 = vand.u32 2147483647, %v242
  %vm253 = vcmp.eq.f32.partialorder %v252, 8.507059e+37
  %v254 = vand.u32 %v242, 2147483648
  %v255 = vor.u32 1.1754944e-38, %v254
  %v256 = vsel %vm253, %v255, %v251
  %v257 = vmul.f32 1.0, %v256
  %v258 = vtanh.pop %v238
  %v259 = vmul.f32 %v257, %v181
  %261 = vrot.lane.b32.xlu0 %v258, 64
  %v262 = vpop.permute.xlu0 %261
  %v264 = vmul.f32 %v257, %v262
  %266 = vrot.lane.b32.xlu0 %v264, 32
  %v267 = vpop.permute.xlu0 %266
  %v269 = vadd.f32 %v259, %v267
  %v270 = vtanh.pop %v269
  %272 = vrot.lane.b32.xlu0 %v270, 64
  %v273 = vpop.permute.xlu0 %272
  %v275 = vmul.f32 %v257, %v273
  %s276 = scalar_lea.vmem %s1, 8
  %v277 = vld [vmem:[%s276] sm:$0xff]
  %279 = vset.pattern.permute.xlu0 0
  %280 = vperm.xlu0 %279, %v277
  %v281 = vpop.permute.xlu0 %280
  %v283 = vmul.f32 %v275, %v281
  %285 = vrot.lane.b32.xlu0 %v283, 32
  %v286 = vpop.permute.xlu0 %285
  %s288 = scalar_lea.vmem [#allocation3], 8
  %289 = vst.msk [vmem:[%s288] sm:$0xff] %vm67, %v286
  %s290 = scalar_lea.vmem [#allocation2], 16
  %v291 = vld [vmem:[%s290] sm:$0xff]
  %v292 = vpack.c.bf16 %v275, %v275
  %v293 = vld [vmem:[%s3] sm:$0xf]
  %v294 = vld [vmem:[%s3 + $0x4] sm:$0xf]
  %v295 = vld [vmem:[%s3 + $0x8] sm:$0xf]
  %v296 = vld [vmem:[%s3 + $0xc] sm:$0xf]
  %298 = vrot.lane.b32.xlu0 %v292, 32
  %v299 = vpop.permute.xlu0 %298
  %v304 = vunpack.c.l.b16 %v293
  %v305 = vunpack.c.l.b16 %v294
  %v306 = vunpack.c.l.b16 %v295
  %v307 = vunpack.c.l.b16 %v296
  %v308 = vpack.c.b16 %v305, %v304
  %v309 = vpack.c.b16 %v307, %v306
  %v313 = vsel %vm67, %v299, 0
  %315 = vmatpush.bf16.msra.mxu0 0
  %316 = vmatpush.bf16.msra.mxu0 0
  %317 = vmatpush.bf16.msra.mxu0 0
  %318 = vmatpush.bf16.msra.mxu0 0
  %319 = vmatpush.bf16.msra.mxu0 0
  %320 = vmatpush.bf16.msra.mxu0 0
  %321 = vmatpush.bf16.msra.mxu0 %v309
  %322 = vmatpush.bf16.msra.mxu0 %v308
  %323 = vmatmul.bf16.gmra.mxu0 %v313
  %v324 = vpop.f32.mrf.mxu0
  %v325 = vadd.f32 0.0, %v324
  %v326 = vpop.f32.mrf.mxu0
  %327 = vdwg.mxu0
  %v328 = vadd.f32 %v291, %v325
  %v329 = vxor.u32 %v328, 2147483648
  %v330 = vmul.f32 %v329, 1.442695
  %v331 = vpow.pop %v330
  %v332 = vadd.f32 %v331, 1.0
  %v333 = vrcp.pop %v332
  %v334 = vmul.f32 %v332, %v333
  %v335 = vsub.f32 1.0, %v334
  %v336 = vmul.f32 %v333, %v335
  %v337 = vadd.f32 %v333, %v336
  %vm338 = vweird.f32 %v332
  %vm339 = vweird.f32 %v333
  %vm340 = vmor %vm338, %vm339
  %v341 = vsel %vm340, %v333, %v337
  %v342 = vand.u32 2147483647, %v332
  %vm343 = vcmp.eq.f32.partialorder %v342, 8.507059e+37
  %v344 = vand.u32 %v332, 2147483648
  %v345 = vor.u32 1.1754944e-38, %v344
  %v346 = vsel %vm343, %v345, %v341
  %v347 = vmul.f32 1.0, %v346
  %v348 = vtanh.pop %v328
  %v349 = vmul.f32 %v347, %v269
  %351 = vrot.lane.b32.xlu0 %v348, 64
  %v352 = vpop.permute.xlu0 %351
  %v354 = vmul.f32 %v347, %v352
  %356 = vrot.lane.b32.xlu0 %v354, 32
  %v357 = vpop.permute.xlu0 %356
  %v359 = vadd.f32 %v349, %v357
  %v360 = vtanh.pop %v359
  %362 = vrot.lane.b32.xlu0 %v360, 64
  %v363 = vpop.permute.xlu0 %362
  %v365 = vmul.f32 %v347, %v363
  %s366 = scalar_lea.vmem %s1, 16
  %v367 = vld [vmem:[%s366] sm:$0xff]
  %369 = vset.pattern.permute.xlu0 0
  %370 = vperm.xlu0 %369, %v367
  %v371 = vpop.permute.xlu0 %370
  %v373 = vmul.f32 %v365, %v371
  %375 = vrot.lane.b32.xlu0 %v373, 32
  %v376 = vpop.permute.xlu0 %375
  %s378 = scalar_lea.vmem [#allocation3], 16
  %379 = vst.msk [vmem:[%s378] sm:$0xff] %vm67, %v376
  %s380 = scalar_lea.vmem [#allocation2], 24
  %v381 = vld [vmem:[%s380] sm:$0xff]
  %v382 = vpack.c.bf16 %v365, %v365
  %v383 = vld [vmem:[%s3] sm:$0xf]
  %v384 = vld [vmem:[%s3 + $0x4] sm:$0xf]
  %v385 = vld [vmem:[%s3 + $0x8] sm:$0xf]
  %v386 = vld [vmem:[%s3 + $0xc] sm:$0xf]
  %388 = vrot.lane.b32.xlu0 %v382, 32
  %v389 = vpop.permute.xlu0 %388
  %v394 = vunpack.c.l.b16 %v383
  %v395 = vunpack.c.l.b16 %v384
  %v396 = vunpack.c.l.b16 %v385
  %v397 = vunpack.c.l.b16 %v386
  %v398 = vpack.c.b16 %v395, %v394
  %v399 = vpack.c.b16 %v397, %v396
  %v403 = vsel %vm67, %v389, 0
  %405 = vmatpush.bf16.msra.mxu0 0
  %406 = vmatpush.bf16.msra.mxu0 0
  %407 = vmatpush.bf16.msra.mxu0 0
  %408 = vmatpush.bf16.msra.mxu0 0
  %409 = vmatpush.bf16.msra.mxu0 0
  %410 = vmatpush.bf16.msra.mxu0 0
  %411 = vmatpush.bf16.msra.mxu0 %v399
  %412 = vmatpush.bf16.msra.mxu0 %v398
  %413 = vmatmul.bf16.gmra.mxu0 %v403
  %v414 = vpop.f32.mrf.mxu0
  %v415 = vadd.f32 0.0, %v414
  %v416 = vpop.f32.mrf.mxu0
  %417 = vdwg.mxu0
  %v418 = vadd.f32 %v381, %v415
  %v419 = vxor.u32 %v418, 2147483648
  %v420 = vmul.f32 %v419, 1.442695
  %v421 = vpow.pop %v420
  %v422 = vadd.f32 %v421, 1.0
  %v423 = vrcp.pop %v422
  %v424 = vmul.f32 %v422, %v423
  %v425 = vsub.f32 1.0, %v424
  %v426 = vmul.f32 %v423, %v425
  %v427 = vadd.f32 %v423, %v426
  %vm428 = vweird.f32 %v422
  %vm429 = vweird.f32 %v423
  %vm430 = vmor %vm428, %vm429
  %v431 = vsel %vm430, %v423, %v427
  %v432 = vand.u32 2147483647, %v422
  %vm433 = vcmp.eq.f32.partialorder %v432, 8.507059e+37
  %v434 = vand.u32 %v422, 2147483648
  %v435 = vor.u32 1.1754944e-38, %v434
  %v436 = vsel %vm433, %v435, %v431
  %v437 = vmul.f32 1.0, %v436
  %v438 = vtanh.pop %v418
  %v439 = vmul.f32 %v437, %v359
  %441 = vrot.lane.b32.xlu0 %v438, 64
  %v442 = vpop.permute.xlu0 %441
  %v444 = vmul.f32 %v437, %v442
  %446 = vrot.lane.b32.xlu0 %v444, 32
  %v447 = vpop.permute.xlu0 %446
  %v449 = vadd.f32 %v439, %v447
  %v450 = vtanh.pop %v449
  %452 = vrot.lane.b32.xlu0 %v450, 64
  %v453 = vpop.permute.xlu0 %452
  %v455 = vmul.f32 %v437, %v453
  %s456 = scalar_lea.vmem %s1, 24
  %v457 = vld [vmem:[%s456] sm:$0xff]
  %459 = vset.pattern.permute.xlu0 0
  %460 = vperm.xlu0 %459, %v457
  %v461 = vpop.permute.xlu0 %460
  %v463 = vmul.f32 %v455, %v461
  %465 = vrot.lane.b32.xlu0 %v463, 32
  %v466 = vpop.permute.xlu0 %465
  %s468 = scalar_lea.vmem [#allocation3], 24
  %469 = vst.msk [vmem:[%s468] sm:$0xff] %vm67, %v466
  %s470 = scalar_lea.vmem [#allocation2], 32
  %v471 = vld [vmem:[%s470] sm:$0xff]
  %v472 = vpack.c.bf16 %v455, %v455
  %v473 = vld [vmem:[%s3] sm:$0xf]
  %v474 = vld [vmem:[%s3 + $0x4] sm:$0xf]
  %v475 = vld [vmem:[%s3 + $0x8] sm:$0xf]
  %v476 = vld [vmem:[%s3 + $0xc] sm:$0xf]
  %478 = vrot.lane.b32.xlu0 %v472, 32
  %v479 = vpop.permute.xlu0 %478
  %v484 = vunpack.c.l.b16 %v473
  %v485 = vunpack.c.l.b16 %v474
  %v486 = vunpack.c.l.b16 %v475
  %v487 = vunpack.c.l.b16 %v476
  %v488 = vpack.c.b16 %v485, %v484
  %v489 = vpack.c.b16 %v487, %v486
  %v493 = vsel %vm67, %v479, 0
  %495 = vmatpush.bf16.msra.mxu0 0
  %496 = vmatpush.bf16.msra.mxu0 0
  %497 = vmatpush.bf16.msra.mxu0 0
  %498 = vmatpush.bf16.msra.mxu0 0
  %499 = vmatpush.bf16.msra.mxu0 0
  %500 = vmatpush.bf16.msra.mxu0 0
  %501 = vmatpush.bf16.msra.mxu0 %v489
  %502 = vmatpush.bf16.msra.mxu0 %v488
  %503 = vmatmul.bf16.gmra.mxu0 %v493
  %v504 = vpop.f32.mrf.mxu0
  %v505 = vadd.f32 0.0, %v504
  %v506 = vpop.f32.mrf.mxu0
  %507 = vdwg.mxu0
  %v508 = vadd.f32 %v471, %v505
  %v509 = vxor.u32 %v508, 2147483648
  %v510 = vmul.f32 %v509, 1.442695
  %v511 = vpow.pop %v510
  %v512 = vadd.f32 %v511, 1.0
  %v513 = vrcp.pop %v512
  %v514 = vmul.f32 %v512, %v513
  %v515 = vsub.f32 1.0, %v514
  %v516 = vmul.f32 %v513, %v515
  %v517 = vadd.f32 %v513, %v516
  %vm518 = vweird.f32 %v512
  %vm519 = vweird.f32 %v513
  %vm520 = vmor %vm518, %vm519
  %v521 = vsel %vm520, %v513, %v517
  %v522 = vand.u32 2147483647, %v512
  %vm523 = vcmp.eq.f32.partialorder %v522, 8.507059e+37
  %v524 = vand.u32 %v512, 2147483648
  %v525 = vor.u32 1.1754944e-38, %v524
  %v526 = vsel %vm523, %v525, %v521
  %v527 = vmul.f32 1.0, %v526
  %v528 = vtanh.pop %v508
  %v529 = vmul.f32 %v527, %v449
  %531 = vrot.lane.b32.xlu0 %v528, 64
  %v532 = vpop.permute.xlu0 %531
  %v534 = vmul.f32 %v527, %v532
  %536 = vrot.lane.b32.xlu0 %v534, 32
  %v537 = vpop.permute.xlu0 %536
  %v539 = vadd.f32 %v529, %v537
  %v540 = vtanh.pop %v539
  %542 = vrot.lane.b32.xlu0 %v540, 64
  %v543 = vpop.permute.xlu0 %542
  %v545 = vmul.f32 %v527, %v543
  %s546 = scalar_lea.vmem %s1, 32
  %v547 = vld [vmem:[%s546] sm:$0xff]
  %549 = vset.pattern.permute.xlu0 0
  %550 = vperm.xlu0 %549, %v547
  %v551 = vpop.permute.xlu0 %550
  %v553 = vmul.f32 %v545, %v551
  %555 = vrot.lane.b32.xlu0 %v553, 32
  %v556 = vpop.permute.xlu0 %555
  %s558 = scalar_lea.vmem [#allocation3], 32
  %559 = vst.msk [vmem:[%s558] sm:$0xff] %vm67, %v556
  %s560 = scalar_lea.vmem [#allocation2], 40
  %v561 = vld [vmem:[%s560] sm:$0xff]
  %v562 = vpack.c.bf16 %v545, %v545
  %v563 = vld [vmem:[%s3] sm:$0xf]
  %v564 = vld [vmem:[%s3 + $0x4] sm:$0xf]
  %v565 = vld [vmem:[%s3 + $0x8] sm:$0xf]
  %v566 = vld [vmem:[%s3 + $0xc] sm:$0xf]
  %568 = vrot.lane.b32.xlu0 %v562, 32
  %v569 = vpop.permute.xlu0 %568
  %v574 = vunpack.c.l.b16 %v563
  %v575 = vunpack.c.l.b16 %v564
  %v576 = vunpack.c.l.b16 %v565
  %v577 = vunpack.c.l.b16 %v566
  %v578 = vpack.c.b16 %v575, %v574
  %v579 = vpack.c.b16 %v577, %v576
  %v583 = vsel %vm67, %v569, 0
  %585 = vmatpush.bf16.msra.mxu0 0
  %586 = vmatpush.bf16.msra.mxu0 0
  %587 = vmatpush.bf16.msra.mxu0 0
  %588 = vmatpush.bf16.msra.mxu0 0
  %589 = vmatpush.bf16.msra.mxu0 0
  %590 = vmatpush.bf16.msra.mxu0 0
  %591 = vmatpush.bf16.msra.mxu0 %v579
  %592 = vmatpush.bf16.msra.mxu0 %v578
  %593 = vmatmul.bf16.gmra.mxu0 %v583
  %v594 = vpop.f32.mrf.mxu0
  %v595 = vadd.f32 0.0, %v594
  %v596 = vpop.f32.mrf.mxu0
  %597 = vdwg.mxu0
  %v598 = vadd.f32 %v561, %v595
  %v599 = vxor.u32 %v598, 2147483648
  %v600 = vmul.f32 %v599, 1.442695
  %v601 = vpow.pop %v600
  %v602 = vadd.f32 %v601, 1.0
  %v603 = vrcp.pop %v602
  %v604 = vmul.f32 %v602, %v603
  %v605 = vsub.f32 1.0, %v604
  %v606 = vmul.f32 %v603, %v605
  %v607 = vadd.f32 %v603, %v606
  %vm608 = vweird.f32 %v602
  %vm609 = vweird.f32 %v603
  %vm610 = vmor %vm608, %vm609
  %v611 = vsel %vm610, %v603, %v607
  %v612 = vand.u32 2147483647, %v602
  %vm613 = vcmp.eq.f32.partialorder %v612, 8.507059e+37
  %v614 = vand.u32 %v602, 2147483648
  %v615 = vor.u32 1.1754944e-38, %v614
  %v616 = vsel %vm613, %v615, %v611
  %v617 = vmul.f32 1.0, %v616
  %v618 = vtanh.pop %v598
  %v619 = vmul.f32 %v617, %v539
  %621 = vrot.lane.b32.xlu0 %v618, 64
  %v622 = vpop.permute.xlu0 %621
  %v624 = vmul.f32 %v617, %v622
  %626 = vrot.lane.b32.xlu0 %v624, 32
  %v627 = vpop.permute.xlu0 %626
  %v629 = vadd.f32 %v619, %v627
  %v630 = vtanh.pop %v629
  %632 = vrot.lane.b32.xlu0 %v630, 64
  %v633 = vpop.permute.xlu0 %632
  %v635 = vmul.f32 %v617, %v633
  %s636 = scalar_lea.vmem %s1, 40
  %v637 = vld [vmem:[%s636] sm:$0xff]
  %639 = vset.pattern.permute.xlu0 0
  %640 = vperm.xlu0 %639, %v637
  %v641 = vpop.permute.xlu0 %640
  %v643 = vmul.f32 %v635, %v641
  %645 = vrot.lane.b32.xlu0 %v643, 32
  %v646 = vpop.permute.xlu0 %645
  %s648 = scalar_lea.vmem [#allocation3], 40
  %649 = vst.msk [vmem:[%s648] sm:$0xff] %vm67, %v646
  %s650 = scalar_lea.vmem [#allocation2], 48
  %v651 = vld [vmem:[%s650] sm:$0xff]
  %v652 = vpack.c.bf16 %v635, %v635
  %v653 = vld [vmem:[%s3] sm:$0xf]
  %v654 = vld [vmem:[%s3 + $0x4] sm:$0xf]
  %v655 = vld [vmem:[%s3 + $0x8] sm:$0xf]
  %v656 = vld [vmem:[%s3 + $0xc] sm:$0xf]
  %658 = vrot.lane.b32.xlu0 %v652, 32
  %v659 = vpop.permute.xlu0 %658
  %v664 = vunpack.c.l.b16 %v653
  %v665 = vunpack.c.l.b16 %v654
  %v666 = vunpack.c.l.b16 %v655
  %v667 = vunpack.c.l.b16 %v656
  %v668 = vpack.c.b16 %v665, %v664
  %v669 = vpack.c.b16 %v667, %v666
  %v673 = vsel %vm67, %v659, 0
  %675 = vmatpush.bf16.msra.mxu0 0
  %676 = vmatpush.bf16.msra.mxu0 0
  %677 = vmatpush.bf16.msra.mxu0 0
  %678 = vmatpush.bf16.msra.mxu0 0
  %679 = vmatpush.bf16.msra.mxu0 0
  %680 = vmatpush.bf16.msra.mxu0 0
  %681 = vmatpush.bf16.msra.mxu0 %v669
  %682 = vmatpush.bf16.msra.mxu0 %v668
  %683 = vmatmul.bf16.gmra.mxu0 %v673
  %v684 = vpop.f32.mrf.mxu0
  %v685 = vadd.f32 0.0, %v684
  %v686 = vpop.f32.mrf.mxu0
  %687 = vdwg.mxu0
  %v688 = vadd.f32 %v651, %v685
  %v689 = vxor.u32 %v688, 2147483648
  %v690 = vmul.f32 %v689, 1.442695
  %v691 = vpow.pop %v690
  %v692 = vadd.f32 %v691, 1.0
  %v693 = vrcp.pop %v692
  %v694 = vmul.f32 %v692, %v693
  %v695 = vsub.f32 1.0, %v694
  %v696 = vmul.f32 %v693, %v695
  %v697 = vadd.f32 %v693, %v696
  %vm698 = vweird.f32 %v692
  %vm699 = vweird.f32 %v693
  %vm700 = vmor %vm698, %vm699
  %v701 = vsel %vm700, %v693, %v697
  %v702 = vand.u32 2147483647, %v692
  %vm703 = vcmp.eq.f32.partialorder %v702, 8.507059e+37
  %v704 = vand.u32 %v692, 2147483648
  %v705 = vor.u32 1.1754944e-38, %v704
  %v706 = vsel %vm703, %v705, %v701
  %v707 = vmul.f32 1.0, %v706
  %v708 = vtanh.pop %v688
  %v709 = vmul.f32 %v707, %v629
  %711 = vrot.lane.b32.xlu0 %v708, 64
  %v712 = vpop.permute.xlu0 %711
  %v714 = vmul.f32 %v707, %v712
  %716 = vrot.lane.b32.xlu0 %v714, 32
  %v717 = vpop.permute.xlu0 %716
  %v719 = vadd.f32 %v709, %v717
  %v720 = vtanh.pop %v719
  %722 = vrot.lane.b32.xlu0 %v720, 64
  %v723 = vpop.permute.xlu0 %722
  %v725 = vmul.f32 %v707, %v723
  %s726 = scalar_lea.vmem %s1, 48
  %v727 = vld [vmem:[%s726] sm:$0xff]
  %729 = vset.pattern.permute.xlu0 0
  %730 = vperm.xlu0 %729, %v727
  %v731 = vpop.permute.xlu0 %730
  %v733 = vmul.f32 %v725, %v731
  %735 = vrot.lane.b32.xlu0 %v733, 32
  %v736 = vpop.permute.xlu0 %735
  %s738 = scalar_lea.vmem [#allocation3], 48
  %739 = vst.msk [vmem:[%s738] sm:$0xff] %vm67, %v736
  %s740 = scalar_lea.vmem [#allocation2], 56
  %v741 = vld [vmem:[%s740] sm:$0xff]
  %v742 = vpack.c.bf16 %v725, %v725
  %v743 = vld [vmem:[%s3] sm:$0xf]
  %v744 = vld [vmem:[%s3 + $0x4] sm:$0xf]
  %v745 = vld [vmem:[%s3 + $0x8] sm:$0xf]
  %v746 = vld [vmem:[%s3 + $0xc] sm:$0xf]
  %748 = vrot.lane.b32.xlu0 %v742, 32
  %v749 = vpop.permute.xlu0 %748
  %v754 = vunpack.c.l.b16 %v743
  %v755 = vunpack.c.l.b16 %v744
  %v756 = vunpack.c.l.b16 %v745
  %v757 = vunpack.c.l.b16 %v746
  %v758 = vpack.c.b16 %v755, %v754
  %v759 = vpack.c.b16 %v757, %v756
  %v763 = vsel %vm67, %v749, 0
  %765 = vmatpush.bf16.msra.mxu0 0
  %766 = vmatpush.bf16.msra.mxu0 0
  %767 = vmatpush.bf16.msra.mxu0 0
  %768 = vmatpush.bf16.msra.mxu0 0
  %769 = vmatpush.bf16.msra.mxu0 0
  %770 = vmatpush.bf16.msra.mxu0 0
  %771 = vmatpush.bf16.msra.mxu0 %v759
  %772 = vmatpush.bf16.msra.mxu0 %v758
  %773 = vmatmul.bf16.gmra.mxu0 %v763
  %v774 = vpop.f32.mrf.mxu0
  %v775 = vadd.f32 0.0, %v774
  %v776 = vpop.f32.mrf.mxu0
  %777 = vdwg.mxu0
  %v778 = vadd.f32 %v741, %v775
  %v779 = vxor.u32 %v778, 2147483648
  %v780 = vmul.f32 %v779, 1.442695
  %v781 = vpow.pop %v780
  %v782 = vadd.f32 %v781, 1.0
  %v783 = vrcp.pop %v782
  %v784 = vmul.f32 %v782, %v783
  %v785 = vsub.f32 1.0, %v784
  %v786 = vmul.f32 %v783, %v785
  %v787 = vadd.f32 %v783, %v786
  %vm788 = vweird.f32 %v782
  %vm789 = vweird.f32 %v783
  %vm790 = vmor %vm788, %vm789
  %v791 = vsel %vm790, %v783, %v787
  %v792 = vand.u32 2147483647, %v782
  %vm793 = vcmp.eq.f32.partialorder %v792, 8.507059e+37
  %v794 = vand.u32 %v782, 2147483648
  %v795 = vor.u32 1.1754944e-38, %v794
  %v796 = vsel %vm793, %v795, %v791
  %v797 = vmul.f32 1.0, %v796
  %v798 = vtanh.pop %v778
  %v799 = vmul.f32 %v797, %v719
  %801 = vrot.lane.b32.xlu0 %v798, 64
  %v802 = vpop.permute.xlu0 %801
  %v804 = vmul.f32 %v797, %v802
  %806 = vrot.lane.b32.xlu0 %v804, 32
  %v807 = vpop.permute.xlu0 %806
  %v809 = vadd.f32 %v799, %v807
  %v810 = vtanh.pop %v809
  %812 = vrot.lane.b32.xlu0 %v810, 64
  %v813 = vpop.permute.xlu0 %812
  %v815 = vmul.f32 %v797, %v813
  %s816 = scalar_lea.vmem %s1, 56
  %v817 = vld [vmem:[%s816] sm:$0xff]
  %819 = vset.pattern.permute.xlu0 0
  %820 = vperm.xlu0 %819, %v817
  %v821 = vpop.permute.xlu0 %820
  %v823 = vmul.f32 %v815, %v821
  %825 = vrot.lane.b32.xlu0 %v823, 32
  %v826 = vpop.permute.xlu0 %825
  %s828 = scalar_lea.vmem [#allocation3], 56
  %829 = vst.msk [vmem:[%s828] sm:$0xff] %vm67, %v826
  %v830 = vld [vmem:[#allocation3] sm:$0xff]
  %v831 = vld [vmem:[#allocation3 + $0x8] sm:$0xff]
  %v832 = vld [vmem:[#allocation3 + $0x10] sm:$0xff]
  %v833 = vld [vmem:[#allocation3 + $0x18] sm:$0xff]
  %v834 = vld [vmem:[#allocation3 + $0x20] sm:$0xff]
  %v835 = vld [vmem:[#allocation3 + $0x28] sm:$0xff]
  %v836 = vld [vmem:[#allocation3 + $0x30] sm:$0xff]
  %v837 = vld [vmem:[#allocation3 + $0x38] sm:$0xff]
  %v838 = vpack.c.bf16 %v831, %v830
  %v839 = vpack.c.bf16 %v833, %v832
  %v840 = vpack.c.bf16 %v835, %v834
  %v841 = vpack.c.bf16 %v837, %v836
  %v842 = vld [vmem:[%s5] sm:$0xf]
  %v843 = vld [vmem:[%s5 + $0x4] sm:$0xf]
  %v844 = vld [vmem:[%s5 + $0x8] sm:$0xf]
  %v845 = vld [vmem:[%s5 + $0xc] sm:$0xf]
  %v846 = vld [vmem:[%s6] sm:$0x1]
  %v848 = vperm.slane %v846, 0
  %v854 = vunpack.c.l.b16 %v842
  %v855 = vunpack.c.l.b16 %v843
  %v856 = vunpack.c.l.b16 %v844
  %v857 = vunpack.c.l.b16 %v845
  %v858 = vpack.c.b16 %v855, %v854
  %v859 = vpack.c.b16 %v857, %v856
  %v863 = vsel %vm67, %v838, 0
  %v866 = vsel %vm67, %v839, 0
  %v869 = vsel %vm67, %v840, 0
  %v872 = vsel %vm67, %v841, 0
  %874 = vmatpush.bf16.msra.mxu0 0
  %875 = vmatpush.bf16.msra.mxu0 0
  %876 = vmatpush.bf16.msra.mxu0 0
  %877 = vmatpush.bf16.msra.mxu0 0
  %878 = vmatpush.bf16.msra.mxu0 0
  %879 = vmatpush.bf16.msra.mxu0 0
  %880 = vmatpush.bf16.msra.mxu0 %v859
  %881 = vmatpush.bf16.msra.mxu0 %v858
  %882 = vmatmul.bf16.gmra.mxu0 %v863
  %v883 = vpop.f32.mrf.mxu0
  %v884 = vadd.f32 %v848, %v883
  %v885 = vpop.f32.mrf.mxu0
  %v886 = vadd.f32 %v848, %v885
  %887 = vmatmul.bf16.gmra.mxu0 %v866
  %v888 = vpop.f32.mrf.mxu0
  %v889 = vadd.f32 %v848, %v888
  %v890 = vpop.f32.mrf.mxu0
  %v891 = vadd.f32 %v848, %v890
  %892 = vmatmul.bf16.gmra.mxu0 %v869
  %v893 = vpop.f32.mrf.mxu0
  %v894 = vadd.f32 %v848, %v893
  %v895 = vpop.f32.mrf.mxu0
  %v896 = vadd.f32 %v848, %v895
  %897 = vmatmul.bf16.gmra.mxu0 %v872
  %v898 = vpop.f32.mrf.mxu0
  %v899 = vadd.f32 %v848, %v898
  %v900 = vpop.f32.mrf.mxu0
  %v901 = vadd.f32 %v848, %v900
  %902 = vdwg.mxu0
  %v903 = vmax.f32 %v884, 0.0
  %v904 = vmax.f32 %v886, 0.0
  %v905 = vmax.f32 %v889, 0.0
  %v906 = vmax.f32 %v891, 0.0
  %v907 = vmax.f32 %v894, 0.0
  %v908 = vmax.f32 %v896, 0.0
  %v909 = vmax.f32 %v899, 0.0
  %v910 = vmax.f32 %v901, 0.0
  %v911 = vpack.c.bf16 %v904, %v903
  %v912 = vpack.c.bf16 %v906, %v905
  %v913 = vpack.c.bf16 %v908, %v907
  %v914 = vpack.c.bf16 %v910, %v909
  %v915 = vld [vmem:[%s7] sm:$0xf]
  %v916 = vld [vmem:[%s7 + $0x4] sm:$0xf]
  %v917 = vld [vmem:[%s7 + $0x8] sm:$0xf]
  %v918 = vld [vmem:[%s7 + $0xc] sm:$0xf]
  %v919 = vld [vmem:[%s7 + $0x10] sm:$0xf]
  %v920 = vld [vmem:[%s7 + $0x14] sm:$0xf]
  %v921 = vld [vmem:[%s7 + $0x18] sm:$0xf]
  %v922 = vld [vmem:[%s7 + $0x1c] sm:$0xf]
  %v923 = vld [vmem:[%s7 + $0x20] sm:$0xf]
  %v924 = vld [vmem:[%s7 + $0x24] sm:$0xf]
  %v925 = vld [vmem:[%s7 + $0x28] sm:$0xf]
  %v926 = vld [vmem:[%s7 + $0x2c] sm:$0xf]
  %v927 = vld [vmem:[%s7 + $0x30] sm:$0xf]
  %v928 = vld [vmem:[%s7 + $0x34] sm:$0xf]
  %v929 = vld [vmem:[%s7 + $0x38] sm:$0xf]
  %v930 = vld [vmem:[%s7 + $0x3c] sm:$0xf]
  %v931 = vld [vmem:[#allocation4] sm:$0x1]
  %v933 = vperm.slane %v931, 0
  %v951 = vunpack.c.l.b16 %v915
  %v952 = vunpack.c.l.b16 %v916
  %v953 = vunpack.c.l.b16 %v917
  %v954 = vunpack.c.l.b16 %v918
  %v955 = vunpack.c.l.b16 %v919
  %v956 = vunpack.c.l.b16 %v920
  %v957 = vunpack.c.l.b16 %v921
  %v958 = vunpack.c.l.b16 %v922
  %v959 = vunpack.c.l.b16 %v923
  %v960 = vunpack.c.l.b16 %v924
  %v961 = vunpack.c.l.b16 %v925
  %v962 = vunpack.c.l.b16 %v926
  %v963 = vunpack.c.l.b16 %v927
  %v964 = vunpack.c.l.b16 %v928
  %v965 = vunpack.c.l.b16 %v929
  %v966 = vunpack.c.l.b16 %v930
  %v967 = vpack.c.b16 %v952, %v951
  %v968 = vpack.c.b16 %v954, %v953
  %v969 = vpack.c.b16 %v956, %v955
  %v970 = vpack.c.b16 %v958, %v957
  %v971 = vpack.c.b16 %v960, %v959
  %v972 = vpack.c.b16 %v962, %v961
  %v973 = vpack.c.b16 %v964, %v963
  %v974 = vpack.c.b16 %v966, %v965
  %983 = vmatpush.bf16.msra.mxu0 %v974
  %984 = vmatpush.bf16.msra.mxu0 %v973
  %985 = vmatpush.bf16.msra.mxu0 %v972
  %986 = vmatpush.bf16.msra.mxu0 %v971
  %987 = vmatpush.bf16.msra.mxu0 %v970
  %988 = vmatpush.bf16.msra.mxu0 %v969
  %989 = vmatpush.bf16.msra.mxu0 %v968
  %990 = vmatpush.bf16.msra.mxu0 %v967
  %991 = vmatmul.bf16.gmra.mxu0 %v911
  %v992 = vpop.f32.mrf.mxu0
  %v993 = vadd.f32 %v933, %v992
  %v994 = vpop.f32.mrf.mxu0
  %v995 = vadd.f32 %v933, %v994
  %996 = vmatmul.bf16.gmra.mxu0 %v912
  %v997 = vpop.f32.mrf.mxu0
  %v998 = vadd.f32 %v933, %v997
  %v999 = vpop.f32.mrf.mxu0
  %v1000 = vadd.f32 %v933, %v999
  %1001 = vmatmul.bf16.gmra.mxu0 %v913
  %v1002 = vpop.f32.mrf.mxu0
  %v1003 = vadd.f32 %v933, %v1002
  %v1004 = vpop.f32.mrf.mxu0
  %v1005 = vadd.f32 %v933, %v1004
  %1006 = vmatmul.bf16.gmra.mxu0 %v914
  %v1007 = vpop.f32.mrf.mxu0
  %v1008 = vadd.f32 %v933, %v1007
  %v1009 = vpop.f32.mrf.mxu0
  %v1010 = vadd.f32 %v933, %v1009
  %1011 = vdwg.mxu0
  %vm1012 = vcmask 7168
  %1013 = vst.msk [vmem:[%s9] sm:$0xff] %vm1012, %v993
  %1014 = vst.msk [vmem:[%s9 + $0x8] sm:$0xff] %vm1012, %v995
  %1015 = vst.msk [vmem:[%s9 + $0x10] sm:$0xff] %vm1012, %v998
  %1016 = vst.msk [vmem:[%s9 + $0x18] sm:$0xff] %vm1012, %v1000
  %1017 = vst.msk [vmem:[%s9 + $0x20] sm:$0xff] %vm1012, %v1003
  %1018 = vst.msk [vmem:[%s9 + $0x28] sm:$0xff] %vm1012, %v1005
  %1019 = vst.msk [vmem:[%s9 + $0x30] sm:$0xff] %vm1012, %v1008
  %1020 = vst.msk [vmem:[%s9 + $0x38] sm:$0xff] %vm1012, %v1010
  // Predicated region
  $region38: #{f0spec_forward.11} parent=0 // pred_check
    _
  $region39: #{f0spec_forward.11} parent=0 // pred_check_branch
    %1022 = sbr.rel (0) target = $region41
  $region40: #{f0spec_forward.11} parent=0 // pred_region
    _
  $region41: #{f0spec_forward.11} parent=0 // pred_fallthru
    _
  // Predicated region
  $region42: #{f0spec_forward.11} parent=0 // pred_check
    _
  $region43: #{f0spec_forward.11} parent=0 // pred_check_branch
    %1024 = sbr.rel (0) target = $region45
  $region44: #{f0spec_forward.11} parent=0 // pred_region
    _
  $region45: #{f0spec_forward.11} parent=0 // pred_fallthru
    _

</llo_original>
